<compile_context>
chip_gen: v7x
topology: tpu7x:2x2x1
jax: 0.10.0
libtpu: 0.0.40
codegen_flags: <defaults>
</compile_context>

<pallas_src>
import jax
import jax.numpy as jnp
from jax import lax
from jax.experimental import pallas as pl
from jax.experimental.pallas import tpu as pltpu

_MXU_DTYPE = jnp.bfloat16          # MXU operand dtype; accumulation stays f32.


def _shape_chain(H):
    HP = H + 2                     # conv1 input after padding=1
    O1 = HP - 7 + 1                # conv1 output (kernel 7)
    P1 = (O1 - 7) // 7 + 1         # AvgPool2d(7), stride 7, floor
    O2 = (P1 + 2) - 5 + 1          # conv2 output (input padded by 1, kernel 5)
    P2 = (O2 - 5) // 5 + 1         # AvgPool2d(5)
    O3 = (P2 + 2) - 3 + 1          # conv3 output (input padded by 1, kernel 3)
    return HP, O1, P1, O2, P2, O3


def _select_tb(batch):
    """Per-generation batch-tile size (samples per grid step)."""
    try:
        kind = jax.devices()[0].device_kind.lower()
    except Exception:  # pragma: no cover - defensive
        kind = ""
    # v6e / v7x: 32 MiB default scoped VMEM -> TB=128 (~17 MB double-buffered patches)
    # v5e / unknown: 16 MiB default            -> TB=64  (~8.5 MB double-buffered)
    cap = 128 if ("v6" in kind or "v7" in kind) else 64
    if batch > cap:
        return cap                      # multiple of 8 -> every BlockSpec stays tile-aligned
    if batch >= 16 and batch % 16 == 0:
        return batch // 2               # >=2 even grid steps so both v7x TensorCores get work
    return batch                        # single step: blocks equal the full arrays


# ----------------------------------------------------------------------------- #
# Pallas kernel
# ----------------------------------------------------------------------------- #
def _make_kernel(TB, NP):
    """Fused forward for one tile of TB samples (patch rows are position-major:
    row = p*TB + t for act1 position p and in-tile sample t)."""

    def kernel(p_ref, w1_ref, b1_ref, w2_ref, b2_ref, w3_ref, b3_ref, a_ref,
               out_ref):
        alpha = a_ref[...]                                    # (1, 1) f32 (nn.PReLU)

        def prelu(v):
            return jnp.where(v >= 0, v, v * alpha)

        # ---- stage 1: fused conv1 + AvgPool2d(7) -> ONE lane-dense matmul for the
        #      whole tile; bias + PReLU applied once over the (NP*TB, 32) slab. ----
        y1 = jnp.dot(p_ref[...], w1_ref[...],
                     preferred_element_type=jnp.float32)      # (NP*TB, 32) f32
        a1 = prelu(y1 + b1_ref[...]).astype(_MXU_DTYPE)       # position-major rows

        # ---- stage 2: fused conv2 + AvgPool2d(5) -> accumulate over act1 positions.
        #      Each slice is a contiguous (TB, 32) row block; the dots are small but
        #      fully hidden under the patches DMA (stage 1 owns ~95% of the FLOPs). ----
        acc = jnp.zeros((TB, 32), jnp.float32)
        for p in range(NP):                                   # static unroll
            acc = acc + jnp.dot(a1[p * TB:(p + 1) * TB, :], w2_ref[p],
                                preferred_element_type=jnp.float32)
        a2 = prelu(acc + b2_ref[...]).astype(_MXU_DTYPE)      # (TB, 32)

        # ---- stage 3: conv3 on a 1x1 zero-padded map == its centre tap.  Weights /
        #      bias are pre-padded to 128 output lanes -> full-width (lane-dense) store.
        y3 = jnp.dot(a2, w3_ref[...], preferred_element_type=jnp.float32)   # (TB, 128)
        out_ref[...] = prelu(y3 + b3_ref[...])

    return kernel


# ----------------------------------------------------------------------------- #
# Parameter fusion (hoisted: run ONCE per parameter set, not per forward call)
# ----------------------------------------------------------------------------- #
def fuse_gimple_params(params, spatial):
    w1, b1, w2, b2, w3, b3, alpha = params
    C = w1.shape[1]
    _, _, P1, _, P2, O3 = _shape_chain(spatial)
    assert P2 == 1 and O3 == 1, \
        "final spatial map must be 1x1 so view(-1, 32) is per-sample"
    NP = P1 * P1
    K1 = 13 * 13 * C

    # conv1(7x7, pad 1) followed by AvgPool2d(7) == one 13x13 stride-7 conv:
    # W1eff[dh,dw,c,o] = (1/49) * sum_{a+kh=dh, b+kw=dw} w1[o,c,kh,kw]
    w1t = jnp.transpose(w1, (2, 3, 1, 0)).astype(jnp.float32)           # (7,7,C,32)
    w1e = jnp.zeros((13, 13, C, 32), jnp.float32)
    for a in range(7):
        for b_ in range(7):
            w1e = w1e.at[a:a + 7, b_:b_ + 7].add(w1t)
    w1e = (w1e / 49.0).reshape(K1, 32).astype(_MXU_DTYPE)

    # conv2(5x5, pad 1) + AvgPool2d(5): single pool window -> one (32,32) weight per
    # act1 position (positions >= 8 in either axis get zero weight automatically).
    w2t = jnp.transpose(w2, (2, 3, 1, 0)).astype(jnp.float32)           # (5,5,32,32)
    gp = P1 + 2
    w2e = jnp.zeros((gp, gp, 32, 32), jnp.float32)
    for a in range(5):
        for b_ in range(5):
            w2e = w2e.at[a:a + 5, b_:b_ + 5].add(w2t)
    w2e = (w2e / 25.0)[1:1 + P1, 1:1 + P1].reshape(NP, 32, 32).astype(_MXU_DTYPE)

    # conv3 centre tap; output features zero-padded 32 -> 128 for lane-dense stores.
    w3c = jnp.transpose(w3, (2, 3, 1, 0))[1, 1].astype(_MXU_DTYPE)      # (32, 32)
    w3p = jnp.pad(w3c, ((0, 0), (0, 96)))                               # (32, 128)
    b3p = jnp.pad(b3.reshape(1, 32).astype(jnp.float32), ((0, 0), (0, 96)))

    b1k = b1.reshape(1, 32).astype(jnp.float32)
    b2k = b2.reshape(1, 32).astype(jnp.float32)
    ak = jnp.asarray(alpha, jnp.float32).reshape(1, 1)
    return (w1e, b1k, w2e, b2k, w3p, b3p, ak)


# ----------------------------------------------------------------------------- #
# Forward wrapper: im2col layout plumbing + pallas_call
# ----------------------------------------------------------------------------- #
def gimple_forward(x_nchw, fused):
    w1e, b1k, w2e, b2k, w3p, b3p, ak = fused
    B, C, H, W = x_nchw.shape
    assert H == W, "kernel assumes square spatial input"
    HP, O1, P1, O2, P2, O3 = _shape_chain(H)
    assert P2 == 1 and O3 == 1
    NP = P1 * P1
    K1 = 13 * 13 * C
    assert w1e.shape == (K1, 32) and w2e.shape == (NP, 32, 32)

    TB = _select_tb(B)
    B_pad = -(-B // TB) * TB
    G = B_pad // TB

    # Batch-last layout so the stride-7 im2col below directly emits the per-tile
    # position-major row order the kernel wants (no patch-sized transpose, only the
    # small raw input is shuffled).  Patches are written once, in bf16, in their
    # final layout.
    xt = jnp.transpose(x_nchw, (2, 3, 0, 1)).astype(_MXU_DTYPE)         # (H, W, B, C)
    xt = jnp.pad(xt, ((1, 1), (1, 1), (0, B_pad - B), (0, 0)))          # (HP, HP, Bp, C)
    xt = xt.reshape(HP, HP, G, TB, C)
    xt = jnp.transpose(xt, (2, 0, 1, 3, 4))                             # (G, HP, HP, TB, C)

    span = 7 * (P1 - 1) + 1
    pieces = [xt[:, dh:dh + span:7, dw:dw + span:7]
              for dh in range(13) for dw in range(13)]                  # (G,P1,P1,TB,C)
    patches = jnp.concatenate(pieces, axis=-1)                          # (G,P1,P1,TB,169C)
    patches2d = patches.reshape(G * NP * TB, K1)                        # row = g*NP*TB+p*TB+t

    kernel = _make_kernel(TB, NP)
    out = pl.pallas_call(
        kernel,
        out_shape=jax.ShapeDtypeStruct((B_pad, 128), jnp.float32),
        grid_spec=pltpu.PrefetchScalarGridSpec(
            num_scalar_prefetch=0,
            grid=(G,),
            in_specs=[
                pl.BlockSpec((NP * TB, K1), lambda g: (g, 0)),          # im2col patches
                pl.BlockSpec((K1, 32), lambda g: (0, 0)),               # W1eff
                pl.BlockSpec((1, 32), lambda g: (0, 0)),                # b1
                pl.BlockSpec((NP, 32, 32), lambda g: (0, 0, 0)),        # W2eff per position
                pl.BlockSpec((1, 32), lambda g: (0, 0)),                # b2
                pl.BlockSpec((32, 128), lambda g: (0, 0)),              # W3 centre tap (padded)
                pl.BlockSpec((1, 128), lambda g: (0, 0)),               # b3 (padded)
                pl.BlockSpec((1, 1), lambda g: (0, 0)),                 # PReLU alpha
            ],
            out_specs=pl.BlockSpec((TB, 128), lambda g: (g, 0)),
        ),
        compiler_params=pltpu.CompilerParams(
            dimension_semantics=("parallel",)),                         # independent samples
    )(patches2d, w1e, b1k, w2e, b2k, w3p, b3p, ak)

    return out[:B, :32]            # == PyTorch x.view(-1, 32) since final HxW == 1x1


gimple_net = jax.jit(gimple_forward)


# ----------------------------------------------------------------------------- #
# Pure-JAX reference (correctness check only)
# ----------------------------------------------------------------------------- #
def reference_forward(x, params):
    w1, b1, w2, b2, w3, b3, alpha = params
    dn = ("NCHW", "OIHW", "NCHW")
    hp = lax.Precision.HIGHEST

    def prelu(v):
        return jnp.where(v >= 0, v, alpha * v)

    def avg_pool(v, k):
        s = lax.reduce_window(v, 0.0, lax.add, (1, 1, k, k), (1, 1, k, k), "VALID")
        return s / float(k * k)

    y = lax.conv_general_dilated(x, w1, (1, 1), ((1, 1), (1, 1)),
                                 dimension_numbers=dn, precision=hp)
    y = prelu(avg_pool(y + b1[None, :, None, None], 7))
    y = lax.conv_general_dilated(y, w2, (1, 1), ((1, 1), (1, 1)),
                                 dimension_numbers=dn, precision=hp)
    y = prelu(avg_pool(y + b2[None, :, None, None], 5))
    y = lax.conv_general_dilated(y, w3, (1, 1), ((1, 1), (1, 1)),
                                 dimension_numbers=dn, precision=hp)
    y = prelu(y + b3[None, :, None, None])
    return y.reshape(-1, 32)


def init_params(key, in_channels):
    ks = jax.random.split(key, 6)
    w1 = jax.random.normal(ks[0], (32, in_channels, 7, 7), jnp.float32) * 0.1
    b1 = jax.random.normal(ks[1], (32,), jnp.float32) * 0.1
    w2 = jax.random.normal(ks[2], (32, 32, 5, 5), jnp.float32) * 0.1
    b2 = jax.random.normal(ks[3], (32,), jnp.float32) * 0.1
    w3 = jax.random.normal(ks[4], (32, 32, 3, 3), jnp.float32) * 0.1
    b3 = jax.random.normal(ks[5], (32,), jnp.float32) * 0.1
    alpha = jnp.float32(0.25)      # nn.PReLU() default init
    return (w1, b1, w2, b2, w3, b3, alpha)


if __name__ == "__main__":
    key = jax.random.PRNGKey(0)
    kx, kx2, kp = jax.random.split(key, 3)

    # 53x53 is the smallest square input for which the conv/pool chain ends at a
    # 1x1 spatial map, as required by the module's final x.view(-1, 32).
    B, C, H, W = 2, 4, 53, 53
    x = jax.random.normal(kx, (B, C, H, W), jnp.float32)
    params = init_params(kp, C)
    fused = fuse_gimple_params(params, H)       # hoisted: once per parameter set

    out = jax.block_until_ready(gimple_net(x, fused))
    ref = jax.block_until_ready(reference_forward(x, params))
    assert out.shape == (B, 32), out.shape
    err = float(jnp.max(jnp.abs(out - ref)))
    # bf16 MXU operands with f32 accumulation: expected max abs err ~1e-3.
    assert err < 1e-2, f"max abs err vs f32 reference: {err}"

    # Also exercise the multi-step grid path (2 batch tiles -> tiled BlockSpecs,
    # both-TensorCore split on v7x).
    B2 = 32
    x2 = jax.random.normal(kx2, (B2, C, H, W), jnp.float32)
    out2 = jax.block_until_ready(gimple_net(x2, fused))
    ref2 = jax.block_until_ready(reference_forward(x2, params))
    assert out2.shape == (B2, 32), out2.shape
    err2 = float(jnp.max(jnp.abs(out2 - ref2)))
    assert err2 < 1e-2, f"max abs err (B=32) vs f32 reference: {err2}"

    print("KERNEL_OK")
</pallas_src>

<mosaic_0001>
module attributes {stable_mosaic.version = 11 : i64} {
  func.func @kernel(%arg0: i32, %arg1: memref<98x676xbf16, #tpu.memory_space<vmem>>, %arg2: memref<676x32xbf16, #tpu.memory_space<vmem>>, %arg3: memref<1x32xf32, #tpu.memory_space<vmem>>, %arg4: memref<49x32x32xbf16, #tpu.memory_space<vmem>>, %arg5: memref<1x32xf32, #tpu.memory_space<vmem>>, %arg6: memref<32x128xbf16, #tpu.memory_space<vmem>>, %arg7: memref<1x128xf32, #tpu.memory_space<vmem>>, %arg8: memref<1x1xf32, #tpu.memory_space<vmem>>, %arg9: memref<2x128xf32, #tpu.memory_space<vmem>>) attributes {dimension_semantics = [#tpu.dimension_semantics<parallel>], iteration_bounds = array<i64: 1>, scalar_prefetch = 0 : i64, scratch_operands = 0 : i64, tpu.core_type = #tpu.core_type<tc>, window_params = [{transform_indices = @transform_0, window_bounds = array<i64: 98, 676>}, {pipeline_mode = #tpu.pipeline_mode<synchronous>, transform_indices = @transform_1, window_bounds = array<i64: 676, 32>}, {pipeline_mode = #tpu.pipeline_mode<synchronous>, transform_indices = @transform_2, window_bounds = array<i64: 1, 32>}, {pipeline_mode = #tpu.pipeline_mode<synchronous>, transform_indices = @transform_3, window_bounds = array<i64: 49, 32, 32>}, {pipeline_mode = #tpu.pipeline_mode<synchronous>, transform_indices = @transform_4, window_bounds = array<i64: 1, 32>}, {pipeline_mode = #tpu.pipeline_mode<synchronous>, transform_indices = @transform_5, window_bounds = array<i64: 32, 128>}, {pipeline_mode = #tpu.pipeline_mode<synchronous>, transform_indices = @transform_6, window_bounds = array<i64: 1, 128>}, {pipeline_mode = #tpu.pipeline_mode<synchronous>, transform_indices = @transform_7, window_bounds = array<i64: 1, 1>}, {transform_indices = @transform_8, window_bounds = array<i64: 2, 128>}]} {
    %c0 = arith.constant 0 : index
    %c0_0 = arith.constant 0 : index
    %0 = vector.load %arg8[%c0, %c0_0] : memref<1x1xf32, #tpu.memory_space<vmem>>, vector<1x1xf32>
    %c0_1 = arith.constant 0 : index
    %c0_2 = arith.constant 0 : index
    %1 = vector.load %arg1[%c0_1, %c0_2] : memref<98x676xbf16, #tpu.memory_space<vmem>>, vector<98x676xbf16>
    %c0_3 = arith.constant 0 : index
    %c0_4 = arith.constant 0 : index
    %2 = vector.load %arg2[%c0_3, %c0_4] : memref<676x32xbf16, #tpu.memory_space<vmem>>, vector<676x32xbf16>
    %cst = arith.constant dense<0.000000e+00> : vector<98x32xf32>
    %3 = tpu.matmul %1, %2, %cst {dimension_numbers = #tpu.dot_dimension_numbers<[1], [0], [0], [1], [0, 0, 1, 1], [], []>} : vector<98x676xbf16>, vector<676x32xbf16>, vector<98x32xf32> -> vector<98x32xf32>
    %c0_5 = arith.constant 0 : index
    %c0_6 = arith.constant 0 : index
    %4 = vector.load %arg3[%c0_5, %c0_6] : memref<1x32xf32, #tpu.memory_space<vmem>>, vector<1x32xf32>
    %5 = vector.broadcast %4 : vector<1x32xf32> to vector<98x32xf32>
    %6 = arith.addf %3, %5 : vector<98x32xf32>
    %cst_7 = arith.constant 0.000000e+00 : f32
    %7 = vector.broadcast %cst_7 : f32 to vector<98x32xf32>
    %8 = arith.cmpf oge, %6, %7 : vector<98x32xf32>
    %9 = vector.broadcast %0 : vector<1x1xf32> to vector<98x32xf32>
    %10 = arith.mulf %6, %9 : vector<98x32xf32>
    %11 = arith.select %8, %6, %10 : vector<98x32xi1>, vector<98x32xf32>
    %12 = arith.truncf %11 : vector<98x32xf32> to vector<98x32xbf16>
    %cst_8 = arith.constant 0.000000e+00 : f32
    %13 = vector.broadcast %cst_8 : f32 to vector<2x32xf32>
    %14 = vector.extract_strided_slice %12 {offsets = [0, 0], sizes = [2, 32], strides = [1, 1]} : vector<98x32xbf16> to vector<2x32xbf16>
    %c0_9 = arith.constant 0 : index
    %c0_10 = arith.constant 0 : index
    %c0_11 = arith.constant 0 : index
    %15 = vector.load %arg4[%c0_9, %c0_10, %c0_11] : memref<49x32x32xbf16, #tpu.memory_space<vmem>>, vector<1x32x32xbf16>
    %16 = vector.shape_cast %15 : vector<1x32x32xbf16> to vector<32x32xbf16>
    %cst_12 = arith.constant dense<0.000000e+00> : vector<2x32xf32>
    %17 = tpu.matmul %14, %16, %cst_12 {dimension_numbers = #tpu.dot_dimension_numbers<[1], [0], [0], [1], [0, 0, 1, 1], [], []>} : vector<2x32xbf16>, vector<32x32xbf16>, vector<2x32xf32> -> vector<2x32xf32>
    %18 = arith.addf %13, %17 : vector<2x32xf32>
    %19 = vector.extract_strided_slice %12 {offsets = [2, 0], sizes = [2, 32], strides = [1, 1]} : vector<98x32xbf16> to vector<2x32xbf16>
    %c1 = arith.constant 1 : index
    %c0_13 = arith.constant 0 : index
    %c0_14 = arith.constant 0 : index
    %20 = vector.load %arg4[%c1, %c0_13, %c0_14] : memref<49x32x32xbf16, #tpu.memory_space<vmem>>, vector<1x32x32xbf16>
    %21 = vector.shape_cast %20 : vector<1x32x32xbf16> to vector<32x32xbf16>
    %cst_15 = arith.constant dense<0.000000e+00> : vector<2x32xf32>
    %22 = tpu.matmul %19, %21, %cst_15 {dimension_numbers = #tpu.dot_dimension_numbers<[1], [0], [0], [1], [0, 0, 1, 1], [], []>} : vector<2x32xbf16>, vector<32x32xbf16>, vector<2x32xf32> -> vector<2x32xf32>
    %23 = arith.addf %18, %22 : vector<2x32xf32>
    %24 = vector.extract_strided_slice %12 {offsets = [4, 0], sizes = [2, 32], strides = [1, 1]} : vector<98x32xbf16> to vector<2x32xbf16>
    %c2 = arith.constant 2 : index
    %c0_16 = arith.constant 0 : index
    %c0_17 = arith.constant 0 : index
    %25 = vector.load %arg4[%c2, %c0_16, %c0_17] : memref<49x32x32xbf16, #tpu.memory_space<vmem>>, vector<1x32x32xbf16>
    %26 = vector.shape_cast %25 : vector<1x32x32xbf16> to vector<32x32xbf16>
    %cst_18 = arith.constant dense<0.000000e+00> : vector<2x32xf32>
    %27 = tpu.matmul %24, %26, %cst_18 {dimension_numbers = #tpu.dot_dimension_numbers<[1], [0], [0], [1], [0, 0, 1, 1], [], []>} : vector<2x32xbf16>, vector<32x32xbf16>, vector<2x32xf32> -> vector<2x32xf32>
    %28 = arith.addf %23, %27 : vector<2x32xf32>
    %29 = vector.extract_strided_slice %12 {offsets = [6, 0], sizes = [2, 32], strides = [1, 1]} : vector<98x32xbf16> to vector<2x32xbf16>
    %c3 = arith.constant 3 : index
    %c0_19 = arith.constant 0 : index
    %c0_20 = arith.constant 0 : index
    %30 = vector.load %arg4[%c3, %c0_19, %c0_20] : memref<49x32x32xbf16, #tpu.memory_space<vmem>>, vector<1x32x32xbf16>
    %31 = vector.shape_cast %30 : vector<1x32x32xbf16> to vector<32x32xbf16>
    %cst_21 = arith.constant dense<0.000000e+00> : vector<2x32xf32>
    %32 = tpu.matmul %29, %31, %cst_21 {dimension_numbers = #tpu.dot_dimension_numbers<[1], [0], [0], [1], [0, 0, 1, 1], [], []>} : vector<2x32xbf16>, vector<32x32xbf16>, vector<2x32xf32> -> vector<2x32xf32>
    %33 = arith.addf %28, %32 : vector<2x32xf32>
    %34 = vector.extract_strided_slice %12 {offsets = [8, 0], sizes = [2, 32], strides = [1, 1]} : vector<98x32xbf16> to vector<2x32xbf16>
    %c4 = arith.constant 4 : index
    %c0_22 = arith.constant 0 : index
    %c0_23 = arith.constant 0 : index
    %35 = vector.load %arg4[%c4, %c0_22, %c0_23] : memref<49x32x32xbf16, #tpu.memory_space<vmem>>, vector<1x32x32xbf16>
    %36 = vector.shape_cast %35 : vector<1x32x32xbf16> to vector<32x32xbf16>
    %cst_24 = arith.constant dense<0.000000e+00> : vector<2x32xf32>
    %37 = tpu.matmul %34, %36, %cst_24 {dimension_numbers = #tpu.dot_dimension_numbers<[1], [0], [0], [1], [0, 0, 1, 1], [], []>} : vector<2x32xbf16>, vector<32x32xbf16>, vector<2x32xf32> -> vector<2x32xf32>
    %38 = arith.addf %33, %37 : vector<2x32xf32>
    %39 = vector.extract_strided_slice %12 {offsets = [10, 0], sizes = [2, 32], strides = [1, 1]} : vector<98x32xbf16> to vector<2x32xbf16>
    %c5 = arith.constant 5 : index
    %c0_25 = arith.constant 0 : index
    %c0_26 = arith.constant 0 : index
    %40 = vector.load %arg4[%c5, %c0_25, %c0_26] : memref<49x32x32xbf16, #tpu.memory_space<vmem>>, vector<1x32x32xbf16>
    %41 = vector.shape_cast %40 : vector<1x32x32xbf16> to vector<32x32xbf16>
    %cst_27 = arith.constant dense<0.000000e+00> : vector<2x32xf32>
    %42 = tpu.matmul %39, %41, %cst_27 {dimension_numbers = #tpu.dot_dimension_numbers<[1], [0], [0], [1], [0, 0, 1, 1], [], []>} : vector<2x32xbf16>, vector<32x32xbf16>, vector<2x32xf32> -> vector<2x32xf32>
    %43 = arith.addf %38, %42 : vector<2x32xf32>
    %44 = vector.extract_strided_slice %12 {offsets = [12, 0], sizes = [2, 32], strides = [1, 1]} : vector<98x32xbf16> to vector<2x32xbf16>
    %c6 = arith.constant 6 : index
    %c0_28 = arith.constant 0 : index
    %c0_29 = arith.constant 0 : index
    %45 = vector.load %arg4[%c6, %c0_28, %c0_29] : memref<49x32x32xbf16, #tpu.memory_space<vmem>>, vector<1x32x32xbf16>
    %46 = vector.shape_cast %45 : vector<1x32x32xbf16> to vector<32x32xbf16>
    %cst_30 = arith.constant dense<0.000000e+00> : vector<2x32xf32>
    %47 = tpu.matmul %44, %46, %cst_30 {dimension_numbers = #tpu.dot_dimension_numbers<[1], [0], [0], [1], [0, 0, 1, 1], [], []>} : vector<2x32xbf16>, vector<32x32xbf16>, vector<2x32xf32> -> vector<2x32xf32>
    %48 = arith.addf %43, %47 : vector<2x32xf32>
    %49 = vector.extract_strided_slice %12 {offsets = [14, 0], sizes = [2, 32], strides = [1, 1]} : vector<98x32xbf16> to vector<2x32xbf16>
    %c7 = arith.constant 7 : index
    %c0_31 = arith.constant 0 : index
    %c0_32 = arith.constant 0 : index
    %50 = vector.load %arg4[%c7, %c0_31, %c0_32] : memref<49x32x32xbf16, #tpu.memory_space<vmem>>, vector<1x32x32xbf16>
    %51 = vector.shape_cast %50 : vector<1x32x32xbf16> to vector<32x32xbf16>
    %cst_33 = arith.constant dense<0.000000e+00> : vector<2x32xf32>
    %52 = tpu.matmul %49, %51, %cst_33 {dimension_numbers = #tpu.dot_dimension_numbers<[1], [0], [0], [1], [0, 0, 1, 1], [], []>} : vector<2x32xbf16>, vector<32x32xbf16>, vector<2x32xf32> -> vector<2x32xf32>
    %53 = arith.addf %48, %52 : vector<2x32xf32>
    %54 = vector.extract_strided_slice %12 {offsets = [16, 0], sizes = [2, 32], strides = [1, 1]} : vector<98x32xbf16> to vector<2x32xbf16>
    %c8 = arith.constant 8 : index
    %c0_34 = arith.constant 0 : index
    %c0_35 = arith.constant 0 : index
    %55 = vector.load %arg4[%c8, %c0_34, %c0_35] : memref<49x32x32xbf16, #tpu.memory_space<vmem>>, vector<1x32x32xbf16>
    %56 = vector.shape_cast %55 : vector<1x32x32xbf16> to vector<32x32xbf16>
    %cst_36 = arith.constant dense<0.000000e+00> : vector<2x32xf32>
    %57 = tpu.matmul %54, %56, %cst_36 {dimension_numbers = #tpu.dot_dimension_numbers<[1], [0], [0], [1], [0, 0, 1, 1], [], []>} : vector<2x32xbf16>, vector<32x32xbf16>, vector<2x32xf32> -> vector<2x32xf32>
    %58 = arith.addf %53, %57 : vector<2x32xf32>
    %59 = vector.extract_strided_slice %12 {offsets = [18, 0], sizes = [2, 32], strides = [1, 1]} : vector<98x32xbf16> to vector<2x32xbf16>
    %c9 = arith.constant 9 : index
    %c0_37 = arith.constant 0 : index
    %c0_38 = arith.constant 0 : index
    %60 = vector.load %arg4[%c9, %c0_37, %c0_38] : memref<49x32x32xbf16, #tpu.memory_space<vmem>>, vector<1x32x32xbf16>
    %61 = vector.shape_cast %60 : vector<1x32x32xbf16> to vector<32x32xbf16>
    %cst_39 = arith.constant dense<0.000000e+00> : vector<2x32xf32>
    %62 = tpu.matmul %59, %61, %cst_39 {dimension_numbers = #tpu.dot_dimension_numbers<[1], [0], [0], [1], [0, 0, 1, 1], [], []>} : vector<2x32xbf16>, vector<32x32xbf16>, vector<2x32xf32> -> vector<2x32xf32>
    %63 = arith.addf %58, %62 : vector<2x32xf32>
    %64 = vector.extract_strided_slice %12 {offsets = [20, 0], sizes = [2, 32], strides = [1, 1]} : vector<98x32xbf16> to vector<2x32xbf16>
    %c10 = arith.constant 10 : index
    %c0_40 = arith.constant 0 : index
    %c0_41 = arith.constant 0 : index
    %65 = vector.load %arg4[%c10, %c0_40, %c0_41] : memref<49x32x32xbf16, #tpu.memory_space<vmem>>, vector<1x32x32xbf16>
    %66 = vector.shape_cast %65 : vector<1x32x32xbf16> to vector<32x32xbf16>
    %cst_42 = arith.constant dense<0.000000e+00> : vector<2x32xf32>
    %67 = tpu.matmul %64, %66, %cst_42 {dimension_numbers = #tpu.dot_dimension_numbers<[1], [0], [0], [1], [0, 0, 1, 1], [], []>} : vector<2x32xbf16>, vector<32x32xbf16>, vector<2x32xf32> -> vector<2x32xf32>
    %68 = arith.addf %63, %67 : vector<2x32xf32>
    %69 = vector.extract_strided_slice %12 {offsets = [22, 0], sizes = [2, 32], strides = [1, 1]} : vector<98x32xbf16> to vector<2x32xbf16>
    %c11 = arith.constant 11 : index
    %c0_43 = arith.constant 0 : index
    %c0_44 = arith.constant 0 : index
    %70 = vector.load %arg4[%c11, %c0_43, %c0_44] : memref<49x32x32xbf16, #tpu.memory_space<vmem>>, vector<1x32x32xbf16>
    %71 = vector.shape_cast %70 : vector<1x32x32xbf16> to vector<32x32xbf16>
    %cst_45 = arith.constant dense<0.000000e+00> : vector<2x32xf32>
    %72 = tpu.matmul %69, %71, %cst_45 {dimension_numbers = #tpu.dot_dimension_numbers<[1], [0], [0], [1], [0, 0, 1, 1], [], []>} : vector<2x32xbf16>, vector<32x32xbf16>, vector<2x32xf32> -> vector<2x32xf32>
    %73 = arith.addf %68, %72 : vector<2x32xf32>
    %74 = vector.extract_strided_slice %12 {offsets = [24, 0], sizes = [2, 32], strides = [1, 1]} : vector<98x32xbf16> to vector<2x32xbf16>
    %c12 = arith.constant 12 : index
    %c0_46 = arith.constant 0 : index
    %c0_47 = arith.constant 0 : index
    %75 = vector.load %arg4[%c12, %c0_46, %c0_47] : memref<49x32x32xbf16, #tpu.memory_space<vmem>>, vector<1x32x32xbf16>
    %76 = vector.shape_cast %75 : vector<1x32x32xbf16> to vector<32x32xbf16>
    %cst_48 = arith.constant dense<0.000000e+00> : vector<2x32xf32>
    %77 = tpu.matmul %74, %76, %cst_48 {dimension_numbers = #tpu.dot_dimension_numbers<[1], [0], [0], [1], [0, 0, 1, 1], [], []>} : vector<2x32xbf16>, vector<32x32xbf16>, vector<2x32xf32> -> vector<2x32xf32>
    %78 = arith.addf %73, %77 : vector<2x32xf32>
    %79 = vector.extract_strided_slice %12 {offsets = [26, 0], sizes = [2, 32], strides = [1, 1]} : vector<98x32xbf16> to vector<2x32xbf16>
    %c13 = arith.constant 13 : index
    %c0_49 = arith.constant 0 : index
    %c0_50 = arith.constant 0 : index
    %80 = vector.load %arg4[%c13, %c0_49, %c0_50] : memref<49x32x32xbf16, #tpu.memory_space<vmem>>, vector<1x32x32xbf16>
    %81 = vector.shape_cast %80 : vector<1x32x32xbf16> to vector<32x32xbf16>
    %cst_51 = arith.constant dense<0.000000e+00> : vector<2x32xf32>
    %82 = tpu.matmul %79, %81, %cst_51 {dimension_numbers = #tpu.dot_dimension_numbers<[1], [0], [0], [1], [0, 0, 1, 1], [], []>} : vector<2x32xbf16>, vector<32x32xbf16>, vector<2x32xf32> -> vector<2x32xf32>
    %83 = arith.addf %78, %82 : vector<2x32xf32>
    %84 = vector.extract_strided_slice %12 {offsets = [28, 0], sizes = [2, 32], strides = [1, 1]} : vector<98x32xbf16> to vector<2x32xbf16>
    %c14 = arith.constant 14 : index
    %c0_52 = arith.constant 0 : index
    %c0_53 = arith.constant 0 : index
    %85 = vector.load %arg4[%c14, %c0_52, %c0_53] : memref<49x32x32xbf16, #tpu.memory_space<vmem>>, vector<1x32x32xbf16>
    %86 = vector.shape_cast %85 : vector<1x32x32xbf16> to vector<32x32xbf16>
    %cst_54 = arith.constant dense<0.000000e+00> : vector<2x32xf32>
    %87 = tpu.matmul %84, %86, %cst_54 {dimension_numbers = #tpu.dot_dimension_numbers<[1], [0], [0], [1], [0, 0, 1, 1], [], []>} : vector<2x32xbf16>, vector<32x32xbf16>, vector<2x32xf32> -> vector<2x32xf32>
    %88 = arith.addf %83, %87 : vector<2x32xf32>
    %89 = vector.extract_strided_slice %12 {offsets = [30, 0], sizes = [2, 32], strides = [1, 1]} : vector<98x32xbf16> to vector<2x32xbf16>
    %c15 = arith.constant 15 : index
    %c0_55 = arith.constant 0 : index
    %c0_56 = arith.constant 0 : index
    %90 = vector.load %arg4[%c15, %c0_55, %c0_56] : memref<49x32x32xbf16, #tpu.memory_space<vmem>>, vector<1x32x32xbf16>
    %91 = vector.shape_cast %90 : vector<1x32x32xbf16> to vector<32x32xbf16>
    %cst_57 = arith.constant dense<0.000000e+00> : vector<2x32xf32>
    %92 = tpu.matmul %89, %91, %cst_57 {dimension_numbers = #tpu.dot_dimension_numbers<[1], [0], [0], [1], [0, 0, 1, 1], [], []>} : vector<2x32xbf16>, vector<32x32xbf16>, vector<2x32xf32> -> vector<2x32xf32>
    %93 = arith.addf %88, %92 : vector<2x32xf32>
    %94 = vector.extract_strided_slice %12 {offsets = [32, 0], sizes = [2, 32], strides = [1, 1]} : vector<98x32xbf16> to vector<2x32xbf16>
    %c16 = arith.constant 16 : index
    %c0_58 = arith.constant 0 : index
    %c0_59 = arith.constant 0 : index
    %95 = vector.load %arg4[%c16, %c0_58, %c0_59] : memref<49x32x32xbf16, #tpu.memory_space<vmem>>, vector<1x32x32xbf16>
    %96 = vector.shape_cast %95 : vector<1x32x32xbf16> to vector<32x32xbf16>
    %cst_60 = arith.constant dense<0.000000e+00> : vector<2x32xf32>
    %97 = tpu.matmul %94, %96, %cst_60 {dimension_numbers = #tpu.dot_dimension_numbers<[1], [0], [0], [1], [0, 0, 1, 1], [], []>} : vector<2x32xbf16>, vector<32x32xbf16>, vector<2x32xf32> -> vector<2x32xf32>
    %98 = arith.addf %93, %97 : vector<2x32xf32>
    %99 = vector.extract_strided_slice %12 {offsets = [34, 0], sizes = [2, 32], strides = [1, 1]} : vector<98x32xbf16> to vector<2x32xbf16>
    %c17 = arith.constant 17 : index
    %c0_61 = arith.constant 0 : index
    %c0_62 = arith.constant 0 : index
    %100 = vector.load %arg4[%c17, %c0_61, %c0_62] : memref<49x32x32xbf16, #tpu.memory_space<vmem>>, vector<1x32x32xbf16>
    %101 = vector.shape_cast %100 : vector<1x32x32xbf16> to vector<32x32xbf16>
    %cst_63 = arith.constant dense<0.000000e+00> : vector<2x32xf32>
    %102 = tpu.matmul %99, %101, %cst_63 {dimension_numbers = #tpu.dot_dimension_numbers<[1], [0], [0], [1], [0, 0, 1, 1], [], []>} : vector<2x32xbf16>, vector<32x32xbf16>, vector<2x32xf32> -> vector<2x32xf32>
    %103 = arith.addf %98, %102 : vector<2x32xf32>
    %104 = vector.extract_strided_slice %12 {offsets = [36, 0], sizes = [2, 32], strides = [1, 1]} : vector<98x32xbf16> to vector<2x32xbf16>
    %c18 = arith.constant 18 : index
    %c0_64 = arith.constant 0 : index
    %c0_65 = arith.constant 0 : index
    %105 = vector.load %arg4[%c18, %c0_64, %c0_65] : memref<49x32x32xbf16, #tpu.memory_space<vmem>>, vector<1x32x32xbf16>
    %106 = vector.shape_cast %105 : vector<1x32x32xbf16> to vector<32x32xbf16>
    %cst_66 = arith.constant dense<0.000000e+00> : vector<2x32xf32>
    %107 = tpu.matmul %104, %106, %cst_66 {dimension_numbers = #tpu.dot_dimension_numbers<[1], [0], [0], [1], [0, 0, 1, 1], [], []>} : vector<2x32xbf16>, vector<32x32xbf16>, vector<2x32xf32> -> vector<2x32xf32>
    %108 = arith.addf %103, %107 : vector<2x32xf32>
    %109 = vector.extract_strided_slice %12 {offsets = [38, 0], sizes = [2, 32], strides = [1, 1]} : vector<98x32xbf16> to vector<2x32xbf16>
    %c19 = arith.constant 19 : index
    %c0_67 = arith.constant 0 : index
    %c0_68 = arith.constant 0 : index
    %110 = vector.load %arg4[%c19, %c0_67, %c0_68] : memref<49x32x32xbf16, #tpu.memory_space<vmem>>, vector<1x32x32xbf16>
    %111 = vector.shape_cast %110 : vector<1x32x32xbf16> to vector<32x32xbf16>
    %cst_69 = arith.constant dense<0.000000e+00> : vector<2x32xf32>
    %112 = tpu.matmul %109, %111, %cst_69 {dimension_numbers = #tpu.dot_dimension_numbers<[1], [0], [0], [1], [0, 0, 1, 1], [], []>} : vector<2x32xbf16>, vector<32x32xbf16>, vector<2x32xf32> -> vector<2x32xf32>
    %113 = arith.addf %108, %112 : vector<2x32xf32>
    %114 = vector.extract_strided_slice %12 {offsets = [40, 0], sizes = [2, 32], strides = [1, 1]} : vector<98x32xbf16> to vector<2x32xbf16>
    %c20 = arith.constant 20 : index
    %c0_70 = arith.constant 0 : index
    %c0_71 = arith.constant 0 : index
    %115 = vector.load %arg4[%c20, %c0_70, %c0_71] : memref<49x32x32xbf16, #tpu.memory_space<vmem>>, vector<1x32x32xbf16>
    %116 = vector.shape_cast %115 : vector<1x32x32xbf16> to vector<32x32xbf16>
    %cst_72 = arith.constant dense<0.000000e+00> : vector<2x32xf32>
    %117 = tpu.matmul %114, %116, %cst_72 {dimension_numbers = #tpu.dot_dimension_numbers<[1], [0], [0], [1], [0, 0, 1, 1], [], []>} : vector<2x32xbf16>, vector<32x32xbf16>, vector<2x32xf32> -> vector<2x32xf32>
    %118 = arith.addf %113, %117 : vector<2x32xf32>
    %119 = vector.extract_strided_slice %12 {offsets = [42, 0], sizes = [2, 32], strides = [1, 1]} : vector<98x32xbf16> to vector<2x32xbf16>
    %c21 = arith.constant 21 : index
    %c0_73 = arith.constant 0 : index
    %c0_74 = arith.constant 0 : index
    %120 = vector.load %arg4[%c21, %c0_73, %c0_74] : memref<49x32x32xbf16, #tpu.memory_space<vmem>>, vector<1x32x32xbf16>
    %121 = vector.shape_cast %120 : vector<1x32x32xbf16> to vector<32x32xbf16>
    %cst_75 = arith.constant dense<0.000000e+00> : vector<2x32xf32>
    %122 = tpu.matmul %119, %121, %cst_75 {dimension_numbers = #tpu.dot_dimension_numbers<[1], [0], [0], [1], [0, 0, 1, 1], [], []>} : vector<2x32xbf16>, vector<32x32xbf16>, vector<2x32xf32> -> vector<2x32xf32>
    %123 = arith.addf %118, %122 : vector<2x32xf32>
    %124 = vector.extract_strided_slice %12 {offsets = [44, 0], sizes = [2, 32], strides = [1, 1]} : vector<98x32xbf16> to vector<2x32xbf16>
    %c22 = arith.constant 22 : index
    %c0_76 = arith.constant 0 : index
    %c0_77 = arith.constant 0 : index
    %125 = vector.load %arg4[%c22, %c0_76, %c0_77] : memref<49x32x32xbf16, #tpu.memory_space<vmem>>, vector<1x32x32xbf16>
    %126 = vector.shape_cast %125 : vector<1x32x32xbf16> to vector<32x32xbf16>
    %cst_78 = arith.constant dense<0.000000e+00> : vector<2x32xf32>
    %127 = tpu.matmul %124, %126, %cst_78 {dimension_numbers = #tpu.dot_dimension_numbers<[1], [0], [0], [1], [0, 0, 1, 1], [], []>} : vector<2x32xbf16>, vector<32x32xbf16>, vector<2x32xf32> -> vector<2x32xf32>
    %128 = arith.addf %123, %127 : vector<2x32xf32>
    %129 = vector.extract_strided_slice %12 {offsets = [46, 0], sizes = [2, 32], strides = [1, 1]} : vector<98x32xbf16> to vector<2x32xbf16>
    %c23 = arith.constant 23 : index
    %c0_79 = arith.constant 0 : index
    %c0_80 = arith.constant 0 : index
    %130 = vector.load %arg4[%c23, %c0_79, %c0_80] : memref<49x32x32xbf16, #tpu.memory_space<vmem>>, vector<1x32x32xbf16>
    %131 = vector.shape_cast %130 : vector<1x32x32xbf16> to vector<32x32xbf16>
    %cst_81 = arith.constant dense<0.000000e+00> : vector<2x32xf32>
    %132 = tpu.matmul %129, %131, %cst_81 {dimension_numbers = #tpu.dot_dimension_numbers<[1], [0], [0], [1], [0, 0, 1, 1], [], []>} : vector<2x32xbf16>, vector<32x32xbf16>, vector<2x32xf32> -> vector<2x32xf32>
    %133 = arith.addf %128, %132 : vector<2x32xf32>
    %134 = vector.extract_strided_slice %12 {offsets = [48, 0], sizes = [2, 32], strides = [1, 1]} : vector<98x32xbf16> to vector<2x32xbf16>
    %c24 = arith.constant 24 : index
    %c0_82 = arith.constant 0 : index
    %c0_83 = arith.constant 0 : index
    %135 = vector.load %arg4[%c24, %c0_82, %c0_83] : memref<49x32x32xbf16, #tpu.memory_space<vmem>>, vector<1x32x32xbf16>
    %136 = vector.shape_cast %135 : vector<1x32x32xbf16> to vector<32x32xbf16>
    %cst_84 = arith.constant dense<0.000000e+00> : vector<2x32xf32>
    %137 = tpu.matmul %134, %136, %cst_84 {dimension_numbers = #tpu.dot_dimension_numbers<[1], [0], [0], [1], [0, 0, 1, 1], [], []>} : vector<2x32xbf16>, vector<32x32xbf16>, vector<2x32xf32> -> vector<2x32xf32>
    %138 = arith.addf %133, %137 : vector<2x32xf32>
    %139 = vector.extract_strided_slice %12 {offsets = [50, 0], sizes = [2, 32], strides = [1, 1]} : vector<98x32xbf16> to vector<2x32xbf16>
    %c25 = arith.constant 25 : index
    %c0_85 = arith.constant 0 : index
    %c0_86 = arith.constant 0 : index
    %140 = vector.load %arg4[%c25, %c0_85, %c0_86] : memref<49x32x32xbf16, #tpu.memory_space<vmem>>, vector<1x32x32xbf16>
    %141 = vector.shape_cast %140 : vector<1x32x32xbf16> to vector<32x32xbf16>
    %cst_87 = arith.constant dense<0.000000e+00> : vector<2x32xf32>
    %142 = tpu.matmul %139, %141, %cst_87 {dimension_numbers = #tpu.dot_dimension_numbers<[1], [0], [0], [1], [0, 0, 1, 1], [], []>} : vector<2x32xbf16>, vector<32x32xbf16>, vector<2x32xf32> -> vector<2x32xf32>
    %143 = arith.addf %138, %142 : vector<2x32xf32>
    %144 = vector.extract_strided_slice %12 {offsets = [52, 0], sizes = [2, 32], strides = [1, 1]} : vector<98x32xbf16> to vector<2x32xbf16>
    %c26 = arith.constant 26 : index
    %c0_88 = arith.constant 0 : index
    %c0_89 = arith.constant 0 : index
    %145 = vector.load %arg4[%c26, %c0_88, %c0_89] : memref<49x32x32xbf16, #tpu.memory_space<vmem>>, vector<1x32x32xbf16>
    %146 = vector.shape_cast %145 : vector<1x32x32xbf16> to vector<32x32xbf16>
    %cst_90 = arith.constant dense<0.000000e+00> : vector<2x32xf32>
    %147 = tpu.matmul %144, %146, %cst_90 {dimension_numbers = #tpu.dot_dimension_numbers<[1], [0], [0], [1], [0, 0, 1, 1], [], []>} : vector<2x32xbf16>, vector<32x32xbf16>, vector<2x32xf32> -> vector<2x32xf32>
    %148 = arith.addf %143, %147 : vector<2x32xf32>
    %149 = vector.extract_strided_slice %12 {offsets = [54, 0], sizes = [2, 32], strides = [1, 1]} : vector<98x32xbf16> to vector<2x32xbf16>
    %c27 = arith.constant 27 : index
    %c0_91 = arith.constant 0 : index
    %c0_92 = arith.constant 0 : index
    %150 = vector.load %arg4[%c27, %c0_91, %c0_92] : memref<49x32x32xbf16, #tpu.memory_space<vmem>>, vector<1x32x32xbf16>
    %151 = vector.shape_cast %150 : vector<1x32x32xbf16> to vector<32x32xbf16>
    %cst_93 = arith.constant dense<0.000000e+00> : vector<2x32xf32>
    %152 = tpu.matmul %149, %151, %cst_93 {dimension_numbers = #tpu.dot_dimension_numbers<[1], [0], [0], [1], [0, 0, 1, 1], [], []>} : vector<2x32xbf16>, vector<32x32xbf16>, vector<2x32xf32> -> vector<2x32xf32>
    %153 = arith.addf %148, %152 : vector<2x32xf32>
    %154 = vector.extract_strided_slice %12 {offsets = [56, 0], sizes = [2, 32], strides = [1, 1]} : vector<98x32xbf16> to vector<2x32xbf16>
    %c28 = arith.constant 28 : index
    %c0_94 = arith.constant 0 : index
    %c0_95 = arith.constant 0 : index
    %155 = vector.load %arg4[%c28, %c0_94, %c0_95] : memref<49x32x32xbf16, #tpu.memory_space<vmem>>, vector<1x32x32xbf16>
    %156 = vector.shape_cast %155 : vector<1x32x32xbf16> to vector<32x32xbf16>
    %cst_96 = arith.constant dense<0.000000e+00> : vector<2x32xf32>
    %157 = tpu.matmul %154, %156, %cst_96 {dimension_numbers = #tpu.dot_dimension_numbers<[1], [0], [0], [1], [0, 0, 1, 1], [], []>} : vector<2x32xbf16>, vector<32x32xbf16>, vector<2x32xf32> -> vector<2x32xf32>
    %158 = arith.addf %153, %157 : vector<2x32xf32>
    %159 = vector.extract_strided_slice %12 {offsets = [58, 0], sizes = [2, 32], strides = [1, 1]} : vector<98x32xbf16> to vector<2x32xbf16>
    %c29 = arith.constant 29 : index
    %c0_97 = arith.constant 0 : index
    %c0_98 = arith.constant 0 : index
    %160 = vector.load %arg4[%c29, %c0_97, %c0_98] : memref<49x32x32xbf16, #tpu.memory_space<vmem>>, vector<1x32x32xbf16>
    %161 = vector.shape_cast %160 : vector<1x32x32xbf16> to vector<32x32xbf16>
    %cst_99 = arith.constant dense<0.000000e+00> : vector<2x32xf32>
    %162 = tpu.matmul %159, %161, %cst_99 {dimension_numbers = #tpu.dot_dimension_numbers<[1], [0], [0], [1], [0, 0, 1, 1], [], []>} : vector<2x32xbf16>, vector<32x32xbf16>, vector<2x32xf32> -> vector<2x32xf32>
    %163 = arith.addf %158, %162 : vector<2x32xf32>
    %164 = vector.extract_strided_slice %12 {offsets = [60, 0], sizes = [2, 32], strides = [1, 1]} : vector<98x32xbf16> to vector<2x32xbf16>
    %c30 = arith.constant 30 : index
    %c0_100 = arith.constant 0 : index
    %c0_101 = arith.constant 0 : index
    %165 = vector.load %arg4[%c30, %c0_100, %c0_101] : memref<49x32x32xbf16, #tpu.memory_space<vmem>>, vector<1x32x32xbf16>
    %166 = vector.shape_cast %165 : vector<1x32x32xbf16> to vector<32x32xbf16>
    %cst_102 = arith.constant dense<0.000000e+00> : vector<2x32xf32>
    %167 = tpu.matmul %164, %166, %cst_102 {dimension_numbers = #tpu.dot_dimension_numbers<[1], [0], [0], [1], [0, 0, 1, 1], [], []>} : vector<2x32xbf16>, vector<32x32xbf16>, vector<2x32xf32> -> vector<2x32xf32>
    %168 = arith.addf %163, %167 : vector<2x32xf32>
    %169 = vector.extract_strided_slice %12 {offsets = [62, 0], sizes = [2, 32], strides = [1, 1]} : vector<98x32xbf16> to vector<2x32xbf16>
    %c31 = arith.constant 31 : index
    %c0_103 = arith.constant 0 : index
    %c0_104 = arith.constant 0 : index
    %170 = vector.load %arg4[%c31, %c0_103, %c0_104] : memref<49x32x32xbf16, #tpu.memory_space<vmem>>, vector<1x32x32xbf16>
    %171 = vector.shape_cast %170 : vector<1x32x32xbf16> to vector<32x32xbf16>
    %cst_105 = arith.constant dense<0.000000e+00> : vector<2x32xf32>
    %172 = tpu.matmul %169, %171, %cst_105 {dimension_numbers = #tpu.dot_dimension_numbers<[1], [0], [0], [1], [0, 0, 1, 1], [], []>} : vector<2x32xbf16>, vector<32x32xbf16>, vector<2x32xf32> -> vector<2x32xf32>
    %173 = arith.addf %168, %172 : vector<2x32xf32>
    %174 = vector.extract_strided_slice %12 {offsets = [64, 0], sizes = [2, 32], strides = [1, 1]} : vector<98x32xbf16> to vector<2x32xbf16>
    %c32 = arith.constant 32 : index
    %c0_106 = arith.constant 0 : index
    %c0_107 = arith.constant 0 : index
    %175 = vector.load %arg4[%c32, %c0_106, %c0_107] : memref<49x32x32xbf16, #tpu.memory_space<vmem>>, vector<1x32x32xbf16>
    %176 = vector.shape_cast %175 : vector<1x32x32xbf16> to vector<32x32xbf16>
    %cst_108 = arith.constant dense<0.000000e+00> : vector<2x32xf32>
    %177 = tpu.matmul %174, %176, %cst_108 {dimension_numbers = #tpu.dot_dimension_numbers<[1], [0], [0], [1], [0, 0, 1, 1], [], []>} : vector<2x32xbf16>, vector<32x32xbf16>, vector<2x32xf32> -> vector<2x32xf32>
    %178 = arith.addf %173, %177 : vector<2x32xf32>
    %179 = vector.extract_strided_slice %12 {offsets = [66, 0], sizes = [2, 32], strides = [1, 1]} : vector<98x32xbf16> to vector<2x32xbf16>
    %c33 = arith.constant 33 : index
    %c0_109 = arith.constant 0 : index
    %c0_110 = arith.constant 0 : index
    %180 = vector.load %arg4[%c33, %c0_109, %c0_110] : memref<49x32x32xbf16, #tpu.memory_space<vmem>>, vector<1x32x32xbf16>
    %181 = vector.shape_cast %180 : vector<1x32x32xbf16> to vector<32x32xbf16>
    %cst_111 = arith.constant dense<0.000000e+00> : vector<2x32xf32>
    %182 = tpu.matmul %179, %181, %cst_111 {dimension_numbers = #tpu.dot_dimension_numbers<[1], [0], [0], [1], [0, 0, 1, 1], [], []>} : vector<2x32xbf16>, vector<32x32xbf16>, vector<2x32xf32> -> vector<2x32xf32>
    %183 = arith.addf %178, %182 : vector<2x32xf32>
    %184 = vector.extract_strided_slice %12 {offsets = [68, 0], sizes = [2, 32], strides = [1, 1]} : vector<98x32xbf16> to vector<2x32xbf16>
    %c34 = arith.constant 34 : index
    %c0_112 = arith.constant 0 : index
    %c0_113 = arith.constant 0 : index
    %185 = vector.load %arg4[%c34, %c0_112, %c0_113] : memref<49x32x32xbf16, #tpu.memory_space<vmem>>, vector<1x32x32xbf16>
    %186 = vector.shape_cast %185 : vector<1x32x32xbf16> to vector<32x32xbf16>
    %cst_114 = arith.constant dense<0.000000e+00> : vector<2x32xf32>
    %187 = tpu.matmul %184, %186, %cst_114 {dimension_numbers = #tpu.dot_dimension_numbers<[1], [0], [0], [1], [0, 0, 1, 1], [], []>} : vector<2x32xbf16>, vector<32x32xbf16>, vector<2x32xf32> -> vector<2x32xf32>
    %188 = arith.addf %183, %187 : vector<2x32xf32>
    %189 = vector.extract_strided_slice %12 {offsets = [70, 0], sizes = [2, 32], strides = [1, 1]} : vector<98x32xbf16> to vector<2x32xbf16>
    %c35 = arith.constant 35 : index
    %c0_115 = arith.constant 0 : index
    %c0_116 = arith.constant 0 : index
    %190 = vector.load %arg4[%c35, %c0_115, %c0_116] : memref<49x32x32xbf16, #tpu.memory_space<vmem>>, vector<1x32x32xbf16>
    %191 = vector.shape_cast %190 : vector<1x32x32xbf16> to vector<32x32xbf16>
    %cst_117 = arith.constant dense<0.000000e+00> : vector<2x32xf32>
    %192 = tpu.matmul %189, %191, %cst_117 {dimension_numbers = #tpu.dot_dimension_numbers<[1], [0], [0], [1], [0, 0, 1, 1], [], []>} : vector<2x32xbf16>, vector<32x32xbf16>, vector<2x32xf32> -> vector<2x32xf32>
    %193 = arith.addf %188, %192 : vector<2x32xf32>
    %194 = vector.extract_strided_slice %12 {offsets = [72, 0], sizes = [2, 32], strides = [1, 1]} : vector<98x32xbf16> to vector<2x32xbf16>
    %c36 = arith.constant 36 : index
    %c0_118 = arith.constant 0 : index
    %c0_119 = arith.constant 0 : index
    %195 = vector.load %arg4[%c36, %c0_118, %c0_119] : memref<49x32x32xbf16, #tpu.memory_space<vmem>>, vector<1x32x32xbf16>
    %196 = vector.shape_cast %195 : vector<1x32x32xbf16> to vector<32x32xbf16>
    %cst_120 = arith.constant dense<0.000000e+00> : vector<2x32xf32>
    %197 = tpu.matmul %194, %196, %cst_120 {dimension_numbers = #tpu.dot_dimension_numbers<[1], [0], [0], [1], [0, 0, 1, 1], [], []>} : vector<2x32xbf16>, vector<32x32xbf16>, vector<2x32xf32> -> vector<2x32xf32>
    %198 = arith.addf %193, %197 : vector<2x32xf32>
    %199 = vector.extract_strided_slice %12 {offsets = [74, 0], sizes = [2, 32], strides = [1, 1]} : vector<98x32xbf16> to vector<2x32xbf16>
    %c37 = arith.constant 37 : index
    %c0_121 = arith.constant 0 : index
    %c0_122 = arith.constant 0 : index
    %200 = vector.load %arg4[%c37, %c0_121, %c0_122] : memref<49x32x32xbf16, #tpu.memory_space<vmem>>, vector<1x32x32xbf16>
    %201 = vector.shape_cast %200 : vector<1x32x32xbf16> to vector<32x32xbf16>
    %cst_123 = arith.constant dense<0.000000e+00> : vector<2x32xf32>
    %202 = tpu.matmul %199, %201, %cst_123 {dimension_numbers = #tpu.dot_dimension_numbers<[1], [0], [0], [1], [0, 0, 1, 1], [], []>} : vector<2x32xbf16>, vector<32x32xbf16>, vector<2x32xf32> -> vector<2x32xf32>
    %203 = arith.addf %198, %202 : vector<2x32xf32>
    %204 = vector.extract_strided_slice %12 {offsets = [76, 0], sizes = [2, 32], strides = [1, 1]} : vector<98x32xbf16> to vector<2x32xbf16>
    %c38 = arith.constant 38 : index
    %c0_124 = arith.constant 0 : index
    %c0_125 = arith.constant 0 : index
    %205 = vector.load %arg4[%c38, %c0_124, %c0_125] : memref<49x32x32xbf16, #tpu.memory_space<vmem>>, vector<1x32x32xbf16>
    %206 = vector.shape_cast %205 : vector<1x32x32xbf16> to vector<32x32xbf16>
    %cst_126 = arith.constant dense<0.000000e+00> : vector<2x32xf32>
    %207 = tpu.matmul %204, %206, %cst_126 {dimension_numbers = #tpu.dot_dimension_numbers<[1], [0], [0], [1], [0, 0, 1, 1], [], []>} : vector<2x32xbf16>, vector<32x32xbf16>, vector<2x32xf32> -> vector<2x32xf32>
    %208 = arith.addf %203, %207 : vector<2x32xf32>
    %209 = vector.extract_strided_slice %12 {offsets = [78, 0], sizes = [2, 32], strides = [1, 1]} : vector<98x32xbf16> to vector<2x32xbf16>
    %c39 = arith.constant 39 : index
    %c0_127 = arith.constant 0 : index
    %c0_128 = arith.constant 0 : index
    %210 = vector.load %arg4[%c39, %c0_127, %c0_128] : memref<49x32x32xbf16, #tpu.memory_space<vmem>>, vector<1x32x32xbf16>
    %211 = vector.shape_cast %210 : vector<1x32x32xbf16> to vector<32x32xbf16>
    %cst_129 = arith.constant dense<0.000000e+00> : vector<2x32xf32>
    %212 = tpu.matmul %209, %211, %cst_129 {dimension_numbers = #tpu.dot_dimension_numbers<[1], [0], [0], [1], [0, 0, 1, 1], [], []>} : vector<2x32xbf16>, vector<32x32xbf16>, vector<2x32xf32> -> vector<2x32xf32>
    %213 = arith.addf %208, %212 : vector<2x32xf32>
    %214 = vector.extract_strided_slice %12 {offsets = [80, 0], sizes = [2, 32], strides = [1, 1]} : vector<98x32xbf16> to vector<2x32xbf16>
    %c40 = arith.constant 40 : index
    %c0_130 = arith.constant 0 : index
    %c0_131 = arith.constant 0 : index
    %215 = vector.load %arg4[%c40, %c0_130, %c0_131] : memref<49x32x32xbf16, #tpu.memory_space<vmem>>, vector<1x32x32xbf16>
    %216 = vector.shape_cast %215 : vector<1x32x32xbf16> to vector<32x32xbf16>
    %cst_132 = arith.constant dense<0.000000e+00> : vector<2x32xf32>
    %217 = tpu.matmul %214, %216, %cst_132 {dimension_numbers = #tpu.dot_dimension_numbers<[1], [0], [0], [1], [0, 0, 1, 1], [], []>} : vector<2x32xbf16>, vector<32x32xbf16>, vector<2x32xf32> -> vector<2x32xf32>
    %218 = arith.addf %213, %217 : vector<2x32xf32>
    %219 = vector.extract_strided_slice %12 {offsets = [82, 0], sizes = [2, 32], strides = [1, 1]} : vector<98x32xbf16> to vector<2x32xbf16>
    %c41 = arith.constant 41 : index
    %c0_133 = arith.constant 0 : index
    %c0_134 = arith.constant 0 : index
    %220 = vector.load %arg4[%c41, %c0_133, %c0_134] : memref<49x32x32xbf16, #tpu.memory_space<vmem>>, vector<1x32x32xbf16>
    %221 = vector.shape_cast %220 : vector<1x32x32xbf16> to vector<32x32xbf16>
    %cst_135 = arith.constant dense<0.000000e+00> : vector<2x32xf32>
    %222 = tpu.matmul %219, %221, %cst_135 {dimension_numbers = #tpu.dot_dimension_numbers<[1], [0], [0], [1], [0, 0, 1, 1], [], []>} : vector<2x32xbf16>, vector<32x32xbf16>, vector<2x32xf32> -> vector<2x32xf32>
    %223 = arith.addf %218, %222 : vector<2x32xf32>
    %224 = vector.extract_strided_slice %12 {offsets = [84, 0], sizes = [2, 32], strides = [1, 1]} : vector<98x32xbf16> to vector<2x32xbf16>
    %c42 = arith.constant 42 : index
    %c0_136 = arith.constant 0 : index
    %c0_137 = arith.constant 0 : index
    %225 = vector.load %arg4[%c42, %c0_136, %c0_137] : memref<49x32x32xbf16, #tpu.memory_space<vmem>>, vector<1x32x32xbf16>
    %226 = vector.shape_cast %225 : vector<1x32x32xbf16> to vector<32x32xbf16>
    %cst_138 = arith.constant dense<0.000000e+00> : vector<2x32xf32>
    %227 = tpu.matmul %224, %226, %cst_138 {dimension_numbers = #tpu.dot_dimension_numbers<[1], [0], [0], [1], [0, 0, 1, 1], [], []>} : vector<2x32xbf16>, vector<32x32xbf16>, vector<2x32xf32> -> vector<2x32xf32>
    %228 = arith.addf %223, %227 : vector<2x32xf32>
    %229 = vector.extract_strided_slice %12 {offsets = [86, 0], sizes = [2, 32], strides = [1, 1]} : vector<98x32xbf16> to vector<2x32xbf16>
    %c43 = arith.constant 43 : index
    %c0_139 = arith.constant 0 : index
    %c0_140 = arith.constant 0 : index
    %230 = vector.load %arg4[%c43, %c0_139, %c0_140] : memref<49x32x32xbf16, #tpu.memory_space<vmem>>, vector<1x32x32xbf16>
    %231 = vector.shape_cast %230 : vector<1x32x32xbf16> to vector<32x32xbf16>
    %cst_141 = arith.constant dense<0.000000e+00> : vector<2x32xf32>
    %232 = tpu.matmul %229, %231, %cst_141 {dimension_numbers = #tpu.dot_dimension_numbers<[1], [0], [0], [1], [0, 0, 1, 1], [], []>} : vector<2x32xbf16>, vector<32x32xbf16>, vector<2x32xf32> -> vector<2x32xf32>
    %233 = arith.addf %228, %232 : vector<2x32xf32>
    %234 = vector.extract_strided_slice %12 {offsets = [88, 0], sizes = [2, 32], strides = [1, 1]} : vector<98x32xbf16> to vector<2x32xbf16>
    %c44 = arith.constant 44 : index
    %c0_142 = arith.constant 0 : index
    %c0_143 = arith.constant 0 : index
    %235 = vector.load %arg4[%c44, %c0_142, %c0_143] : memref<49x32x32xbf16, #tpu.memory_space<vmem>>, vector<1x32x32xbf16>
    %236 = vector.shape_cast %235 : vector<1x32x32xbf16> to vector<32x32xbf16>
    %cst_144 = arith.constant dense<0.000000e+00> : vector<2x32xf32>
    %237 = tpu.matmul %234, %236, %cst_144 {dimension_numbers = #tpu.dot_dimension_numbers<[1], [0], [0], [1], [0, 0, 1, 1], [], []>} : vector<2x32xbf16>, vector<32x32xbf16>, vector<2x32xf32> -> vector<2x32xf32>
    %238 = arith.addf %233, %237 : vector<2x32xf32>
    %239 = vector.extract_strided_slice %12 {offsets = [90, 0], sizes = [2, 32], strides = [1, 1]} : vector<98x32xbf16> to vector<2x32xbf16>
    %c45 = arith.constant 45 : index
    %c0_145 = arith.constant 0 : index
    %c0_146 = arith.constant 0 : index
    %240 = vector.load %arg4[%c45, %c0_145, %c0_146] : memref<49x32x32xbf16, #tpu.memory_space<vmem>>, vector<1x32x32xbf16>
    %241 = vector.shape_cast %240 : vector<1x32x32xbf16> to vector<32x32xbf16>
    %cst_147 = arith.constant dense<0.000000e+00> : vector<2x32xf32>
    %242 = tpu.matmul %239, %241, %cst_147 {dimension_numbers = #tpu.dot_dimension_numbers<[1], [0], [0], [1], [0, 0, 1, 1], [], []>} : vector<2x32xbf16>, vector<32x32xbf16>, vector<2x32xf32> -> vector<2x32xf32>
    %243 = arith.addf %238, %242 : vector<2x32xf32>
    %244 = vector.extract_strided_slice %12 {offsets = [92, 0], sizes = [2, 32], strides = [1, 1]} : vector<98x32xbf16> to vector<2x32xbf16>
    %c46 = arith.constant 46 : index
    %c0_148 = arith.constant 0 : index
    %c0_149 = arith.constant 0 : index
    %245 = vector.load %arg4[%c46, %c0_148, %c0_149] : memref<49x32x32xbf16, #tpu.memory_space<vmem>>, vector<1x32x32xbf16>
    %246 = vector.shape_cast %245 : vector<1x32x32xbf16> to vector<32x32xbf16>
    %cst_150 = arith.constant dense<0.000000e+00> : vector<2x32xf32>
    %247 = tpu.matmul %244, %246, %cst_150 {dimension_numbers = #tpu.dot_dimension_numbers<[1], [0], [0], [1], [0, 0, 1, 1], [], []>} : vector<2x32xbf16>, vector<32x32xbf16>, vector<2x32xf32> -> vector<2x32xf32>
    %248 = arith.addf %243, %247 : vector<2x32xf32>
    %249 = vector.extract_strided_slice %12 {offsets = [94, 0], sizes = [2, 32], strides = [1, 1]} : vector<98x32xbf16> to vector<2x32xbf16>
    %c47 = arith.constant 47 : index
    %c0_151 = arith.constant 0 : index
    %c0_152 = arith.constant 0 : index
    %250 = vector.load %arg4[%c47, %c0_151, %c0_152] : memref<49x32x32xbf16, #tpu.memory_space<vmem>>, vector<1x32x32xbf16>
    %251 = vector.shape_cast %250 : vector<1x32x32xbf16> to vector<32x32xbf16>
    %cst_153 = arith.constant dense<0.000000e+00> : vector<2x32xf32>
    %252 = tpu.matmul %249, %251, %cst_153 {dimension_numbers = #tpu.dot_dimension_numbers<[1], [0], [0], [1], [0, 0, 1, 1], [], []>} : vector<2x32xbf16>, vector<32x32xbf16>, vector<2x32xf32> -> vector<2x32xf32>
    %253 = arith.addf %248, %252 : vector<2x32xf32>
    %254 = vector.extract_strided_slice %12 {offsets = [96, 0], sizes = [2, 32], strides = [1, 1]} : vector<98x32xbf16> to vector<2x32xbf16>
    %c48 = arith.constant 48 : index
    %c0_154 = arith.constant 0 : index
    %c0_155 = arith.constant 0 : index
    %255 = vector.load %arg4[%c48, %c0_154, %c0_155] : memref<49x32x32xbf16, #tpu.memory_space<vmem>>, vector<1x32x32xbf16>
    %256 = vector.shape_cast %255 : vector<1x32x32xbf16> to vector<32x32xbf16>
    %cst_156 = arith.constant dense<0.000000e+00> : vector<2x32xf32>
    %257 = tpu.matmul %254, %256, %cst_156 {dimension_numbers = #tpu.dot_dimension_numbers<[1], [0], [0], [1], [0, 0, 1, 1], [], []>} : vector<2x32xbf16>, vector<32x32xbf16>, vector<2x32xf32> -> vector<2x32xf32>
    %258 = arith.addf %253, %257 : vector<2x32xf32>
    %c0_157 = arith.constant 0 : index
    %c0_158 = arith.constant 0 : index
    %259 = vector.load %arg5[%c0_157, %c0_158] : memref<1x32xf32, #tpu.memory_space<vmem>>, vector<1x32xf32>
    %260 = vector.broadcast %259 : vector<1x32xf32> to vector<2x32xf32>
    %261 = arith.addf %258, %260 : vector<2x32xf32>
    %cst_159 = arith.constant 0.000000e+00 : f32
    %262 = vector.broadcast %cst_159 : f32 to vector<2x32xf32>
    %263 = arith.cmpf oge, %261, %262 : vector<2x32xf32>
    %264 = vector.broadcast %0 : vector<1x1xf32> to vector<2x32xf32>
    %265 = arith.mulf %261, %264 : vector<2x32xf32>
    %266 = arith.select %263, %261, %265 : vector<2x32xi1>, vector<2x32xf32>
    %267 = arith.truncf %266 : vector<2x32xf32> to vector<2x32xbf16>
    %c0_160 = arith.constant 0 : index
    %c0_161 = arith.constant 0 : index
    %268 = vector.load %arg6[%c0_160, %c0_161] : memref<32x128xbf16, #tpu.memory_space<vmem>>, vector<32x128xbf16>
    %cst_162 = arith.constant dense<0.000000e+00> : vector<2x128xf32>
    %269 = tpu.matmul %267, %268, %cst_162 {dimension_numbers = #tpu.dot_dimension_numbers<[1], [0], [0], [1], [0, 0, 1, 1], [], []>} : vector<2x32xbf16>, vector<32x128xbf16>, vector<2x128xf32> -> vector<2x128xf32>
    %c0_163 = arith.constant 0 : index
    %c0_164 = arith.constant 0 : index
    %270 = vector.load %arg7[%c0_163, %c0_164] : memref<1x128xf32, #tpu.memory_space<vmem>>, vector<1x128xf32>
    %271 = vector.broadcast %270 : vector<1x128xf32> to vector<2x128xf32>
    %272 = arith.addf %269, %271 : vector<2x128xf32>
    %cst_165 = arith.constant 0.000000e+00 : f32
    %273 = vector.broadcast %cst_165 : f32 to vector<2x128xf32>
    %274 = arith.cmpf oge, %272, %273 : vector<2x128xf32>
    %275 = vector.broadcast %0 : vector<1x1xf32> to vector<2x128xf32>
    %276 = arith.mulf %272, %275 : vector<2x128xf32>
    %277 = arith.select %274, %272, %276 : vector<2x128xi1>, vector<2x128xf32>
    %c0_166 = arith.constant 0 : index
    %c0_167 = arith.constant 0 : index
    %278 = vector.load %arg9[%c0_166, %c0_167] : memref<2x128xf32, #tpu.memory_space<vmem>>, vector<2x128xf32>
    tpu.vector_store %arg9[%c0_166, %c0_167], %277 {strides = array<i32>} : memref<2x128xf32, #tpu.memory_space<vmem>>, vector<2x128xf32>,
    return
  }
  func.func @transform_0(%arg0: i32) -> (i32, i32) {
    %c0_i32 = arith.constant 0 : i32
    %c0_i32_0 = arith.constant 0 : i32
    return %arg0, %c0_i32 : i32, i32
  }
  func.func @transform_1(%arg0: i32) -> (i32, i32) {
    %c0_i32 = arith.constant 0 : i32
    %c0_i32_0 = arith.constant 0 : i32
    %c0_i32_1 = arith.constant 0 : i32
    return %c0_i32, %c0_i32_0 : i32, i32
  }
  func.func @transform_2(%arg0: i32) -> (i32, i32) {
    %c0_i32 = arith.constant 0 : i32
    %c0_i32_0 = arith.constant 0 : i32
    %c0_i32_1 = arith.constant 0 : i32
    return %c0_i32, %c0_i32_0 : i32, i32
  }
  func.func @transform_3(%arg0: i32) -> (i32, i32, i32) {
    %c0_i32 = arith.constant 0 : i32
    %c0_i32_0 = arith.constant 0 : i32
    %c0_i32_1 = arith.constant 0 : i32
    %c0_i32_2 = arith.constant 0 : i32
    return %c0_i32, %c0_i32_0, %c0_i32_1 : i32, i32, i32
  }
  func.func @transform_4(%arg0: i32) -> (i32, i32) {
    %c0_i32 = arith.constant 0 : i32
    %c0_i32_0 = arith.constant 0 : i32
    %c0_i32_1 = arith.constant 0 : i32
    return %c0_i32, %c0_i32_0 : i32, i32
  }
  func.func @transform_5(%arg0: i32) -> (i32, i32) {
    %c0_i32 = arith.constant 0 : i32
    %c0_i32_0 = arith.constant 0 : i32
    %c0_i32_1 = arith.constant 0 : i32
    return %c0_i32, %c0_i32_0 : i32, i32
  }
  func.func @transform_6(%arg0: i32) -> (i32, i32) {
    %c0_i32 = arith.constant 0 : i32
    %c0_i32_0 = arith.constant 0 : i32
    %c0_i32_1 = arith.constant 0 : i32
    return %c0_i32, %c0_i32_0 : i32, i32
  }
  func.func @transform_7(%arg0: i32) -> (i32, i32) {
    %c0_i32 = arith.constant 0 : i32
    %c0_i32_0 = arith.constant 0 : i32
    %c0_i32_1 = arith.constant 0 : i32
    return %c0_i32, %c0_i32_0 : i32, i32
  }
  func.func @transform_8(%arg0: i32) -> (i32, i32) {
    %c0_i32 = arith.constant 0 : i32
    %c0_i32_0 = arith.constant 0 : i32
    return %arg0, %c0_i32 : i32, i32
  }
}

</mosaic_0001>

<llo_original>
// kernel: gimple_forward.1
$region0: #{gimple_forward.1}
  #allocation0 [shape = 'u32[]', space=smem, size = 0x4, offset = 0x4, fixed_abs, tag = 'smem constant byte address 0x4 - core index']
  #allocation1 [shape = 'u32[144,128]{1,0:T(1,128)}', space=vmem, size = 0x12000, scoped, tag = 'internal scratch']
  #allocation2 [shape = 'f32[1,1]{1,0:T(1,128)S(1)}', space=vmem, size = 0x200, scoped, tag = 'scoped memory for gimple_forward.1']
  %s0 = inlined_call_operand.vmem [shape: bf16[98,676], index: 0, kind: input, shape index: {}]
  %s1 = inlined_call_operand.vmem [shape: bf16[676,32], index: 1, kind: input, shape index: {}]
  %s2 = inlined_call_operand.vmem [shape: f32[1,32], index: 2, kind: input, shape index: {}]
  %s3 = inlined_call_operand.vmem [shape: bf16[49,32,32], index: 3, kind: input, shape index: {}]
  %s4 = inlined_call_operand.vmem [shape: f32[1,32], index: 4, kind: input, shape index: {}]
  %s5 = inlined_call_operand.vmem [shape: bf16[32,128], index: 5, kind: input, shape index: {}]
  %s6 = inlined_call_operand.vmem [shape: f32[1,128], index: 6, kind: input, shape index: {}]
  %s7 = inlined_call_operand.<no memory space> [shape: f32[1,1], index: 7, kind: input, shape index: {}]
  %s8 = inlined_call_operand.hbm [shape: f32[2,128], index: 8, kind: output, shape index: {}]
  %s9 = sld [smem:[#allocation0]]
  $region42: #{gimple_forward.1} parent=0
    _
  %s11 = ssub.s32 1, %s9
  %s12 = scalar_select 0, %s11, %s9
  %v13 = vstv %s7
  %14 = vst [vmem:[#allocation2] sm:$0x1] %v13
  $region1: #{gimple_forward.1} parent=0
    #allocation3 [shape = 'u8[1024]{0}', space=vmem, size = 0x400, scoped, tag = 'output window, operand 0, single buffered']
    #allocation4 [shape = 's32[1]{0}', space=sflag, size = 0x4, scoped, tag = 'scoped memory for gimple_forward.1']
    %15 = vsyncpa [#allocation4], 0
    // Predicated region
    $region2: #{gimple_forward.1} parent=1 // pred_check
      _
    $region3: #{gimple_forward.1} parent=1 // pred_check_branch
      %17 = sbr.rel (0) target = $region5
    $region4: #{gimple_forward.1} parent=1 // pred_region
      _
    $region5: #{gimple_forward.1} parent=1 // pred_fallthru
      _
    // Predicated region
    $region6: #{gimple_forward.1} parent=1 // pred_check
      _
    $region7: #{gimple_forward.1} parent=1 // pred_check_branch
      %19 = sbr.rel (0) target = $region9
    $region8: #{gimple_forward.1} parent=1 // pred_region
      _
    $region9: #{gimple_forward.1} parent=1 // pred_fallthru
      _
    // Predicated region
    $region10: #{gimple_forward.1} parent=1 // pred_check
      _
    $region11: #{gimple_forward.1} parent=1 // pred_check_branch
      %21 = sbr.rel (0) target = $region13
    $region12: #{gimple_forward.1} parent=1 // pred_region
      _
    $region13: #{gimple_forward.1} parent=1 // pred_fallthru
      _
    // Predicated region
    $region14: #{gimple_forward.1} parent=1 // pred_check
      _
    $region15: #{gimple_forward.1} parent=1 // pred_check_branch
      %23 = sbr.rel (0) target = $region17
    $region16: #{gimple_forward.1} parent=1 // pred_region
      _
    $region17: #{gimple_forward.1} parent=1 // pred_fallthru
      _
    // Predicated region
    $region18: #{gimple_forward.1} parent=1 // pred_check
      _
    $region19: #{gimple_forward.1} parent=1 // pred_check_branch
      %25 = sbr.rel (0) target = $region21
    $region20: #{gimple_forward.1} parent=1 // pred_region
      _
    $region21: #{gimple_forward.1} parent=1 // pred_fallthru
      _
    // Predicated region
    $region22: #{gimple_forward.1} parent=1 // pred_check
      _
    $region23: #{gimple_forward.1} parent=1 // pred_check_branch
      %27 = sbr.rel (0) target = $region25
    $region24: #{gimple_forward.1} parent=1 // pred_region
      _
    $region25: #{gimple_forward.1} parent=1 // pred_fallthru
      _
    // Predicated region
    $region26: #{gimple_forward.1} parent=1 // pred_check
      _
    $region27: #{gimple_forward.1} parent=1 // pred_check_branch
      %29 = sbr.rel (0) target = $region29
    $region28: #{gimple_forward.1} parent=1 // pred_region
      _
    $region29: #{gimple_forward.1} parent=1 // pred_fallthru
      _
    // Predicated region
    $region30: #{gimple_forward.1} parent=1 // pred_check
      _
    $region31: #{gimple_forward.1} parent=1 // pred_check_branch
      %31 = sbr.rel (0) target = $region33
    $region32: #{gimple_forward.1} parent=1 // pred_region
      _
    $region33: #{gimple_forward.1} parent=1 // pred_fallthru
      _
    %v33 = vld [vmem:[#allocation2] sm:$0x1]
    %v34 = vld [vmem:[%s0] sm:$0xff]
    %v35 = vld [vmem:[%s0 + $0x8] sm:$0xff]
    %v36 = vld [vmem:[%s0 + $0x10] sm:$0xff]
    %v37 = vld [vmem:[%s0 + $0x18] sm:$0xff]
    %v38 = vld [vmem:[%s0 + $0x20] sm:$0xff]
    %v39 = vld [vmem:[%s0 + $0x28] sm:$0xff]
    %v40 = vld [vmem:[%s0 + $0x30] sm:$0xff]
    %v41 = vld [vmem:[%s0 + $0x38] sm:$0xff]
    %v42 = vld [vmem:[%s0 + $0x40] sm:$0xff]
    %v43 = vld [vmem:[%s0 + $0x48] sm:$0xff]
    %v44 = vld [vmem:[%s0 + $0x50] sm:$0xff]
    %v45 = vld [vmem:[%s0 + $0x58] sm:$0xff]
    %v46 = vld [vmem:[%s0 + $0x60] sm:$0xff]
    %v47 = vld [vmem:[%s0 + $0x68] sm:$0xff]
    %v48 = vld [vmem:[%s0 + $0x70] sm:$0xff]
    %v49 = vld [vmem:[%s0 + $0x78] sm:$0xff]
    %v50 = vld [vmem:[%s0 + $0x80] sm:$0xff]
    %v51 = vld [vmem:[%s0 + $0x88] sm:$0xff]
    %v52 = vld [vmem:[%s0 + $0x90] sm:$0xff]
    %v53 = vld [vmem:[%s0 + $0x98] sm:$0xff]
    %v54 = vld [vmem:[%s0 + $0xa0] sm:$0xff]
    %v55 = vld [vmem:[%s0 + $0xa8] sm:$0xff]
    %v56 = vld [vmem:[%s0 + $0xb0] sm:$0xff]
    %v57 = vld [vmem:[%s0 + $0xb8] sm:$0xff]
    %v58 = vld [vmem:[%s0 + $0xc0] sm:$0xff]
    %v59 = vld [vmem:[%s0 + $0xc8] sm:$0xff]
    %v60 = vld [vmem:[%s0 + $0xd0] sm:$0xff]
    %v61 = vld [vmem:[%s0 + $0xd8] sm:$0xff]
    %v62 = vld [vmem:[%s0 + $0xe0] sm:$0xff]
    %v63 = vld [vmem:[%s0 + $0xe8] sm:$0xff]
    %v64 = vld [vmem:[%s0 + $0xf0] sm:$0xff]
    %v65 = vld [vmem:[%s0 + $0xf8] sm:$0xff]
    %v66 = vld [vmem:[%s0 + $0x100] sm:$0xff]
    %v67 = vld [vmem:[%s0 + $0x108] sm:$0xff]
    %v68 = vld [vmem:[%s0 + $0x110] sm:$0xff]
    %v69 = vld [vmem:[%s0 + $0x118] sm:$0xff]
    %v70 = vld [vmem:[%s0 + $0x120] sm:$0x11]
    %v71 = vld [vmem:[%s0 + $0x128] sm:$0x11]
    %v72 = vld [vmem:[%s0 + $0x130] sm:$0x11]
    %v73 = vld [vmem:[%s1] sm:$0xf]
    %v74 = vld [vmem:[%s1 + $0x4] sm:$0xf]
    %v75 = vld [vmem:[%s1 + $0x8] sm:$0xf]
    %v76 = vld [vmem:[%s1 + $0xc] sm:$0xf]
    %v77 = vld [vmem:[%s1 + $0x10] sm:$0xf]
    %v78 = vld [vmem:[%s1 + $0x14] sm:$0xf]
    %v79 = vld [vmem:[%s1 + $0x18] sm:$0xf]
    %v80 = vld [vmem:[%s1 + $0x1c] sm:$0xf]
    %v81 = vld [vmem:[%s1 + $0x20] sm:$0xf]
    %v82 = vld [vmem:[%s1 + $0x24] sm:$0xf]
    %v83 = vld [vmem:[%s1 + $0x28] sm:$0xf]
    %v84 = vld [vmem:[%s1 + $0x2c] sm:$0xf]
    %v85 = vld [vmem:[%s1 + $0x30] sm:$0xf]
    %v86 = vld [vmem:[%s1 + $0x34] sm:$0xf]
    %v87 = vld [vmem:[%s1 + $0x38] sm:$0xf]
    %v88 = vld [vmem:[%s1 + $0x3c] sm:$0xf]
    %v89 = vld [vmem:[%s1 + $0x40] sm:$0xf]
    %v90 = vld [vmem:[%s1 + $0x44] sm:$0xf]
    %v91 = vld [vmem:[%s1 + $0x48] sm:$0xf]
    %v92 = vld [vmem:[%s1 + $0x4c] sm:$0xf]
    %v93 = vld [vmem:[%s1 + $0x50] sm:$0xf]
    %v94 = vld [vmem:[%s1 + $0x54] sm:$0xf]
    %v95 = vld [vmem:[%s1 + $0x58] sm:$0xf]
    %v96 = vld [vmem:[%s1 + $0x5c] sm:$0xf]
    %v97 = vld [vmem:[%s1 + $0x60] sm:$0xf]
    %v98 = vld [vmem:[%s1 + $0x64] sm:$0xf]
    %v99 = vld [vmem:[%s1 + $0x68] sm:$0xf]
    %v100 = vld [vmem:[%s1 + $0x6c] sm:$0xf]
    %v101 = vld [vmem:[%s1 + $0x70] sm:$0xf]
    %v102 = vld [vmem:[%s1 + $0x74] sm:$0xf]
    %v103 = vld [vmem:[%s1 + $0x78] sm:$0xf]
    %v104 = vld [vmem:[%s1 + $0x7c] sm:$0xf]
    %v105 = vld [vmem:[%s1 + $0x80] sm:$0xf]
    %v106 = vld [vmem:[%s1 + $0x84] sm:$0xf]
    %v107 = vld [vmem:[%s1 + $0x88] sm:$0xf]
    %v108 = vld [vmem:[%s1 + $0x8c] sm:$0xf]
    %v109 = vld [vmem:[%s1 + $0x90] sm:$0xf]
    %v110 = vld [vmem:[%s1 + $0x94] sm:$0xf]
    %v111 = vld [vmem:[%s1 + $0x98] sm:$0xf]
    %v112 = vld [vmem:[%s1 + $0x9c] sm:$0xf]
    %v113 = vld [vmem:[%s1 + $0xa0] sm:$0xf]
    %v114 = vld [vmem:[%s1 + $0xa4] sm:$0xf]
    %v115 = vld [vmem:[%s1 + $0xa8] sm:$0xf]
    %v116 = vld [vmem:[%s1 + $0xac] sm:$0xf]
    %v117 = vld [vmem:[%s1 + $0xb0] sm:$0xf]
    %v118 = vld [vmem:[%s1 + $0xb4] sm:$0xf]
    %v119 = vld [vmem:[%s1 + $0xb8] sm:$0xf]
    %v120 = vld [vmem:[%s1 + $0xbc] sm:$0xf]
    %v121 = vld [vmem:[%s1 + $0xc0] sm:$0xf]
    %v122 = vld [vmem:[%s1 + $0xc4] sm:$0xf]
    %v123 = vld [vmem:[%s1 + $0xc8] sm:$0xf]
    %v124 = vld [vmem:[%s1 + $0xcc] sm:$0xf]
    %v125 = vld [vmem:[%s1 + $0xd0] sm:$0xf]
    %v126 = vld [vmem:[%s1 + $0xd4] sm:$0xf]
    %v127 = vld [vmem:[%s1 + $0xd8] sm:$0xf]
    %v128 = vld [vmem:[%s1 + $0xdc] sm:$0xf]
    %v129 = vld [vmem:[%s1 + $0xe0] sm:$0xf]
    %v130 = vld [vmem:[%s1 + $0xe4] sm:$0xf]
    %v131 = vld [vmem:[%s1 + $0xe8] sm:$0xf]
    %v132 = vld [vmem:[%s1 + $0xec] sm:$0xf]
    %v133 = vld [vmem:[%s1 + $0xf0] sm:$0xf]
    %v134 = vld [vmem:[%s1 + $0xf4] sm:$0xf]
    %v135 = vld [vmem:[%s1 + $0xf8] sm:$0xf]
    %v136 = vld [vmem:[%s1 + $0xfc] sm:$0xf]
    %v137 = vld [vmem:[%s1 + $0x100] sm:$0xf]
    %v138 = vld [vmem:[%s1 + $0x104] sm:$0xf]
    %v139 = vld [vmem:[%s1 + $0x108] sm:$0xf]
    %v140 = vld [vmem:[%s1 + $0x10c] sm:$0xf]
    %v141 = vld [vmem:[%s1 + $0x110] sm:$0xf]
    %v142 = vld [vmem:[%s1 + $0x114] sm:$0xf]
    %v143 = vld [vmem:[%s1 + $0x118] sm:$0xf]
    %v144 = vld [vmem:[%s1 + $0x11c] sm:$0xf]
    %v145 = vld [vmem:[%s1 + $0x120] sm:$0xf]
    %v146 = vld [vmem:[%s1 + $0x124] sm:$0xf]
    %v147 = vld [vmem:[%s1 + $0x128] sm:$0xf]
    %v148 = vld [vmem:[%s1 + $0x12c] sm:$0xf]
    %v149 = vld [vmem:[%s1 + $0x130] sm:$0xf]
    %v150 = vld [vmem:[%s1 + $0x134] sm:$0xf]
    %v151 = vld [vmem:[%s1 + $0x138] sm:$0xf]
    %v152 = vld [vmem:[%s1 + $0x13c] sm:$0xf]
    %v153 = vld [vmem:[%s1 + $0x140] sm:$0xf]
    %v154 = vld [vmem:[%s1 + $0x144] sm:$0xf]
    %v155 = vld [vmem:[%s1 + $0x148] sm:$0xf]
    %v156 = vld [vmem:[%s1 + $0x14c] sm:$0xf]
    %v157 = vld [vmem:[%s1 + $0x150] sm:$0x3]
    %v158 = vld [vmem:[%s2] sm:$0x1]
    %v160 = vlaneseq
    %v161 = vshrl.u32 %v160, 7
    %v162 = vsub.s32 0, %v161
    %v163 = vrot.slane %v158, %v162
    %v204 = vunpack.c.l.b16 %v34
    %v205 = vunpack.c.h.b16 %v34
    %v206 = vunpack.c.l.b16 %v35
    %v207 = vunpack.c.h.b16 %v35
    %v208 = vunpack.c.l.b16 %v36
    %v209 = vunpack.c.h.b16 %v36
    %v210 = vunpack.c.l.b16 %v37
    %v211 = vunpack.c.h.b16 %v37
    %v212 = vunpack.c.l.b16 %v38
    %v213 = vunpack.c.h.b16 %v38
    %v214 = vunpack.c.l.b16 %v39
    %v215 = vunpack.c.h.b16 %v39
    %v216 = vunpack.c.l.b16 %v40
    %v217 = vunpack.c.h.b16 %v40
    %v218 = vunpack.c.l.b16 %v41
    %v219 = vunpack.c.h.b16 %v41
    %v220 = vunpack.c.l.b16 %v42
    %v221 = vunpack.c.h.b16 %v42
    %v222 = vunpack.c.l.b16 %v43
    %v223 = vunpack.c.h.b16 %v43
    %v224 = vunpack.c.l.b16 %v44
    %v225 = vunpack.c.h.b16 %v44
    %v226 = vunpack.c.l.b16 %v45
    %v227 = vunpack.c.h.b16 %v45
    %v228 = vunpack.c.l.b16 %v46
    %v229 = vunpack.c.h.b16 %v46
    %v230 = vunpack.c.l.b16 %v47
    %v231 = vunpack.c.h.b16 %v47
    %v232 = vunpack.c.l.b16 %v48
    %v233 = vunpack.c.h.b16 %v48
    %v234 = vunpack.c.l.b16 %v49
    %v235 = vunpack.c.h.b16 %v49
    %v236 = vunpack.c.l.b16 %v50
    %v237 = vunpack.c.h.b16 %v50
    %v238 = vunpack.c.l.b16 %v51
    %v239 = vunpack.c.h.b16 %v51
    %v240 = vunpack.c.l.b16 %v52
    %v241 = vunpack.c.h.b16 %v52
    %v242 = vunpack.c.l.b16 %v53
    %v243 = vunpack.c.h.b16 %v53
    %v244 = vunpack.c.l.b16 %v54
    %v245 = vunpack.c.h.b16 %v54
    %v246 = vunpack.c.l.b16 %v55
    %v247 = vunpack.c.h.b16 %v55
    %v248 = vunpack.c.l.b16 %v56
    %v249 = vunpack.c.h.b16 %v56
    %v250 = vunpack.c.l.b16 %v57
    %v251 = vunpack.c.h.b16 %v57
    %v252 = vunpack.c.l.b16 %v58
    %v253 = vunpack.c.h.b16 %v58
    %v254 = vunpack.c.l.b16 %v59
    %v255 = vunpack.c.h.b16 %v59
    %v256 = vunpack.c.l.b16 %v60
    %v257 = vunpack.c.h.b16 %v60
    %v258 = vunpack.c.l.b16 %v61
    %v259 = vunpack.c.h.b16 %v61
    %v260 = vunpack.c.l.b16 %v62
    %v261 = vunpack.c.h.b16 %v62
    %v262 = vunpack.c.l.b16 %v63
    %v263 = vunpack.c.h.b16 %v63
    %v264 = vunpack.c.l.b16 %v64
    %v265 = vunpack.c.h.b16 %v64
    %v266 = vunpack.c.l.b16 %v65
    %v267 = vunpack.c.h.b16 %v65
    %v268 = vunpack.c.l.b16 %v66
    %v269 = vunpack.c.h.b16 %v66
    %v270 = vunpack.c.l.b16 %v67
    %v271 = vunpack.c.h.b16 %v67
    %v272 = vunpack.c.l.b16 %v68
    %v273 = vunpack.c.h.b16 %v68
    %v274 = vunpack.c.l.b16 %v69
    %v275 = vunpack.c.h.b16 %v69
    %v276 = vunpack.c.l.b16 %v70
    %v277 = vunpack.c.h.b16 %v70
    %v278 = vunpack.c.l.b16 %v71
    %v279 = vunpack.c.h.b16 %v71
    %v280 = vunpack.c.l.b16 %v72
    %v281 = vunpack.c.h.b16 %v72
    %v282 = vpack.c.b16 %v210, %v204
    %v283 = vpack.c.b16 %v211, %v205
    %v284 = vpack.c.b16 %v212, %v206
    %v285 = vpack.c.b16 %v213, %v207
    %v286 = vpack.c.b16 %v214, %v208
    %v287 = vpack.c.b16 %v215, %v209
    %v288 = vpack.c.b16 %v222, %v216
    %v289 = vpack.c.b16 %v223, %v217
    %v290 = vpack.c.b16 %v224, %v218
    %v291 = vpack.c.b16 %v225, %v219
    %v292 = vpack.c.b16 %v226, %v220
    %v293 = vpack.c.b16 %v227, %v221
    %v294 = vpack.c.b16 %v234, %v228
    %v295 = vpack.c.b16 %v235, %v229
    %v296 = vpack.c.b16 %v236, %v230
    %v297 = vpack.c.b16 %v237, %v231
    %v298 = vpack.c.b16 %v238, %v232
    %v299 = vpack.c.b16 %v239, %v233
    %v300 = vpack.c.b16 %v246, %v240
    %v301 = vpack.c.b16 %v247, %v241
    %v302 = vpack.c.b16 %v248, %v242
    %v303 = vpack.c.b16 %v249, %v243
    %v304 = vpack.c.b16 %v250, %v244
    %v305 = vpack.c.b16 %v251, %v245
    %v306 = vpack.c.b16 %v258, %v252
    %v307 = vpack.c.b16 %v259, %v253
    %v308 = vpack.c.b16 %v260, %v254
    %v309 = vpack.c.b16 %v261, %v255
    %v310 = vpack.c.b16 %v262, %v256
    %v311 = vpack.c.b16 %v263, %v257
    %v312 = vpack.c.b16 %v270, %v264
    %v313 = vpack.c.b16 %v271, %v265
    %v314 = vpack.c.b16 %v272, %v266
    %v315 = vpack.c.b16 %v273, %v267
    %v316 = vpack.c.b16 %v274, %v268
    %v317 = vpack.c.b16 %v275, %v269
    %v318 = vpack.c.b16 %v276, %v276
    %v319 = vpack.c.b16 %v277, %v277
    %v320 = vpack.c.b16 %v278, %v278
    %v321 = vpack.c.b16 %v279, %v279
    %v322 = vpack.c.b16 %v280, %v280
    %v323 = vpack.c.b16 %v281, %v281
    %v444 = vunpack.c.l.b16 %v73
    %v445 = vunpack.c.l.b16 %v74
    %v446 = vunpack.c.l.b16 %v75
    %v447 = vunpack.c.l.b16 %v76
    %v448 = vunpack.c.l.b16 %v77
    %v449 = vunpack.c.l.b16 %v78
    %v450 = vunpack.c.l.b16 %v79
    %v451 = vunpack.c.l.b16 %v80
    %v452 = vunpack.c.l.b16 %v81
    %v453 = vunpack.c.l.b16 %v82
    %v454 = vunpack.c.l.b16 %v83
    %v455 = vunpack.c.l.b16 %v84
    %v456 = vunpack.c.l.b16 %v85
    %v457 = vunpack.c.l.b16 %v86
    %v458 = vunpack.c.l.b16 %v87
    %v459 = vunpack.c.l.b16 %v88
    %v460 = vunpack.c.l.b16 %v89
    %v461 = vunpack.c.l.b16 %v90
    %v462 = vunpack.c.l.b16 %v91
    %v463 = vunpack.c.l.b16 %v92
    %v464 = vunpack.c.l.b16 %v93
    %v465 = vunpack.c.l.b16 %v94
    %v466 = vunpack.c.l.b16 %v95
    %v467 = vunpack.c.l.b16 %v96
    %v468 = vunpack.c.l.b16 %v97
    %v469 = vunpack.c.l.b16 %v98
    %v470 = vunpack.c.l.b16 %v99
    %v471 = vunpack.c.l.b16 %v100
    %v472 = vunpack.c.l.b16 %v101
    %v473 = vunpack.c.l.b16 %v102
    %v474 = vunpack.c.l.b16 %v103
    %v475 = vunpack.c.l.b16 %v104
    %v476 = vunpack.c.l.b16 %v105
    %v477 = vunpack.c.l.b16 %v106
    %v478 = vunpack.c.l.b16 %v107
    %v479 = vunpack.c.l.b16 %v108
    %v480 = vunpack.c.l.b16 %v109
    %v481 = vunpack.c.l.b16 %v110
    %v482 = vunpack.c.l.b16 %v111
    %v483 = vunpack.c.l.b16 %v112
    %v484 = vunpack.c.l.b16 %v113
    %v485 = vunpack.c.l.b16 %v114
    %v486 = vunpack.c.l.b16 %v115
    %v487 = vunpack.c.l.b16 %v116
    %v488 = vunpack.c.l.b16 %v117
    %v489 = vunpack.c.l.b16 %v118
    %v490 = vunpack.c.l.b16 %v119
    %v491 = vunpack.c.l.b16 %v120
    %v492 = vunpack.c.l.b16 %v121
    %v493 = vunpack.c.l.b16 %v122
    %v494 = vunpack.c.l.b16 %v123
    %v495 = vunpack.c.l.b16 %v124
    %v496 = vunpack.c.l.b16 %v125
    %v497 = vunpack.c.l.b16 %v126
    %v498 = vunpack.c.l.b16 %v127
    %v499 = vunpack.c.l.b16 %v128
    %v500 = vunpack.c.l.b16 %v129
    %v501 = vunpack.c.l.b16 %v130
    %v502 = vunpack.c.l.b16 %v131
    %v503 = vunpack.c.l.b16 %v132
    %v504 = vunpack.c.l.b16 %v133
    %v505 = vunpack.c.l.b16 %v134
    %v506 = vunpack.c.l.b16 %v135
    %v507 = vunpack.c.l.b16 %v136
    %v508 = vunpack.c.l.b16 %v137
    %v509 = vunpack.c.l.b16 %v138
    %v510 = vunpack.c.l.b16 %v139
    %v511 = vunpack.c.l.b16 %v140
    %v512 = vunpack.c.l.b16 %v141
    %v513 = vunpack.c.l.b16 %v142
    %v514 = vunpack.c.l.b16 %v143
    %v515 = vunpack.c.l.b16 %v144
    %v516 = vunpack.c.l.b16 %v145
    %v517 = vunpack.c.l.b16 %v146
    %v518 = vunpack.c.l.b16 %v147
    %v519 = vunpack.c.l.b16 %v148
    %v520 = vunpack.c.l.b16 %v149
    %v521 = vunpack.c.l.b16 %v150
    %v522 = vunpack.c.l.b16 %v151
    %v523 = vunpack.c.l.b16 %v152
    %v524 = vunpack.c.l.b16 %v153
    %v525 = vunpack.c.l.b16 %v154
    %v526 = vunpack.c.l.b16 %v155
    %v527 = vunpack.c.l.b16 %v156
    %v528 = vunpack.c.l.b16 %v157
    %v529 = vpack.c.b16 %v445, %v444
    %v530 = vpack.c.b16 %v447, %v446
    %v531 = vpack.c.b16 %v449, %v448
    %v532 = vpack.c.b16 %v451, %v450
    %v533 = vpack.c.b16 %v453, %v452
    %v534 = vpack.c.b16 %v455, %v454
    %v535 = vpack.c.b16 %v457, %v456
    %v536 = vpack.c.b16 %v459, %v458
    %v537 = vpack.c.b16 %v461, %v460
    %v538 = vpack.c.b16 %v463, %v462
    %v539 = vpack.c.b16 %v465, %v464
    %v540 = vpack.c.b16 %v467, %v466
    %v541 = vpack.c.b16 %v469, %v468
    %v542 = vpack.c.b16 %v471, %v470
    %v543 = vpack.c.b16 %v473, %v472
    %v544 = vpack.c.b16 %v475, %v474
    %v545 = vpack.c.b16 %v477, %v476
    %v546 = vpack.c.b16 %v479, %v478
    %v547 = vpack.c.b16 %v481, %v480
    %v548 = vpack.c.b16 %v483, %v482
    %v549 = vpack.c.b16 %v485, %v484
    %v550 = vpack.c.b16 %v487, %v486
    %v551 = vpack.c.b16 %v489, %v488
    %v552 = vpack.c.b16 %v491, %v490
    %v553 = vpack.c.b16 %v493, %v492
    %v554 = vpack.c.b16 %v495, %v494
    %v555 = vpack.c.b16 %v497, %v496
    %v556 = vpack.c.b16 %v499, %v498
    %v557 = vpack.c.b16 %v501, %v500
    %v558 = vpack.c.b16 %v503, %v502
    %v559 = vpack.c.b16 %v505, %v504
    %v560 = vpack.c.b16 %v507, %v506
    %v561 = vpack.c.b16 %v509, %v508
    %v562 = vpack.c.b16 %v511, %v510
    %v563 = vpack.c.b16 %v513, %v512
    %v564 = vpack.c.b16 %v515, %v514
    %v565 = vpack.c.b16 %v517, %v516
    %v566 = vpack.c.b16 %v519, %v518
    %v567 = vpack.c.b16 %v521, %v520
    %v568 = vpack.c.b16 %v523, %v522
    %v569 = vpack.c.b16 %v525, %v524
    %v570 = vpack.c.b16 %v527, %v526
    %v571 = vpack.c.b16 %v528, %v528
    %vm614 = vcmask 293888
    %v616 = vsel %vm614, %v287, 0
    %v619 = vsel %vm614, %v293, 0
    %v622 = vsel %vm614, %v299, 0
    %v625 = vsel %vm614, %v305, 0
    %v628 = vsel %vm614, %v311, 0
    %v631 = vsel %vm614, %v317, 0
    %v634 = vsel %vm614, %v323, 0
    %vm636 = vcmask 1041408
    %v638 = vsel %vm636, %v571, 0
    %640 = vmatprep.subr.bf16.mxu0 0
    %641 = vmatpush1.bf16.msra.mxu0 %v529
    %642 = vmatprep.subr.bf16.mxu0 0
    %643 = vmatpush1.bf16.msra.mxu0 %v530
    %644 = vmatprep.subr.bf16.mxu0 0
    %645 = vmatpush1.bf16.msra.mxu0 %v531
    %646 = vmatprep.subr.bf16.mxu0 0
    %647 = vmatpush1.bf16.msra.mxu0 %v532
    %648 = vmatprep.subr.bf16.mxu0 0
    %649 = vmatpush1.bf16.msra.mxu0 %v533
    %650 = vmatprep.subr.bf16.mxu0 0
    %651 = vmatpush1.bf16.msra.mxu0 %v534
    %652 = vmatprep.subr.bf16.mxu0 0
    %653 = vmatpush1.bf16.msra.mxu0 %v535
    %654 = vmatprep.subr.bf16.mxu0 0
    %655 = vmatpush1.bf16.msra.mxu0 %v536
    %656 = vmatprep.subr.bf16.mxu0 0
    %657 = vmatpush1.bf16.msra.mxu0 %v537
    %658 = vmatprep.subr.bf16.mxu0 0
    %659 = vmatpush1.bf16.msra.mxu0 %v538
    %660 = vmatprep.subr.bf16.mxu0 0
    %661 = vmatpush1.bf16.msra.mxu0 %v539
    %662 = vmatprep.subr.bf16.mxu0 0
    %663 = vmatpush1.bf16.msra.mxu0 %v540
    %664 = vmatprep.subr.bf16.mxu0 0
    %665 = vmatpush1.bf16.msra.mxu0 %v541
    %666 = vmatprep.subr.bf16.mxu0 0
    %667 = vmatpush1.bf16.msra.mxu0 %v542
    %668 = vmatprep.subr.bf16.mxu0 0
    %669 = vmatpush1.bf16.msra.mxu0 %v543
    %670 = vmatprep.subr.bf16.mxu0 0
    %671 = vmatpush1.bf16.msra.mxu0 %v544
    %672 = vmatprep.mubr.bf16.mxu0 %v283
    %673 = vmatmul.mubr.bf16.gmra.mrb[0].mxu0 %v282
    %v674 = vpop.f32.mrb[0].mxu0
    %v675 = vadd.f32 %v163, %v674
    %v676 = vpop.f32.mrb[0].mxu0
    %v677 = vpop.f32.mrb[0].mxu0
    %v678 = vadd.f32 %v163, %v677
    %v679 = vpop.f32.mrb[0].mxu0
    %680 = vmatprep.mubr.bf16.mxu0 %v289
    %681 = vmatmul.mubr.bf16.gmra.mrb[0].mxu0 %v288
    %v682 = vpop.f32.mrb[0].mxu0
    %v683 = vadd.f32 %v163, %v682
    %v684 = vpop.f32.mrb[0].mxu0
    %v685 = vpop.f32.mrb[0].mxu0
    %v686 = vadd.f32 %v163, %v685
    %v687 = vpop.f32.mrb[0].mxu0
    %688 = vmatprep.mubr.bf16.mxu0 %v295
    %689 = vmatmul.mubr.bf16.gmra.mrb[0].mxu0 %v294
    %v690 = vpop.f32.mrb[0].mxu0
    %v691 = vadd.f32 %v163, %v690
    %v692 = vpop.f32.mrb[0].mxu0
    %v693 = vpop.f32.mrb[0].mxu0
    %v694 = vadd.f32 %v163, %v693
    %v695 = vpop.f32.mrb[0].mxu0
    %696 = vmatprep.mubr.bf16.mxu0 %v301
    %697 = vmatmul.mubr.bf16.gmra.mrb[0].mxu0 %v300
    %v698 = vpop.f32.mrb[0].mxu0
    %v699 = vadd.f32 %v163, %v698
    %v700 = vpop.f32.mrb[0].mxu0
    %v701 = vpop.f32.mrb[0].mxu0
    %v702 = vadd.f32 %v163, %v701
    %v703 = vpop.f32.mrb[0].mxu0
    %704 = vmatprep.mubr.bf16.mxu0 %v307
    %705 = vmatmul.mubr.bf16.gmra.mrb[0].mxu0 %v306
    %v706 = vpop.f32.mrb[0].mxu0
    %v707 = vadd.f32 %v163, %v706
    %v708 = vpop.f32.mrb[0].mxu0
    %v709 = vpop.f32.mrb[0].mxu0
    %v710 = vadd.f32 %v163, %v709
    %v711 = vpop.f32.mrb[0].mxu0
    %712 = vmatprep.mubr.bf16.mxu0 %v313
    %713 = vmatmul.mubr.bf16.gmra.mrb[0].mxu0 %v312
    %v714 = vpop.f32.mrb[0].mxu0
    %v715 = vadd.f32 %v163, %v714
    %v716 = vpop.f32.mrb[0].mxu0
    %v717 = vpop.f32.mrb[0].mxu0
    %v718 = vadd.f32 %v163, %v717
    %v719 = vpop.f32.mrb[0].mxu0
    %720 = vmatprep.mubr.bf16.mxu0 %v319
    %721 = vmatmul.mubr.bf16.gmra.mrb[0].mxu0 %v318
    %v722 = vpop.f32.mrb[0].mxu0
    %v723 = vadd.f32 %v163, %v722
    %v724 = vpop.f32.mrb[0].mxu0
    %v725 = vpop.f32.mrb[0].mxu0
    %v726 = vpop.f32.mrb[0].mxu0
    %727 = vdwg.mxu0
    %728 = vmatprep.subr.bf16.mxu0 0
    %729 = vmatpush1.bf16.msra.mxu0 %v545
    %730 = vmatprep.subr.bf16.mxu0 0
    %731 = vmatpush1.bf16.msra.mxu0 %v546
    %732 = vmatprep.subr.bf16.mxu0 0
    %733 = vmatpush1.bf16.msra.mxu0 %v547
    %734 = vmatprep.subr.bf16.mxu0 0
    %735 = vmatpush1.bf16.msra.mxu0 %v548
    %736 = vmatprep.subr.bf16.mxu0 0
    %737 = vmatpush1.bf16.msra.mxu0 %v549
    %738 = vmatprep.subr.bf16.mxu0 0
    %739 = vmatpush1.bf16.msra.mxu0 %v550
    %740 = vmatprep.subr.bf16.mxu0 0
    %741 = vmatpush1.bf16.msra.mxu0 %v551
    %742 = vmatprep.subr.bf16.mxu0 0
    %743 = vmatpush1.bf16.msra.mxu0 %v552
    %744 = vmatprep.subr.bf16.mxu0 0
    %745 = vmatpush1.bf16.msra.mxu0 %v553
    %746 = vmatprep.subr.bf16.mxu0 0
    %747 = vmatpush1.bf16.msra.mxu0 %v554
    %748 = vmatprep.subr.bf16.mxu0 0
    %749 = vmatpush1.bf16.msra.mxu0 %v555
    %750 = vmatprep.subr.bf16.mxu0 0
    %751 = vmatpush1.bf16.msra.mxu0 %v556
    %752 = vmatprep.subr.bf16.mxu0 0
    %753 = vmatpush1.bf16.msra.mxu0 %v557
    %754 = vmatprep.subr.bf16.mxu0 0
    %755 = vmatpush1.bf16.msra.mxu0 %v558
    %756 = vmatprep.subr.bf16.mxu0 0
    %757 = vmatpush1.bf16.msra.mxu0 %v559
    %758 = vmatprep.subr.bf16.mxu0 0
    %759 = vmatpush1.bf16.msra.mxu0 %v560
    %760 = vmatprep.mubr.bf16.mxu0 %v285
    %761 = vmatmul.mubr.bf16.gmra.mrb[0].mxu0 %v284
    %v762 = vpop.f32.mrb[0].mxu0
    %v763 = vadd.f32 %v675, %v762
    %v764 = vpop.f32.mrb[0].mxu0
    %v765 = vpop.f32.mrb[0].mxu0
    %v766 = vadd.f32 %v678, %v765
    %v767 = vpop.f32.mrb[0].mxu0
    %768 = vmatprep.mubr.bf16.mxu0 %v291
    %769 = vmatmul.mubr.bf16.gmra.mrb[0].mxu0 %v290
    %v770 = vpop.f32.mrb[0].mxu0
    %v771 = vadd.f32 %v683, %v770
    %v772 = vpop.f32.mrb[0].mxu0
    %v773 = vpop.f32.mrb[0].mxu0
    %v774 = vadd.f32 %v686, %v773
    %v775 = vpop.f32.mrb[0].mxu0
    %776 = vmatprep.mubr.bf16.mxu0 %v297
    %777 = vmatmul.mubr.bf16.gmra.mrb[0].mxu0 %v296
    %v778 = vpop.f32.mrb[0].mxu0
    %v779 = vadd.f32 %v691, %v778
    %v780 = vpop.f32.mrb[0].mxu0
    %v781 = vpop.f32.mrb[0].mxu0
    %v782 = vadd.f32 %v694, %v781
    %v783 = vpop.f32.mrb[0].mxu0
    %784 = vmatprep.mubr.bf16.mxu0 %v303
    %785 = vmatmul.mubr.bf16.gmra.mrb[0].mxu0 %v302
    %v786 = vpop.f32.mrb[0].mxu0
    %v787 = vadd.f32 %v699, %v786
    %v788 = vpop.f32.mrb[0].mxu0
    %v789 = vpop.f32.mrb[0].mxu0
    %v790 = vadd.f32 %v702, %v789
    %v791 = vpop.f32.mrb[0].mxu0
    %792 = vmatprep.mubr.bf16.mxu0 %v309
    %793 = vmatmul.mubr.bf16.gmra.mrb[0].mxu0 %v308
    %v794 = vpop.f32.mrb[0].mxu0
    %v795 = vadd.f32 %v707, %v794
    %v796 = vpop.f32.mrb[0].mxu0
    %v797 = vpop.f32.mrb[0].mxu0
    %v798 = vadd.f32 %v710, %v797
    %v799 = vpop.f32.mrb[0].mxu0
    %800 = vmatprep.mubr.bf16.mxu0 %v315
    %801 = vmatmul.mubr.bf16.gmra.mrb[0].mxu0 %v314
    %v802 = vpop.f32.mrb[0].mxu0
    %v803 = vadd.f32 %v715, %v802
    %v804 = vpop.f32.mrb[0].mxu0
    %v805 = vpop.f32.mrb[0].mxu0
    %v806 = vadd.f32 %v718, %v805
    %v807 = vpop.f32.mrb[0].mxu0
    %808 = vmatprep.mubr.bf16.mxu0 %v321
    %809 = vmatmul.mubr.bf16.gmra.mrb[0].mxu0 %v320
    %v810 = vpop.f32.mrb[0].mxu0
    %v811 = vadd.f32 %v723, %v810
    %v812 = vpop.f32.mrb[0].mxu0
    %v813 = vpop.f32.mrb[0].mxu0
    %v814 = vpop.f32.mrb[0].mxu0
    %815 = vdwg.mxu0
    %816 = vmatprep.subr.bf16.mxu0 0
    %817 = vmatpush1.bf16.msra.mxu0 %v561
    %818 = vmatprep.subr.bf16.mxu0 0
    %819 = vmatpush1.bf16.msra.mxu0 %v562
    %820 = vmatprep.subr.bf16.mxu0 0
    %821 = vmatpush1.bf16.msra.mxu0 %v563
    %822 = vmatprep.subr.bf16.mxu0 0
    %823 = vmatpush1.bf16.msra.mxu0 %v564
    %824 = vmatprep.subr.bf16.mxu0 0
    %825 = vmatpush1.bf16.msra.mxu0 %v565
    %826 = vmatprep.subr.bf16.mxu0 0
    %827 = vmatpush1.bf16.msra.mxu0 %v566
    %828 = vmatprep.subr.bf16.mxu0 0
    %829 = vmatpush1.bf16.msra.mxu0 %v567
    %830 = vmatprep.subr.bf16.mxu0 0
    %831 = vmatpush1.bf16.msra.mxu0 %v568
    %832 = vmatprep.subr.bf16.mxu0 0
    %833 = vmatpush1.bf16.msra.mxu0 %v569
    %834 = vmatprep.subr.bf16.mxu0 0
    %835 = vmatpush1.bf16.msra.mxu0 %v570
    %836 = vmatprep.subr.bf16.mxu0 0
    %837 = vmatpush1.bf16.msra.mxu0 %v638
    %838 = vmatprep.subr.bf16.mxu0 0
    %839 = vmatpush1.bf16.msra.mxu0 0
    %840 = vmatprep.subr.bf16.mxu0 0
    %841 = vmatpush1.bf16.msra.mxu0 0
    %842 = vmatprep.subr.bf16.mxu0 0
    %843 = vmatpush1.bf16.msra.mxu0 0
    %844 = vmatprep.subr.bf16.mxu0 0
    %845 = vmatpush1.bf16.msra.mxu0 0
    %846 = vmatprep.subr.bf16.mxu0 0
    %847 = vmatpush1.bf16.msra.mxu0 0
    %848 = vmatprep.mubr.bf16.mxu0 %v616
    %849 = vmatmul.mubr.bf16.gmra.mrb[0].mxu0 %v286
    %v850 = vpop.f32.mrb[0].mxu0
    %v851 = vadd.f32 %v763, %v850
    %v852 = vpop.f32.mrb[0].mxu0
    %v853 = vpop.f32.mrb[0].mxu0
    %v854 = vadd.f32 %v766, %v853
    %v855 = vpop.f32.mrb[0].mxu0
    %856 = vmatprep.mubr.bf16.mxu0 %v619
    %857 = vmatmul.mubr.bf16.gmra.mrb[0].mxu0 %v292
    %v858 = vpop.f32.mrb[0].mxu0
    %v859 = vadd.f32 %v771, %v858
    %v860 = vpop.f32.mrb[0].mxu0
    %v861 = vpop.f32.mrb[0].mxu0
    %v862 = vadd.f32 %v774, %v861
    %v863 = vpop.f32.mrb[0].mxu0
    %864 = vmatprep.mubr.bf16.mxu0 %v622
    %865 = vmatmul.mubr.bf16.gmra.mrb[0].mxu0 %v298
    %v866 = vpop.f32.mrb[0].mxu0
    %v867 = vadd.f32 %v779, %v866
    %v868 = vpop.f32.mrb[0].mxu0
    %v869 = vpop.f32.mrb[0].mxu0
    %v870 = vadd.f32 %v782, %v869
    %v871 = vpop.f32.mrb[0].mxu0
    %872 = vmatprep.mubr.bf16.mxu0 %v625
    %873 = vmatmul.mubr.bf16.gmra.mrb[0].mxu0 %v304
    %v874 = vpop.f32.mrb[0].mxu0
    %v875 = vadd.f32 %v787, %v874
    %v876 = vpop.f32.mrb[0].mxu0
    %v877 = vpop.f32.mrb[0].mxu0
    %v878 = vadd.f32 %v790, %v877
    %v879 = vpop.f32.mrb[0].mxu0
    %880 = vmatprep.mubr.bf16.mxu0 %v628
    %881 = vmatmul.mubr.bf16.gmra.mrb[0].mxu0 %v310
    %v882 = vpop.f32.mrb[0].mxu0
    %v883 = vadd.f32 %v795, %v882
    %v884 = vpop.f32.mrb[0].mxu0
    %v885 = vpop.f32.mrb[0].mxu0
    %v886 = vadd.f32 %v798, %v885
    %v887 = vpop.f32.mrb[0].mxu0
    %888 = vmatprep.mubr.bf16.mxu0 %v631
    %889 = vmatmul.mubr.bf16.gmra.mrb[0].mxu0 %v316
    %v890 = vpop.f32.mrb[0].mxu0
    %v891 = vadd.f32 %v803, %v890
    %v892 = vpop.f32.mrb[0].mxu0
    %v893 = vpop.f32.mrb[0].mxu0
    %v894 = vadd.f32 %v806, %v893
    %v895 = vpop.f32.mrb[0].mxu0
    %896 = vmatprep.mubr.bf16.mxu0 %v634
    %897 = vmatmul.mubr.bf16.gmra.mrb[0].mxu0 %v322
    %v898 = vpop.f32.mrb[0].mxu0
    %v899 = vadd.f32 %v811, %v898
    %v900 = vpop.f32.mrb[0].mxu0
    %v901 = vpop.f32.mrb[0].mxu0
    %v902 = vpop.f32.mrb[0].mxu0
    %903 = vdwg.mxu0
    %vm904 = vcmp.ge.f32.partialorder %v851, 0.0
    %vm905 = vcmp.ge.f32.partialorder %v854, 0.0
    %vm906 = vcmp.ge.f32.partialorder %v859, 0.0
    %vm907 = vcmp.ge.f32.partialorder %v862, 0.0
    %vm908 = vcmp.ge.f32.partialorder %v867, 0.0
    %vm909 = vcmp.ge.f32.partialorder %v870, 0.0
    %vm910 = vcmp.ge.f32.partialorder %v875, 0.0
    %vm911 = vcmp.ge.f32.partialorder %v878, 0.0
    %vm912 = vcmp.ge.f32.partialorder %v883, 0.0
    %vm913 = vcmp.ge.f32.partialorder %v886, 0.0
    %vm914 = vcmp.ge.f32.partialorder %v891, 0.0
    %vm915 = vcmp.ge.f32.partialorder %v894, 0.0
    %vm916 = vcmp.ge.f32.partialorder %v899, 0.0
    %v918 = vlaneseq
    %v919 = vshrl.u32 %v918, 7
    %v920 = vsub.s32 0, %v919
    %v921 = vrot.slane %v33, %v920
    %922 = vset.pattern.permute.xlu0 0
    %923 = vperm.xlu0 %922, %v921
    %v924 = vpop.permute.xlu0 %923
    %v926 = vmul.f32 %v851, %v924
    %v927 = vmul.f32 %v854, %v924
    %v928 = vmul.f32 %v859, %v924
    %v929 = vmul.f32 %v862, %v924
    %v930 = vmul.f32 %v867, %v924
    %v931 = vmul.f32 %v870, %v924
    %v932 = vmul.f32 %v875, %v924
    %v933 = vmul.f32 %v878, %v924
    %v934 = vmul.f32 %v883, %v924
    %v935 = vmul.f32 %v886, %v924
    %v936 = vmul.f32 %v891, %v924
    %v937 = vmul.f32 %v894, %v924
    %v938 = vmul.f32 %v899, %v924
    %v939 = vsel %vm904, %v851, %v926
    %v940 = vsel %vm905, %v854, %v927
    %v941 = vsel %vm906, %v859, %v928
    %v942 = vsel %vm907, %v862, %v929
    %v943 = vsel %vm908, %v867, %v930
    %v944 = vsel %vm909, %v870, %v931
    %v945 = vsel %vm910, %v875, %v932
    %v946 = vsel %vm911, %v878, %v933
    %v947 = vsel %vm912, %v883, %v934
    %v948 = vsel %vm913, %v886, %v935
    %v949 = vsel %vm914, %v891, %v936
    %v950 = vsel %vm915, %v894, %v937
    %v951 = vsel %vm916, %v899, %v938
    %v952 = vpack.c.bf16 %v940, %v939
    %v953 = vpack.c.bf16 %v942, %v941
    %v954 = vpack.c.bf16 %v944, %v943
    %v955 = vpack.c.bf16 %v946, %v945
    %v956 = vpack.c.bf16 %v948, %v947
    %v957 = vpack.c.bf16 %v950, %v949
    %v958 = vpack.c.bf16 %v951, %v951
    %v959 = vld [vmem:[%s3] sm:$0xf]
    %v960 = vld [vmem:[%s3 + $0x4] sm:$0xf]
    %v961 = vld [vmem:[%s3 + $0x8] sm:$0xf]
    %v962 = vld [vmem:[%s3 + $0xc] sm:$0xf]
    %s963 = scalar_lea.vmem %s3, 16
    %v964 = vld [vmem:[%s963] sm:$0xf]
    %v965 = vld [vmem:[%s963 + $0x4] sm:$0xf]
    %v966 = vld [vmem:[%s963 + $0x8] sm:$0xf]
    %v967 = vld [vmem:[%s963 + $0xc] sm:$0xf]
    %v969 = vrot.slane %v952, 1
    %v974 = vunpack.c.l.b16 %v964
    %v975 = vunpack.c.l.b16 %v965
    %v976 = vunpack.c.l.b16 %v966
    %v977 = vunpack.c.l.b16 %v967
    %v978 = vpack.c.b16 %v975, %v974
    %v979 = vpack.c.b16 %v977, %v976
    %vm982 = vcmask 261120
    %v984 = vsel %vm982, %v969, 0
    %986 = vmatprep.subr.bf16.mxu0 0
    %987 = vmatpush1.bf16.msra.mxu0 %v978
    %988 = vmatprep.subr.bf16.mxu0 0
    %989 = vmatpush1.bf16.msra.mxu0 %v979
    %990 = vmatprep.subr.bf16.mxu0 0
    %991 = vmatpush1.bf16.msra.mxu0 0
    %992 = vmatprep.subr.bf16.mxu0 0
    %993 = vmatpush1.bf16.msra.mxu0 0
    %994 = vmatprep.subr.bf16.mxu0 0
    %995 = vmatpush1.bf16.msra.mxu0 0
    %996 = vmatprep.subr.bf16.mxu0 0
    %997 = vmatpush1.bf16.msra.mxu0 0
    %998 = vmatprep.subr.bf16.mxu0 0
    %999 = vmatpush1.bf16.msra.mxu0 0
    %1000 = vmatprep.subr.bf16.mxu0 0
    %1001 = vmatpush1.bf16.msra.mxu0 0
    %1002 = vmatprep.subr.bf16.mxu0 0
    %1003 = vmatpush1.bf16.msra.mxu0 0
    %1004 = vmatprep.subr.bf16.mxu0 0
    %1005 = vmatpush1.bf16.msra.mxu0 0
    %1006 = vmatprep.subr.bf16.mxu0 0
    %1007 = vmatpush1.bf16.msra.mxu0 0
    %1008 = vmatprep.subr.bf16.mxu0 0
    %1009 = vmatpush1.bf16.msra.mxu0 0
    %1010 = vmatprep.subr.bf16.mxu0 0
    %1011 = vmatpush1.bf16.msra.mxu0 0
    %1012 = vmatprep.subr.bf16.mxu0 0
    %1013 = vmatpush1.bf16.msra.mxu0 0
    %1014 = vmatprep.subr.bf16.mxu0 0
    %1015 = vmatpush1.bf16.msra.mxu0 0
    %1016 = vmatprep.subr.bf16.mxu0 0
    %1017 = vmatpush1.bf16.msra.mxu0 0
    %1018 = vmatprep.mubr.bf16.mxu0 0
    %1019 = vmatmul.mubr.bf16.gmra.mrb[0].mxu0 %v984
    %v1020 = vpop.f32.mrb[0].mxu0
    %v1021 = vadd.f32 0.0, %v1020
    %v1022 = vpop.f32.mrb[0].mxu0
    %v1023 = vpop.f32.mrb[0].mxu0
    %v1024 = vpop.f32.mrb[0].mxu0
    %1025 = vdwg.mxu0
    %v1030 = vunpack.c.l.b16 %v959
    %v1031 = vunpack.c.l.b16 %v960
    %v1032 = vunpack.c.l.b16 %v961
    %v1033 = vunpack.c.l.b16 %v962
    %v1034 = vpack.c.b16 %v1031, %v1030
    %v1035 = vpack.c.b16 %v1033, %v1032
    %v1039 = vsel %vm982, %v952, 0
    %1041 = vmatprep.subr.bf16.mxu0 0
    %1042 = vmatpush1.bf16.msra.mxu0 %v1034
    %1043 = vmatprep.subr.bf16.mxu0 0
    %1044 = vmatpush1.bf16.msra.mxu0 %v1035
    %1045 = vmatprep.subr.bf16.mxu0 0
    %1046 = vmatpush1.bf16.msra.mxu0 0
    %1047 = vmatprep.subr.bf16.mxu0 0
    %1048 = vmatpush1.bf16.msra.mxu0 0
    %1049 = vmatprep.subr.bf16.mxu0 0
    %1050 = vmatpush1.bf16.msra.mxu0 0
    %1051 = vmatprep.subr.bf16.mxu0 0
    %1052 = vmatpush1.bf16.msra.mxu0 0
    %1053 = vmatprep.subr.bf16.mxu0 0
    %1054 = vmatpush1.bf16.msra.mxu0 0
    %1055 = vmatprep.subr.bf16.mxu0 0
    %1056 = vmatpush1.bf16.msra.mxu0 0
    %1057 = vmatprep.subr.bf16.mxu0 0
    %1058 = vmatpush1.bf16.msra.mxu0 0
    %1059 = vmatprep.subr.bf16.mxu0 0
    %1060 = vmatpush1.bf16.msra.mxu0 0
    %1061 = vmatprep.subr.bf16.mxu0 0
    %1062 = vmatpush1.bf16.msra.mxu0 0
    %1063 = vmatprep.subr.bf16.mxu0 0
    %1064 = vmatpush1.bf16.msra.mxu0 0
    %1065 = vmatprep.subr.bf16.mxu0 0
    %1066 = vmatpush1.bf16.msra.mxu0 0
    %1067 = vmatprep.subr.bf16.mxu0 0
    %1068 = vmatpush1.bf16.msra.mxu0 0
    %1069 = vmatprep.subr.bf16.mxu0 0
    %1070 = vmatpush1.bf16.msra.mxu0 0
    %1071 = vmatprep.subr.bf16.mxu0 0
    %1072 = vmatpush1.bf16.msra.mxu0 0
    %1073 = vmatprep.mubr.bf16.mxu0 0
    %1074 = vmatmul.mubr.bf16.gmra.mrb[0].mxu0 %v1039
    %v1075 = vpop.f32.mrb[0].mxu0
    %v1076 = vadd.f32 %v1021, %v1075
    %v1077 = vpop.f32.mrb[0].mxu0
    %v1078 = vpop.f32.mrb[0].mxu0
    %v1079 = vpop.f32.mrb[0].mxu0
    %1080 = vdwg.mxu0
    %s1081 = scalar_lea.vmem %s3, 32
    %v1082 = vld [vmem:[%s1081] sm:$0xf]
    %v1083 = vld [vmem:[%s1081 + $0x4] sm:$0xf]
    %v1084 = vld [vmem:[%s1081 + $0x8] sm:$0xf]
    %v1085 = vld [vmem:[%s1081 + $0xc] sm:$0xf]
    %v1086 = vrot.slane %v952, 2
    %v1091 = vunpack.c.l.b16 %v1082
    %v1092 = vunpack.c.l.b16 %v1083
    %v1093 = vunpack.c.l.b16 %v1084
    %v1094 = vunpack.c.l.b16 %v1085
    %v1095 = vpack.c.b16 %v1092, %v1091
    %v1096 = vpack.c.b16 %v1094, %v1093
    %v1100 = vsel %vm982, %v1086, 0
    %1102 = vmatprep.subr.bf16.mxu0 0
    %1103 = vmatpush1.bf16.msra.mxu0 %v1095
    %1104 = vmatprep.subr.bf16.mxu0 0
    %1105 = vmatpush1.bf16.msra.mxu0 %v1096
    %1106 = vmatprep.subr.bf16.mxu0 0
    %1107 = vmatpush1.bf16.msra.mxu0 0
    %1108 = vmatprep.subr.bf16.mxu0 0
    %1109 = vmatpush1.bf16.msra.mxu0 0
    %1110 = vmatprep.subr.bf16.mxu0 0
    %1111 = vmatpush1.bf16.msra.mxu0 0
    %1112 = vmatprep.subr.bf16.mxu0 0
    %1113 = vmatpush1.bf16.msra.mxu0 0
    %1114 = vmatprep.subr.bf16.mxu0 0
    %1115 = vmatpush1.bf16.msra.mxu0 0
    %1116 = vmatprep.subr.bf16.mxu0 0
    %1117 = vmatpush1.bf16.msra.mxu0 0
    %1118 = vmatprep.subr.bf16.mxu0 0
    %1119 = vmatpush1.bf16.msra.mxu0 0
    %1120 = vmatprep.subr.bf16.mxu0 0
    %1121 = vmatpush1.bf16.msra.mxu0 0
    %1122 = vmatprep.subr.bf16.mxu0 0
    %1123 = vmatpush1.bf16.msra.mxu0 0
    %1124 = vmatprep.subr.bf16.mxu0 0
    %1125 = vmatpush1.bf16.msra.mxu0 0
    %1126 = vmatprep.subr.bf16.mxu0 0
    %1127 = vmatpush1.bf16.msra.mxu0 0
    %1128 = vmatprep.subr.bf16.mxu0 0
    %1129 = vmatpush1.bf16.msra.mxu0 0
    %1130 = vmatprep.subr.bf16.mxu0 0
    %1131 = vmatpush1.bf16.msra.mxu0 0
    %1132 = vmatprep.subr.bf16.mxu0 0
    %1133 = vmatpush1.bf16.msra.mxu0 0
    %1134 = vmatprep.mubr.bf16.mxu0 0
    %1135 = vmatmul.mubr.bf16.gmra.mrb[0].mxu0 %v1100
    %v1136 = vpop.f32.mrb[0].mxu0
    %v1137 = vadd.f32 0.0, %v1136
    %v1138 = vpop.f32.mrb[0].mxu0
    %v1139 = vpop.f32.mrb[0].mxu0
    %v1140 = vpop.f32.mrb[0].mxu0
    %1141 = vdwg.mxu0
    %v1142 = vadd.f32 %v1076, %v1137
    %s1143 = scalar_lea.vmem %s3, 48
    %v1144 = vld [vmem:[%s1143] sm:$0xf]
    %v1145 = vld [vmem:[%s1143 + $0x4] sm:$0xf]
    %v1146 = vld [vmem:[%s1143 + $0x8] sm:$0xf]
    %v1147 = vld [vmem:[%s1143 + $0xc] sm:$0xf]
    %v1148 = vrot.slane %v952, 3
    %v1153 = vunpack.c.l.b16 %v1144
    %v1154 = vunpack.c.l.b16 %v1145
    %v1155 = vunpack.c.l.b16 %v1146
    %v1156 = vunpack.c.l.b16 %v1147
    %v1157 = vpack.c.b16 %v1154, %v1153
    %v1158 = vpack.c.b16 %v1156, %v1155
    %v1162 = vsel %vm982, %v1148, 0
    %1164 = vmatprep.subr.bf16.mxu0 0
    %1165 = vmatpush1.bf16.msra.mxu0 %v1157
    %1166 = vmatprep.subr.bf16.mxu0 0
    %1167 = vmatpush1.bf16.msra.mxu0 %v1158
    %1168 = vmatprep.subr.bf16.mxu0 0
    %1169 = vmatpush1.bf16.msra.mxu0 0
    %1170 = vmatprep.subr.bf16.mxu0 0
    %1171 = vmatpush1.bf16.msra.mxu0 0
    %1172 = vmatprep.subr.bf16.mxu0 0
    %1173 = vmatpush1.bf16.msra.mxu0 0
    %1174 = vmatprep.subr.bf16.mxu0 0
    %1175 = vmatpush1.bf16.msra.mxu0 0
    %1176 = vmatprep.subr.bf16.mxu0 0
    %1177 = vmatpush1.bf16.msra.mxu0 0
    %1178 = vmatprep.subr.bf16.mxu0 0
    %1179 = vmatpush1.bf16.msra.mxu0 0
    %1180 = vmatprep.subr.bf16.mxu0 0
    %1181 = vmatpush1.bf16.msra.mxu0 0
    %1182 = vmatprep.subr.bf16.mxu0 0
    %1183 = vmatpush1.bf16.msra.mxu0 0
    %1184 = vmatprep.subr.bf16.mxu0 0
    %1185 = vmatpush1.bf16.msra.mxu0 0
    %1186 = vmatprep.subr.bf16.mxu0 0
    %1187 = vmatpush1.bf16.msra.mxu0 0
    %1188 = vmatprep.subr.bf16.mxu0 0
    %1189 = vmatpush1.bf16.msra.mxu0 0
    %1190 = vmatprep.subr.bf16.mxu0 0
    %1191 = vmatpush1.bf16.msra.mxu0 0
    %1192 = vmatprep.subr.bf16.mxu0 0
    %1193 = vmatpush1.bf16.msra.mxu0 0
    %1194 = vmatprep.subr.bf16.mxu0 0
    %1195 = vmatpush1.bf16.msra.mxu0 0
    %1196 = vmatprep.mubr.bf16.mxu0 0
    %1197 = vmatmul.mubr.bf16.gmra.mrb[0].mxu0 %v1162
    %v1198 = vpop.f32.mrb[0].mxu0
    %v1199 = vadd.f32 0.0, %v1198
    %v1200 = vpop.f32.mrb[0].mxu0
    %v1201 = vpop.f32.mrb[0].mxu0
    %v1202 = vpop.f32.mrb[0].mxu0
    %1203 = vdwg.mxu0
    %v1204 = vadd.f32 %v1142, %v1199
    %s1205 = scalar_lea.vmem %s3, 64
    %v1206 = vld [vmem:[%s1205] sm:$0xf]
    %v1207 = vld [vmem:[%s1205 + $0x4] sm:$0xf]
    %v1208 = vld [vmem:[%s1205 + $0x8] sm:$0xf]
    %v1209 = vld [vmem:[%s1205 + $0xc] sm:$0xf]
    %v1210 = vrot.slane %v952, 4
    %v1215 = vunpack.c.l.b16 %v1206
    %v1216 = vunpack.c.l.b16 %v1207
    %v1217 = vunpack.c.l.b16 %v1208
    %v1218 = vunpack.c.l.b16 %v1209
    %v1219 = vpack.c.b16 %v1216, %v1215
    %v1220 = vpack.c.b16 %v1218, %v1217
    %v1224 = vsel %vm982, %v1210, 0
    %1226 = vmatprep.subr.bf16.mxu0 0
    %1227 = vmatpush1.bf16.msra.mxu0 %v1219
    %1228 = vmatprep.subr.bf16.mxu0 0
    %1229 = vmatpush1.bf16.msra.mxu0 %v1220
    %1230 = vmatprep.subr.bf16.mxu0 0
    %1231 = vmatpush1.bf16.msra.mxu0 0
    %1232 = vmatprep.subr.bf16.mxu0 0
    %1233 = vmatpush1.bf16.msra.mxu0 0
    %1234 = vmatprep.subr.bf16.mxu0 0
    %1235 = vmatpush1.bf16.msra.mxu0 0
    %1236 = vmatprep.subr.bf16.mxu0 0
    %1237 = vmatpush1.bf16.msra.mxu0 0
    %1238 = vmatprep.subr.bf16.mxu0 0
    %1239 = vmatpush1.bf16.msra.mxu0 0
    %1240 = vmatprep.subr.bf16.mxu0 0
    %1241 = vmatpush1.bf16.msra.mxu0 0
    %1242 = vmatprep.subr.bf16.mxu0 0
    %1243 = vmatpush1.bf16.msra.mxu0 0
    %1244 = vmatprep.subr.bf16.mxu0 0
    %1245 = vmatpush1.bf16.msra.mxu0 0
    %1246 = vmatprep.subr.bf16.mxu0 0
    %1247 = vmatpush1.bf16.msra.mxu0 0
    %1248 = vmatprep.subr.bf16.mxu0 0
    %1249 = vmatpush1.bf16.msra.mxu0 0
    %1250 = vmatprep.subr.bf16.mxu0 0
    %1251 = vmatpush1.bf16.msra.mxu0 0
    %1252 = vmatprep.subr.bf16.mxu0 0
    %1253 = vmatpush1.bf16.msra.mxu0 0
    %1254 = vmatprep.subr.bf16.mxu0 0
    %1255 = vmatpush1.bf16.msra.mxu0 0
    %1256 = vmatprep.subr.bf16.mxu0 0
    %1257 = vmatpush1.bf16.msra.mxu0 0
    %1258 = vmatprep.mubr.bf16.mxu0 0
    %1259 = vmatmul.mubr.bf16.gmra.mrb[0].mxu0 %v1224
    %v1260 = vpop.f32.mrb[0].mxu0
    %v1261 = vadd.f32 0.0, %v1260
    %v1262 = vpop.f32.mrb[0].mxu0
    %v1263 = vpop.f32.mrb[0].mxu0
    %v1264 = vpop.f32.mrb[0].mxu0
    %1265 = vdwg.mxu0
    %v1266 = vadd.f32 %v1204, %v1261
    %s1267 = scalar_lea.vmem %s3, 80
    %v1268 = vld [vmem:[%s1267] sm:$0xf]
    %v1269 = vld [vmem:[%s1267 + $0x4] sm:$0xf]
    %v1270 = vld [vmem:[%s1267 + $0x8] sm:$0xf]
    %v1271 = vld [vmem:[%s1267 + $0xc] sm:$0xf]
    %v1272 = vrot.slane %v952, 5
    %v1277 = vunpack.c.l.b16 %v1268
    %v1278 = vunpack.c.l.b16 %v1269
    %v1279 = vunpack.c.l.b16 %v1270
    %v1280 = vunpack.c.l.b16 %v1271
    %v1281 = vpack.c.b16 %v1278, %v1277
    %v1282 = vpack.c.b16 %v1280, %v1279
    %v1286 = vsel %vm982, %v1272, 0
    %1288 = vmatprep.subr.bf16.mxu0 0
    %1289 = vmatpush1.bf16.msra.mxu0 %v1281
    %1290 = vmatprep.subr.bf16.mxu0 0
    %1291 = vmatpush1.bf16.msra.mxu0 %v1282
    %1292 = vmatprep.subr.bf16.mxu0 0
    %1293 = vmatpush1.bf16.msra.mxu0 0
    %1294 = vmatprep.subr.bf16.mxu0 0
    %1295 = vmatpush1.bf16.msra.mxu0 0
    %1296 = vmatprep.subr.bf16.mxu0 0
    %1297 = vmatpush1.bf16.msra.mxu0 0
    %1298 = vmatprep.subr.bf16.mxu0 0
    %1299 = vmatpush1.bf16.msra.mxu0 0
    %1300 = vmatprep.subr.bf16.mxu0 0
    %1301 = vmatpush1.bf16.msra.mxu0 0
    %1302 = vmatprep.subr.bf16.mxu0 0
    %1303 = vmatpush1.bf16.msra.mxu0 0
    %1304 = vmatprep.subr.bf16.mxu0 0
    %1305 = vmatpush1.bf16.msra.mxu0 0
    %1306 = vmatprep.subr.bf16.mxu0 0
    %1307 = vmatpush1.bf16.msra.mxu0 0
    %1308 = vmatprep.subr.bf16.mxu0 0
    %1309 = vmatpush1.bf16.msra.mxu0 0
    %1310 = vmatprep.subr.bf16.mxu0 0
    %1311 = vmatpush1.bf16.msra.mxu0 0
    %1312 = vmatprep.subr.bf16.mxu0 0
    %1313 = vmatpush1.bf16.msra.mxu0 0
    %1314 = vmatprep.subr.bf16.mxu0 0
    %1315 = vmatpush1.bf16.msra.mxu0 0
    %1316 = vmatprep.subr.bf16.mxu0 0
    %1317 = vmatpush1.bf16.msra.mxu0 0
    %1318 = vmatprep.subr.bf16.mxu0 0
    %1319 = vmatpush1.bf16.msra.mxu0 0
    %1320 = vmatprep.mubr.bf16.mxu0 0
    %1321 = vmatmul.mubr.bf16.gmra.mrb[0].mxu0 %v1286
    %v1322 = vpop.f32.mrb[0].mxu0
    %v1323 = vadd.f32 0.0, %v1322
    %v1324 = vpop.f32.mrb[0].mxu0
    %v1325 = vpop.f32.mrb[0].mxu0
    %v1326 = vpop.f32.mrb[0].mxu0
    %1327 = vdwg.mxu0
    %v1328 = vadd.f32 %v1266, %v1323
    %s1329 = scalar_lea.vmem %s3, 96
    %v1330 = vld [vmem:[%s1329] sm:$0xf]
    %v1331 = vld [vmem:[%s1329 + $0x4] sm:$0xf]
    %v1332 = vld [vmem:[%s1329 + $0x8] sm:$0xf]
    %v1333 = vld [vmem:[%s1329 + $0xc] sm:$0xf]
    %v1334 = vrot.slane %v952, 6
    %v1339 = vunpack.c.l.b16 %v1330
    %v1340 = vunpack.c.l.b16 %v1331
    %v1341 = vunpack.c.l.b16 %v1332
    %v1342 = vunpack.c.l.b16 %v1333
    %v1343 = vpack.c.b16 %v1340, %v1339
    %v1344 = vpack.c.b16 %v1342, %v1341
    %v1348 = vsel %vm982, %v1334, 0
    %1350 = vmatprep.subr.bf16.mxu0 0
    %1351 = vmatpush1.bf16.msra.mxu0 %v1343
    %1352 = vmatprep.subr.bf16.mxu0 0
    %1353 = vmatpush1.bf16.msra.mxu0 %v1344
    %1354 = vmatprep.subr.bf16.mxu0 0
    %1355 = vmatpush1.bf16.msra.mxu0 0
    %1356 = vmatprep.subr.bf16.mxu0 0
    %1357 = vmatpush1.bf16.msra.mxu0 0
    %1358 = vmatprep.subr.bf16.mxu0 0
    %1359 = vmatpush1.bf16.msra.mxu0 0
    %1360 = vmatprep.subr.bf16.mxu0 0
    %1361 = vmatpush1.bf16.msra.mxu0 0
    %1362 = vmatprep.subr.bf16.mxu0 0
    %1363 = vmatpush1.bf16.msra.mxu0 0
    %1364 = vmatprep.subr.bf16.mxu0 0
    %1365 = vmatpush1.bf16.msra.mxu0 0
    %1366 = vmatprep.subr.bf16.mxu0 0
    %1367 = vmatpush1.bf16.msra.mxu0 0
    %1368 = vmatprep.subr.bf16.mxu0 0
    %1369 = vmatpush1.bf16.msra.mxu0 0
    %1370 = vmatprep.subr.bf16.mxu0 0
    %1371 = vmatpush1.bf16.msra.mxu0 0
    %1372 = vmatprep.subr.bf16.mxu0 0
    %1373 = vmatpush1.bf16.msra.mxu0 0
    %1374 = vmatprep.subr.bf16.mxu0 0
    %1375 = vmatpush1.bf16.msra.mxu0 0
    %1376 = vmatprep.subr.bf16.mxu0 0
    %1377 = vmatpush1.bf16.msra.mxu0 0
    %1378 = vmatprep.subr.bf16.mxu0 0
    %1379 = vmatpush1.bf16.msra.mxu0 0
    %1380 = vmatprep.subr.bf16.mxu0 0
    %1381 = vmatpush1.bf16.msra.mxu0 0
    %1382 = vmatprep.mubr.bf16.mxu0 0
    %1383 = vmatmul.mubr.bf16.gmra.mrb[0].mxu0 %v1348
    %v1384 = vpop.f32.mrb[0].mxu0
    %v1385 = vadd.f32 0.0, %v1384
    %v1386 = vpop.f32.mrb[0].mxu0
    %v1387 = vpop.f32.mrb[0].mxu0
    %v1388 = vpop.f32.mrb[0].mxu0
    %1389 = vdwg.mxu0
    %v1390 = vadd.f32 %v1328, %v1385
    %s1391 = scalar_lea.vmem %s3, 112
    %v1392 = vld [vmem:[%s1391] sm:$0xf]
    %v1393 = vld [vmem:[%s1391 + $0x4] sm:$0xf]
    %v1394 = vld [vmem:[%s1391 + $0x8] sm:$0xf]
    %v1395 = vld [vmem:[%s1391 + $0xc] sm:$0xf]
    %v1396 = vrot.slane %v952, 7
    %v1401 = vunpack.c.l.b16 %v1392
    %v1402 = vunpack.c.l.b16 %v1393
    %v1403 = vunpack.c.l.b16 %v1394
    %v1404 = vunpack.c.l.b16 %v1395
    %v1405 = vpack.c.b16 %v1402, %v1401
    %v1406 = vpack.c.b16 %v1404, %v1403
    %v1410 = vsel %vm982, %v1396, 0
    %1412 = vmatprep.subr.bf16.mxu0 0
    %1413 = vmatpush1.bf16.msra.mxu0 %v1405
    %1414 = vmatprep.subr.bf16.mxu0 0
    %1415 = vmatpush1.bf16.msra.mxu0 %v1406
    %1416 = vmatprep.subr.bf16.mxu0 0
    %1417 = vmatpush1.bf16.msra.mxu0 0
    %1418 = vmatprep.subr.bf16.mxu0 0
    %1419 = vmatpush1.bf16.msra.mxu0 0
    %1420 = vmatprep.subr.bf16.mxu0 0
    %1421 = vmatpush1.bf16.msra.mxu0 0
    %1422 = vmatprep.subr.bf16.mxu0 0
    %1423 = vmatpush1.bf16.msra.mxu0 0
    %1424 = vmatprep.subr.bf16.mxu0 0
    %1425 = vmatpush1.bf16.msra.mxu0 0
    %1426 = vmatprep.subr.bf16.mxu0 0
    %1427 = vmatpush1.bf16.msra.mxu0 0
    %1428 = vmatprep.subr.bf16.mxu0 0
    %1429 = vmatpush1.bf16.msra.mxu0 0
    %1430 = vmatprep.subr.bf16.mxu0 0
    %1431 = vmatpush1.bf16.msra.mxu0 0
    %1432 = vmatprep.subr.bf16.mxu0 0
    %1433 = vmatpush1.bf16.msra.mxu0 0
    %1434 = vmatprep.subr.bf16.mxu0 0
    %1435 = vmatpush1.bf16.msra.mxu0 0
    %1436 = vmatprep.subr.bf16.mxu0 0
    %1437 = vmatpush1.bf16.msra.mxu0 0
    %1438 = vmatprep.subr.bf16.mxu0 0
    %1439 = vmatpush1.bf16.msra.mxu0 0
    %1440 = vmatprep.subr.bf16.mxu0 0
    %1441 = vmatpush1.bf16.msra.mxu0 0
    %1442 = vmatprep.subr.bf16.mxu0 0
    %1443 = vmatpush1.bf16.msra.mxu0 0
    %1444 = vmatprep.mubr.bf16.mxu0 0
    %1445 = vmatmul.mubr.bf16.gmra.mrb[0].mxu0 %v1410
    %v1446 = vpop.f32.mrb[0].mxu0
    %v1447 = vadd.f32 0.0, %v1446
    %v1448 = vpop.f32.mrb[0].mxu0
    %v1449 = vpop.f32.mrb[0].mxu0
    %v1450 = vpop.f32.mrb[0].mxu0
    %1451 = vdwg.mxu0
    %v1452 = vadd.f32 %v1390, %v1447
    %s1453 = scalar_lea.vmem %s3, 128
    %v1454 = vld [vmem:[%s1453] sm:$0xf]
    %v1455 = vld [vmem:[%s1453 + $0x4] sm:$0xf]
    %v1456 = vld [vmem:[%s1453 + $0x8] sm:$0xf]
    %v1457 = vld [vmem:[%s1453 + $0xc] sm:$0xf]
    %v1462 = vunpack.c.l.b16 %v1454
    %v1463 = vunpack.c.l.b16 %v1455
    %v1464 = vunpack.c.l.b16 %v1456
    %v1465 = vunpack.c.l.b16 %v1457
    %v1466 = vpack.c.b16 %v1463, %v1462
    %v1467 = vpack.c.b16 %v1465, %v1464
    %v1471 = vsel %vm982, %v953, 0
    %1473 = vmatprep.subr.bf16.mxu0 0
    %1474 = vmatpush1.bf16.msra.mxu0 %v1466
    %1475 = vmatprep.subr.bf16.mxu0 0
    %1476 = vmatpush1.bf16.msra.mxu0 %v1467
    %1477 = vmatprep.subr.bf16.mxu0 0
    %1478 = vmatpush1.bf16.msra.mxu0 0
    %1479 = vmatprep.subr.bf16.mxu0 0
    %1480 = vmatpush1.bf16.msra.mxu0 0
    %1481 = vmatprep.subr.bf16.mxu0 0
    %1482 = vmatpush1.bf16.msra.mxu0 0
    %1483 = vmatprep.subr.bf16.mxu0 0
    %1484 = vmatpush1.bf16.msra.mxu0 0
    %1485 = vmatprep.subr.bf16.mxu0 0
    %1486 = vmatpush1.bf16.msra.mxu0 0
    %1487 = vmatprep.subr.bf16.mxu0 0
    %1488 = vmatpush1.bf16.msra.mxu0 0
    %1489 = vmatprep.subr.bf16.mxu0 0
    %1490 = vmatpush1.bf16.msra.mxu0 0
    %1491 = vmatprep.subr.bf16.mxu0 0
    %1492 = vmatpush1.bf16.msra.mxu0 0
    %1493 = vmatprep.subr.bf16.mxu0 0
    %1494 = vmatpush1.bf16.msra.mxu0 0
    %1495 = vmatprep.subr.bf16.mxu0 0
    %1496 = vmatpush1.bf16.msra.mxu0 0
    %1497 = vmatprep.subr.bf16.mxu0 0
    %1498 = vmatpush1.bf16.msra.mxu0 0
    %1499 = vmatprep.subr.bf16.mxu0 0
    %1500 = vmatpush1.bf16.msra.mxu0 0
    %1501 = vmatprep.subr.bf16.mxu0 0
    %1502 = vmatpush1.bf16.msra.mxu0 0
    %1503 = vmatprep.subr.bf16.mxu0 0
    %1504 = vmatpush1.bf16.msra.mxu0 0
    %1505 = vmatprep.mubr.bf16.mxu0 0
    %1506 = vmatmul.mubr.bf16.gmra.mrb[0].mxu0 %v1471
    %v1507 = vpop.f32.mrb[0].mxu0
    %v1508 = vadd.f32 0.0, %v1507
    %v1509 = vpop.f32.mrb[0].mxu0
    %v1510 = vpop.f32.mrb[0].mxu0
    %v1511 = vpop.f32.mrb[0].mxu0
    %1512 = vdwg.mxu0
    %v1513 = vadd.f32 %v1452, %v1508
    %s1514 = scalar_lea.vmem %s3, 144
    %v1515 = vld [vmem:[%s1514] sm:$0xf]
    %v1516 = vld [vmem:[%s1514 + $0x4] sm:$0xf]
    %v1517 = vld [vmem:[%s1514 + $0x8] sm:$0xf]
    %v1518 = vld [vmem:[%s1514 + $0xc] sm:$0xf]
    %v1520 = vrot.slane %v953, 1
    %v1525 = vunpack.c.l.b16 %v1515
    %v1526 = vunpack.c.l.b16 %v1516
    %v1527 = vunpack.c.l.b16 %v1517
    %v1528 = vunpack.c.l.b16 %v1518
    %v1529 = vpack.c.b16 %v1526, %v1525
    %v1530 = vpack.c.b16 %v1528, %v1527
    %v1534 = vsel %vm982, %v1520, 0
    %1536 = vmatprep.subr.bf16.mxu0 0
    %1537 = vmatpush1.bf16.msra.mxu0 %v1529
    %1538 = vmatprep.subr.bf16.mxu0 0
    %1539 = vmatpush1.bf16.msra.mxu0 %v1530
    %1540 = vmatprep.subr.bf16.mxu0 0
    %1541 = vmatpush1.bf16.msra.mxu0 0
    %1542 = vmatprep.subr.bf16.mxu0 0
    %1543 = vmatpush1.bf16.msra.mxu0 0
    %1544 = vmatprep.subr.bf16.mxu0 0
    %1545 = vmatpush1.bf16.msra.mxu0 0
    %1546 = vmatprep.subr.bf16.mxu0 0
    %1547 = vmatpush1.bf16.msra.mxu0 0
    %1548 = vmatprep.subr.bf16.mxu0 0
    %1549 = vmatpush1.bf16.msra.mxu0 0
    %1550 = vmatprep.subr.bf16.mxu0 0
    %1551 = vmatpush1.bf16.msra.mxu0 0
    %1552 = vmatprep.subr.bf16.mxu0 0
    %1553 = vmatpush1.bf16.msra.mxu0 0
    %1554 = vmatprep.subr.bf16.mxu0 0
    %1555 = vmatpush1.bf16.msra.mxu0 0
    %1556 = vmatprep.subr.bf16.mxu0 0
    %1557 = vmatpush1.bf16.msra.mxu0 0
    %1558 = vmatprep.subr.bf16.mxu0 0
    %1559 = vmatpush1.bf16.msra.mxu0 0
    %1560 = vmatprep.subr.bf16.mxu0 0
    %1561 = vmatpush1.bf16.msra.mxu0 0
    %1562 = vmatprep.subr.bf16.mxu0 0
    %1563 = vmatpush1.bf16.msra.mxu0 0
    %1564 = vmatprep.subr.bf16.mxu0 0
    %1565 = vmatpush1.bf16.msra.mxu0 0
    %1566 = vmatprep.subr.bf16.mxu0 0
    %1567 = vmatpush1.bf16.msra.mxu0 0
    %1568 = vmatprep.mubr.bf16.mxu0 0
    %1569 = vmatmul.mubr.bf16.gmra.mrb[0].mxu0 %v1534
    %v1570 = vpop.f32.mrb[0].mxu0
    %v1571 = vadd.f32 0.0, %v1570
    %v1572 = vpop.f32.mrb[0].mxu0
    %v1573 = vpop.f32.mrb[0].mxu0
    %v1574 = vpop.f32.mrb[0].mxu0
    %1575 = vdwg.mxu0
    %v1576 = vadd.f32 %v1513, %v1571
    %s1577 = scalar_lea.vmem %s3, 160
    %v1578 = vld [vmem:[%s1577] sm:$0xf]
    %v1579 = vld [vmem:[%s1577 + $0x4] sm:$0xf]
    %v1580 = vld [vmem:[%s1577 + $0x8] sm:$0xf]
    %v1581 = vld [vmem:[%s1577 + $0xc] sm:$0xf]
    %v1582 = vrot.slane %v953, 2
    %v1587 = vunpack.c.l.b16 %v1578
    %v1588 = vunpack.c.l.b16 %v1579
    %v1589 = vunpack.c.l.b16 %v1580
    %v1590 = vunpack.c.l.b16 %v1581
    %v1591 = vpack.c.b16 %v1588, %v1587
    %v1592 = vpack.c.b16 %v1590, %v1589
    %v1596 = vsel %vm982, %v1582, 0
    %1598 = vmatprep.subr.bf16.mxu0 0
    %1599 = vmatpush1.bf16.msra.mxu0 %v1591
    %1600 = vmatprep.subr.bf16.mxu0 0
    %1601 = vmatpush1.bf16.msra.mxu0 %v1592
    %1602 = vmatprep.subr.bf16.mxu0 0
    %1603 = vmatpush1.bf16.msra.mxu0 0
    %1604 = vmatprep.subr.bf16.mxu0 0
    %1605 = vmatpush1.bf16.msra.mxu0 0
    %1606 = vmatprep.subr.bf16.mxu0 0
    %1607 = vmatpush1.bf16.msra.mxu0 0
    %1608 = vmatprep.subr.bf16.mxu0 0
    %1609 = vmatpush1.bf16.msra.mxu0 0
    %1610 = vmatprep.subr.bf16.mxu0 0
    %1611 = vmatpush1.bf16.msra.mxu0 0
    %1612 = vmatprep.subr.bf16.mxu0 0
    %1613 = vmatpush1.bf16.msra.mxu0 0
    %1614 = vmatprep.subr.bf16.mxu0 0
    %1615 = vmatpush1.bf16.msra.mxu0 0
    %1616 = vmatprep.subr.bf16.mxu0 0
    %1617 = vmatpush1.bf16.msra.mxu0 0
    %1618 = vmatprep.subr.bf16.mxu0 0
    %1619 = vmatpush1.bf16.msra.mxu0 0
    %1620 = vmatprep.subr.bf16.mxu0 0
    %1621 = vmatpush1.bf16.msra.mxu0 0
    %1622 = vmatprep.subr.bf16.mxu0 0
    %1623 = vmatpush1.bf16.msra.mxu0 0
    %1624 = vmatprep.subr.bf16.mxu0 0
    %1625 = vmatpush1.bf16.msra.mxu0 0
    %1626 = vmatprep.subr.bf16.mxu0 0
    %1627 = vmatpush1.bf16.msra.mxu0 0
    %1628 = vmatprep.subr.bf16.mxu0 0
    %1629 = vmatpush1.bf16.msra.mxu0 0
    %1630 = vmatprep.mubr.bf16.mxu0 0
    %1631 = vmatmul.mubr.bf16.gmra.mrb[0].mxu0 %v1596
    %v1632 = vpop.f32.mrb[0].mxu0
    %v1633 = vadd.f32 0.0, %v1632
    %v1634 = vpop.f32.mrb[0].mxu0
    %v1635 = vpop.f32.mrb[0].mxu0
    %v1636 = vpop.f32.mrb[0].mxu0
    %1637 = vdwg.mxu0
    %v1638 = vadd.f32 %v1576, %v1633
    %s1639 = scalar_lea.vmem %s3, 176
    %v1640 = vld [vmem:[%s1639] sm:$0xf]
    %v1641 = vld [vmem:[%s1639 + $0x4] sm:$0xf]
    %v1642 = vld [vmem:[%s1639 + $0x8] sm:$0xf]
    %v1643 = vld [vmem:[%s1639 + $0xc] sm:$0xf]
    %v1644 = vrot.slane %v953, 3
    %v1649 = vunpack.c.l.b16 %v1640
    %v1650 = vunpack.c.l.b16 %v1641
    %v1651 = vunpack.c.l.b16 %v1642
    %v1652 = vunpack.c.l.b16 %v1643
    %v1653 = vpack.c.b16 %v1650, %v1649
    %v1654 = vpack.c.b16 %v1652, %v1651
    %v1658 = vsel %vm982, %v1644, 0
    %1660 = vmatprep.subr.bf16.mxu0 0
    %1661 = vmatpush1.bf16.msra.mxu0 %v1653
    %1662 = vmatprep.subr.bf16.mxu0 0
    %1663 = vmatpush1.bf16.msra.mxu0 %v1654
    %1664 = vmatprep.subr.bf16.mxu0 0
    %1665 = vmatpush1.bf16.msra.mxu0 0
    %1666 = vmatprep.subr.bf16.mxu0 0
    %1667 = vmatpush1.bf16.msra.mxu0 0
    %1668 = vmatprep.subr.bf16.mxu0 0
    %1669 = vmatpush1.bf16.msra.mxu0 0
    %1670 = vmatprep.subr.bf16.mxu0 0
    %1671 = vmatpush1.bf16.msra.mxu0 0
    %1672 = vmatprep.subr.bf16.mxu0 0
    %1673 = vmatpush1.bf16.msra.mxu0 0
    %1674 = vmatprep.subr.bf16.mxu0 0
    %1675 = vmatpush1.bf16.msra.mxu0 0
    %1676 = vmatprep.subr.bf16.mxu0 0
    %1677 = vmatpush1.bf16.msra.mxu0 0
    %1678 = vmatprep.subr.bf16.mxu0 0
    %1679 = vmatpush1.bf16.msra.mxu0 0
    %1680 = vmatprep.subr.bf16.mxu0 0
    %1681 = vmatpush1.bf16.msra.mxu0 0
    %1682 = vmatprep.subr.bf16.mxu0 0
    %1683 = vmatpush1.bf16.msra.mxu0 0
    %1684 = vmatprep.subr.bf16.mxu0 0
    %1685 = vmatpush1.bf16.msra.mxu0 0
    %1686 = vmatprep.subr.bf16.mxu0 0
    %1687 = vmatpush1.bf16.msra.mxu0 0
    %1688 = vmatprep.subr.bf16.mxu0 0
    %1689 = vmatpush1.bf16.msra.mxu0 0
    %1690 = vmatprep.subr.bf16.mxu0 0
    %1691 = vmatpush1.bf16.msra.mxu0 0
    %1692 = vmatprep.mubr.bf16.mxu0 0
    %1693 = vmatmul.mubr.bf16.gmra.mrb[0].mxu0 %v1658
    %v1694 = vpop.f32.mrb[0].mxu0
    %v1695 = vadd.f32 0.0, %v1694
    %v1696 = vpop.f32.mrb[0].mxu0
    %v1697 = vpop.f32.mrb[0].mxu0
    %v1698 = vpop.f32.mrb[0].mxu0
    %1699 = vdwg.mxu0
    %v1700 = vadd.f32 %v1638, %v1695
    %s1701 = scalar_lea.vmem %s3, 192
    %v1702 = vld [vmem:[%s1701] sm:$0xf]
    %v1703 = vld [vmem:[%s1701 + $0x4] sm:$0xf]
    %v1704 = vld [vmem:[%s1701 + $0x8] sm:$0xf]
    %v1705 = vld [vmem:[%s1701 + $0xc] sm:$0xf]
    %v1706 = vrot.slane %v953, 4
    %v1711 = vunpack.c.l.b16 %v1702
    %v1712 = vunpack.c.l.b16 %v1703
    %v1713 = vunpack.c.l.b16 %v1704
    %v1714 = vunpack.c.l.b16 %v1705
    %v1715 = vpack.c.b16 %v1712, %v1711
    %v1716 = vpack.c.b16 %v1714, %v1713
    %v1720 = vsel %vm982, %v1706, 0
    %1722 = vmatprep.subr.bf16.mxu0 0
    %1723 = vmatpush1.bf16.msra.mxu0 %v1715
    %1724 = vmatprep.subr.bf16.mxu0 0
    %1725 = vmatpush1.bf16.msra.mxu0 %v1716
    %1726 = vmatprep.subr.bf16.mxu0 0
    %1727 = vmatpush1.bf16.msra.mxu0 0
    %1728 = vmatprep.subr.bf16.mxu0 0
    %1729 = vmatpush1.bf16.msra.mxu0 0
    %1730 = vmatprep.subr.bf16.mxu0 0
    %1731 = vmatpush1.bf16.msra.mxu0 0
    %1732 = vmatprep.subr.bf16.mxu0 0
    %1733 = vmatpush1.bf16.msra.mxu0 0
    %1734 = vmatprep.subr.bf16.mxu0 0
    %1735 = vmatpush1.bf16.msra.mxu0 0
    %1736 = vmatprep.subr.bf16.mxu0 0
    %1737 = vmatpush1.bf16.msra.mxu0 0
    %1738 = vmatprep.subr.bf16.mxu0 0
    %1739 = vmatpush1.bf16.msra.mxu0 0
    %1740 = vmatprep.subr.bf16.mxu0 0
    %1741 = vmatpush1.bf16.msra.mxu0 0
    %1742 = vmatprep.subr.bf16.mxu0 0
    %1743 = vmatpush1.bf16.msra.mxu0 0
    %1744 = vmatprep.subr.bf16.mxu0 0
    %1745 = vmatpush1.bf16.msra.mxu0 0
    %1746 = vmatprep.subr.bf16.mxu0 0
    %1747 = vmatpush1.bf16.msra.mxu0 0
    %1748 = vmatprep.subr.bf16.mxu0 0
    %1749 = vmatpush1.bf16.msra.mxu0 0
    %1750 = vmatprep.subr.bf16.mxu0 0
    %1751 = vmatpush1.bf16.msra.mxu0 0
    %1752 = vmatprep.subr.bf16.mxu0 0
    %1753 = vmatpush1.bf16.msra.mxu0 0
    %1754 = vmatprep.mubr.bf16.mxu0 0
    %1755 = vmatmul.mubr.bf16.gmra.mrb[0].mxu0 %v1720
    %v1756 = vpop.f32.mrb[0].mxu0
    %v1757 = vadd.f32 0.0, %v1756
    %v1758 = vpop.f32.mrb[0].mxu0
    %v1759 = vpop.f32.mrb[0].mxu0
    %v1760 = vpop.f32.mrb[0].mxu0
    %1761 = vdwg.mxu0
    %v1762 = vadd.f32 %v1700, %v1757
    %s1763 = scalar_lea.vmem %s3, 208
    %v1764 = vld [vmem:[%s1763] sm:$0xf]
    %v1765 = vld [vmem:[%s1763 + $0x4] sm:$0xf]
    %v1766 = vld [vmem:[%s1763 + $0x8] sm:$0xf]
    %v1767 = vld [vmem:[%s1763 + $0xc] sm:$0xf]
    %v1768 = vrot.slane %v953, 5
    %v1773 = vunpack.c.l.b16 %v1764
    %v1774 = vunpack.c.l.b16 %v1765
    %v1775 = vunpack.c.l.b16 %v1766
    %v1776 = vunpack.c.l.b16 %v1767
    %v1777 = vpack.c.b16 %v1774, %v1773
    %v1778 = vpack.c.b16 %v1776, %v1775
    %v1782 = vsel %vm982, %v1768, 0
    %1784 = vmatprep.subr.bf16.mxu0 0
    %1785 = vmatpush1.bf16.msra.mxu0 %v1777
    %1786 = vmatprep.subr.bf16.mxu0 0
    %1787 = vmatpush1.bf16.msra.mxu0 %v1778
    %1788 = vmatprep.subr.bf16.mxu0 0
    %1789 = vmatpush1.bf16.msra.mxu0 0
    %1790 = vmatprep.subr.bf16.mxu0 0
    %1791 = vmatpush1.bf16.msra.mxu0 0
    %1792 = vmatprep.subr.bf16.mxu0 0
    %1793 = vmatpush1.bf16.msra.mxu0 0
    %1794 = vmatprep.subr.bf16.mxu0 0
    %1795 = vmatpush1.bf16.msra.mxu0 0
    %1796 = vmatprep.subr.bf16.mxu0 0
    %1797 = vmatpush1.bf16.msra.mxu0 0
    %1798 = vmatprep.subr.bf16.mxu0 0
    %1799 = vmatpush1.bf16.msra.mxu0 0
    %1800 = vmatprep.subr.bf16.mxu0 0
    %1801 = vmatpush1.bf16.msra.mxu0 0
    %1802 = vmatprep.subr.bf16.mxu0 0
    %1803 = vmatpush1.bf16.msra.mxu0 0
    %1804 = vmatprep.subr.bf16.mxu0 0
    %1805 = vmatpush1.bf16.msra.mxu0 0
    %1806 = vmatprep.subr.bf16.mxu0 0
    %1807 = vmatpush1.bf16.msra.mxu0 0
    %1808 = vmatprep.subr.bf16.mxu0 0
    %1809 = vmatpush1.bf16.msra.mxu0 0
    %1810 = vmatprep.subr.bf16.mxu0 0
    %1811 = vmatpush1.bf16.msra.mxu0 0
    %1812 = vmatprep.subr.bf16.mxu0 0
    %1813 = vmatpush1.bf16.msra.mxu0 0
    %1814 = vmatprep.subr.bf16.mxu0 0
    %1815 = vmatpush1.bf16.msra.mxu0 0
    %1816 = vmatprep.mubr.bf16.mxu0 0
    %1817 = vmatmul.mubr.bf16.gmra.mrb[0].mxu0 %v1782
    %v1818 = vpop.f32.mrb[0].mxu0
    %v1819 = vadd.f32 0.0, %v1818
    %v1820 = vpop.f32.mrb[0].mxu0
    %v1821 = vpop.f32.mrb[0].mxu0
    %v1822 = vpop.f32.mrb[0].mxu0
    %1823 = vdwg.mxu0
    %v1824 = vadd.f32 %v1762, %v1819
    %s1825 = scalar_lea.vmem %s3, 224
    %v1826 = vld [vmem:[%s1825] sm:$0xf]
    %v1827 = vld [vmem:[%s1825 + $0x4] sm:$0xf]
    %v1828 = vld [vmem:[%s1825 + $0x8] sm:$0xf]
    %v1829 = vld [vmem:[%s1825 + $0xc] sm:$0xf]
    %v1830 = vrot.slane %v953, 6
    %v1835 = vunpack.c.l.b16 %v1826
    %v1836 = vunpack.c.l.b16 %v1827
    %v1837 = vunpack.c.l.b16 %v1828
    %v1838 = vunpack.c.l.b16 %v1829
    %v1839 = vpack.c.b16 %v1836, %v1835
    %v1840 = vpack.c.b16 %v1838, %v1837
    %v1844 = vsel %vm982, %v1830, 0
    %1846 = vmatprep.subr.bf16.mxu0 0
    %1847 = vmatpush1.bf16.msra.mxu0 %v1839
    %1848 = vmatprep.subr.bf16.mxu0 0
    %1849 = vmatpush1.bf16.msra.mxu0 %v1840
    %1850 = vmatprep.subr.bf16.mxu0 0
    %1851 = vmatpush1.bf16.msra.mxu0 0
    %1852 = vmatprep.subr.bf16.mxu0 0
    %1853 = vmatpush1.bf16.msra.mxu0 0
    %1854 = vmatprep.subr.bf16.mxu0 0
    %1855 = vmatpush1.bf16.msra.mxu0 0
    %1856 = vmatprep.subr.bf16.mxu0 0
    %1857 = vmatpush1.bf16.msra.mxu0 0
    %1858 = vmatprep.subr.bf16.mxu0 0
    %1859 = vmatpush1.bf16.msra.mxu0 0
    %1860 = vmatprep.subr.bf16.mxu0 0
    %1861 = vmatpush1.bf16.msra.mxu0 0
    %1862 = vmatprep.subr.bf16.mxu0 0
    %1863 = vmatpush1.bf16.msra.mxu0 0
    %1864 = vmatprep.subr.bf16.mxu0 0
    %1865 = vmatpush1.bf16.msra.mxu0 0
    %1866 = vmatprep.subr.bf16.mxu0 0
    %1867 = vmatpush1.bf16.msra.mxu0 0
    %1868 = vmatprep.subr.bf16.mxu0 0
    %1869 = vmatpush1.bf16.msra.mxu0 0
    %1870 = vmatprep.subr.bf16.mxu0 0
    %1871 = vmatpush1.bf16.msra.mxu0 0
    %1872 = vmatprep.subr.bf16.mxu0 0
    %1873 = vmatpush1.bf16.msra.mxu0 0
    %1874 = vmatprep.subr.bf16.mxu0 0
    %1875 = vmatpush1.bf16.msra.mxu0 0
    %1876 = vmatprep.subr.bf16.mxu0 0
    %1877 = vmatpush1.bf16.msra.mxu0 0
    %1878 = vmatprep.mubr.bf16.mxu0 0
    %1879 = vmatmul.mubr.bf16.gmra.mrb[0].mxu0 %v1844
    %v1880 = vpop.f32.mrb[0].mxu0
    %v1881 = vadd.f32 0.0, %v1880
    %v1882 = vpop.f32.mrb[0].mxu0
    %v1883 = vpop.f32.mrb[0].mxu0
    %v1884 = vpop.f32.mrb[0].mxu0
    %1885 = vdwg.mxu0
    %v1886 = vadd.f32 %v1824, %v1881
    %s1887 = scalar_lea.vmem %s3, 240
    %v1888 = vld [vmem:[%s1887] sm:$0xf]
    %v1889 = vld [vmem:[%s1887 + $0x4] sm:$0xf]
    %v1890 = vld [vmem:[%s1887 + $0x8] sm:$0xf]
    %v1891 = vld [vmem:[%s1887 + $0xc] sm:$0xf]
    %v1892 = vrot.slane %v953, 7
    %v1897 = vunpack.c.l.b16 %v1888
    %v1898 = vunpack.c.l.b16 %v1889
    %v1899 = vunpack.c.l.b16 %v1890
    %v1900 = vunpack.c.l.b16 %v1891
    %v1901 = vpack.c.b16 %v1898, %v1897
    %v1902 = vpack.c.b16 %v1900, %v1899
    %v1906 = vsel %vm982, %v1892, 0
    %1908 = vmatprep.subr.bf16.mxu0 0
    %1909 = vmatpush1.bf16.msra.mxu0 %v1901
    %1910 = vmatprep.subr.bf16.mxu0 0
    %1911 = vmatpush1.bf16.msra.mxu0 %v1902
    %1912 = vmatprep.subr.bf16.mxu0 0
    %1913 = vmatpush1.bf16.msra.mxu0 0
    %1914 = vmatprep.subr.bf16.mxu0 0
    %1915 = vmatpush1.bf16.msra.mxu0 0
    %1916 = vmatprep.subr.bf16.mxu0 0
    %1917 = vmatpush1.bf16.msra.mxu0 0
    %1918 = vmatprep.subr.bf16.mxu0 0
    %1919 = vmatpush1.bf16.msra.mxu0 0
    %1920 = vmatprep.subr.bf16.mxu0 0
    %1921 = vmatpush1.bf16.msra.mxu0 0
    %1922 = vmatprep.subr.bf16.mxu0 0
    %1923 = vmatpush1.bf16.msra.mxu0 0
    %1924 = vmatprep.subr.bf16.mxu0 0
    %1925 = vmatpush1.bf16.msra.mxu0 0
    %1926 = vmatprep.subr.bf16.mxu0 0
    %1927 = vmatpush1.bf16.msra.mxu0 0
    %1928 = vmatprep.subr.bf16.mxu0 0
    %1929 = vmatpush1.bf16.msra.mxu0 0
    %1930 = vmatprep.subr.bf16.mxu0 0
    %1931 = vmatpush1.bf16.msra.mxu0 0
    %1932 = vmatprep.subr.bf16.mxu0 0
    %1933 = vmatpush1.bf16.msra.mxu0 0
    %1934 = vmatprep.subr.bf16.mxu0 0
    %1935 = vmatpush1.bf16.msra.mxu0 0
    %1936 = vmatprep.subr.bf16.mxu0 0
    %1937 = vmatpush1.bf16.msra.mxu0 0
    %1938 = vmatprep.subr.bf16.mxu0 0
    %1939 = vmatpush1.bf16.msra.mxu0 0
    %1940 = vmatprep.mubr.bf16.mxu0 0
    %1941 = vmatmul.mubr.bf16.gmra.mrb[0].mxu0 %v1906
    %v1942 = vpop.f32.mrb[0].mxu0
    %v1943 = vadd.f32 0.0, %v1942
    %v1944 = vpop.f32.mrb[0].mxu0
    %v1945 = vpop.f32.mrb[0].mxu0
    %v1946 = vpop.f32.mrb[0].mxu0
    %1947 = vdwg.mxu0
    %v1948 = vadd.f32 %v1886, %v1943
    %s1949 = scalar_lea.vmem %s3, 256
    %v1950 = vld [vmem:[%s1949] sm:$0xf]
    %v1951 = vld [vmem:[%s1949 + $0x4] sm:$0xf]
    %v1952 = vld [vmem:[%s1949 + $0x8] sm:$0xf]
    %v1953 = vld [vmem:[%s1949 + $0xc] sm:$0xf]
    %v1958 = vunpack.c.l.b16 %v1950
    %v1959 = vunpack.c.l.b16 %v1951
    %v1960 = vunpack.c.l.b16 %v1952
    %v1961 = vunpack.c.l.b16 %v1953
    %v1962 = vpack.c.b16 %v1959, %v1958
    %v1963 = vpack.c.b16 %v1961, %v1960
    %v1967 = vsel %vm982, %v954, 0
    %1969 = vmatprep.subr.bf16.mxu0 0
    %1970 = vmatpush1.bf16.msra.mxu0 %v1962
    %1971 = vmatprep.subr.bf16.mxu0 0
    %1972 = vmatpush1.bf16.msra.mxu0 %v1963
    %1973 = vmatprep.subr.bf16.mxu0 0
    %1974 = vmatpush1.bf16.msra.mxu0 0
    %1975 = vmatprep.subr.bf16.mxu0 0
    %1976 = vmatpush1.bf16.msra.mxu0 0
    %1977 = vmatprep.subr.bf16.mxu0 0
    %1978 = vmatpush1.bf16.msra.mxu0 0
    %1979 = vmatprep.subr.bf16.mxu0 0
    %1980 = vmatpush1.bf16.msra.mxu0 0
    %1981 = vmatprep.subr.bf16.mxu0 0
    %1982 = vmatpush1.bf16.msra.mxu0 0
    %1983 = vmatprep.subr.bf16.mxu0 0
    %1984 = vmatpush1.bf16.msra.mxu0 0
    %1985 = vmatprep.subr.bf16.mxu0 0
    %1986 = vmatpush1.bf16.msra.mxu0 0
    %1987 = vmatprep.subr.bf16.mxu0 0
    %1988 = vmatpush1.bf16.msra.mxu0 0
    %1989 = vmatprep.subr.bf16.mxu0 0
    %1990 = vmatpush1.bf16.msra.mxu0 0
    %1991 = vmatprep.subr.bf16.mxu0 0
    %1992 = vmatpush1.bf16.msra.mxu0 0
    %1993 = vmatprep.subr.bf16.mxu0 0
    %1994 = vmatpush1.bf16.msra.mxu0 0
    %1995 = vmatprep.subr.bf16.mxu0 0
    %1996 = vmatpush1.bf16.msra.mxu0 0
    %1997 = vmatprep.subr.bf16.mxu0 0
    %1998 = vmatpush1.bf16.msra.mxu0 0
    %1999 = vmatprep.subr.bf16.mxu0 0
    %2000 = vmatpush1.bf16.msra.mxu0 0
    %2001 = vmatprep.mubr.bf16.mxu0 0
    %2002 = vmatmul.mubr.bf16.gmra.mrb[0].mxu0 %v1967
    %v2003 = vpop.f32.mrb[0].mxu0
    %v2004 = vadd.f32 0.0, %v2003
    %v2005 = vpop.f32.mrb[0].mxu0
    %v2006 = vpop.f32.mrb[0].mxu0
    %v2007 = vpop.f32.mrb[0].mxu0
    %2008 = vdwg.mxu0
    %v2009 = vadd.f32 %v1948, %v2004
    %s2010 = scalar_lea.vmem %s3, 272
    %v2011 = vld [vmem:[%s2010] sm:$0xf]
    %v2012 = vld [vmem:[%s2010 + $0x4] sm:$0xf]
    %v2013 = vld [vmem:[%s2010 + $0x8] sm:$0xf]
    %v2014 = vld [vmem:[%s2010 + $0xc] sm:$0xf]
    %v2016 = vrot.slane %v954, 1
    %v2021 = vunpack.c.l.b16 %v2011
    %v2022 = vunpack.c.l.b16 %v2012
    %v2023 = vunpack.c.l.b16 %v2013
    %v2024 = vunpack.c.l.b16 %v2014
    %v2025 = vpack.c.b16 %v2022, %v2021
    %v2026 = vpack.c.b16 %v2024, %v2023
    %v2030 = vsel %vm982, %v2016, 0
    %2032 = vmatprep.subr.bf16.mxu0 0
    %2033 = vmatpush1.bf16.msra.mxu0 %v2025
    %2034 = vmatprep.subr.bf16.mxu0 0
    %2035 = vmatpush1.bf16.msra.mxu0 %v2026
    %2036 = vmatprep.subr.bf16.mxu0 0
    %2037 = vmatpush1.bf16.msra.mxu0 0
    %2038 = vmatprep.subr.bf16.mxu0 0
    %2039 = vmatpush1.bf16.msra.mxu0 0
    %2040 = vmatprep.subr.bf16.mxu0 0
    %2041 = vmatpush1.bf16.msra.mxu0 0
    %2042 = vmatprep.subr.bf16.mxu0 0
    %2043 = vmatpush1.bf16.msra.mxu0 0
    %2044 = vmatprep.subr.bf16.mxu0 0
    %2045 = vmatpush1.bf16.msra.mxu0 0
    %2046 = vmatprep.subr.bf16.mxu0 0
    %2047 = vmatpush1.bf16.msra.mxu0 0
    %2048 = vmatprep.subr.bf16.mxu0 0
    %2049 = vmatpush1.bf16.msra.mxu0 0
    %2050 = vmatprep.subr.bf16.mxu0 0
    %2051 = vmatpush1.bf16.msra.mxu0 0
    %2052 = vmatprep.subr.bf16.mxu0 0
    %2053 = vmatpush1.bf16.msra.mxu0 0
    %2054 = vmatprep.subr.bf16.mxu0 0
    %2055 = vmatpush1.bf16.msra.mxu0 0
    %2056 = vmatprep.subr.bf16.mxu0 0
    %2057 = vmatpush1.bf16.msra.mxu0 0
    %2058 = vmatprep.subr.bf16.mxu0 0
    %2059 = vmatpush1.bf16.msra.mxu0 0
    %2060 = vmatprep.subr.bf16.mxu0 0
    %2061 = vmatpush1.bf16.msra.mxu0 0
    %2062 = vmatprep.subr.bf16.mxu0 0
    %2063 = vmatpush1.bf16.msra.mxu0 0
    %2064 = vmatprep.mubr.bf16.mxu0 0
    %2065 = vmatmul.mubr.bf16.gmra.mrb[0].mxu0 %v2030
    %v2066 = vpop.f32.mrb[0].mxu0
    %v2067 = vadd.f32 0.0, %v2066
    %v2068 = vpop.f32.mrb[0].mxu0
    %v2069 = vpop.f32.mrb[0].mxu0
    %v2070 = vpop.f32.mrb[0].mxu0
    %2071 = vdwg.mxu0
    %v2072 = vadd.f32 %v2009, %v2067
    %s2073 = scalar_lea.vmem %s3, 288
    %v2074 = vld [vmem:[%s2073] sm:$0xf]
    %v2075 = vld [vmem:[%s2073 + $0x4] sm:$0xf]
    %v2076 = vld [vmem:[%s2073 + $0x8] sm:$0xf]
    %v2077 = vld [vmem:[%s2073 + $0xc] sm:$0xf]
    %v2078 = vrot.slane %v954, 2
    %v2083 = vunpack.c.l.b16 %v2074
    %v2084 = vunpack.c.l.b16 %v2075
    %v2085 = vunpack.c.l.b16 %v2076
    %v2086 = vunpack.c.l.b16 %v2077
    %v2087 = vpack.c.b16 %v2084, %v2083
    %v2088 = vpack.c.b16 %v2086, %v2085
    %v2092 = vsel %vm982, %v2078, 0
    %2094 = vmatprep.subr.bf16.mxu0 0
    %2095 = vmatpush1.bf16.msra.mxu0 %v2087
    %2096 = vmatprep.subr.bf16.mxu0 0
    %2097 = vmatpush1.bf16.msra.mxu0 %v2088
    %2098 = vmatprep.subr.bf16.mxu0 0
    %2099 = vmatpush1.bf16.msra.mxu0 0
    %2100 = vmatprep.subr.bf16.mxu0 0
    %2101 = vmatpush1.bf16.msra.mxu0 0
    %2102 = vmatprep.subr.bf16.mxu0 0
    %2103 = vmatpush1.bf16.msra.mxu0 0
    %2104 = vmatprep.subr.bf16.mxu0 0
    %2105 = vmatpush1.bf16.msra.mxu0 0
    %2106 = vmatprep.subr.bf16.mxu0 0
    %2107 = vmatpush1.bf16.msra.mxu0 0
    %2108 = vmatprep.subr.bf16.mxu0 0
    %2109 = vmatpush1.bf16.msra.mxu0 0
    %2110 = vmatprep.subr.bf16.mxu0 0
    %2111 = vmatpush1.bf16.msra.mxu0 0
    %2112 = vmatprep.subr.bf16.mxu0 0
    %2113 = vmatpush1.bf16.msra.mxu0 0
    %2114 = vmatprep.subr.bf16.mxu0 0
    %2115 = vmatpush1.bf16.msra.mxu0 0
    %2116 = vmatprep.subr.bf16.mxu0 0
    %2117 = vmatpush1.bf16.msra.mxu0 0
    %2118 = vmatprep.subr.bf16.mxu0 0
    %2119 = vmatpush1.bf16.msra.mxu0 0
    %2120 = vmatprep.subr.bf16.mxu0 0
    %2121 = vmatpush1.bf16.msra.mxu0 0
    %2122 = vmatprep.subr.bf16.mxu0 0
    %2123 = vmatpush1.bf16.msra.mxu0 0
    %2124 = vmatprep.subr.bf16.mxu0 0
    %2125 = vmatpush1.bf16.msra.mxu0 0
    %2126 = vmatprep.mubr.bf16.mxu0 0
    %2127 = vmatmul.mubr.bf16.gmra.mrb[0].mxu0 %v2092
    %v2128 = vpop.f32.mrb[0].mxu0
    %v2129 = vadd.f32 0.0, %v2128
    %v2130 = vpop.f32.mrb[0].mxu0
    %v2131 = vpop.f32.mrb[0].mxu0
    %v2132 = vpop.f32.mrb[0].mxu0
    %2133 = vdwg.mxu0
    %v2134 = vadd.f32 %v2072, %v2129
    %s2135 = scalar_lea.vmem %s3, 304
    %v2136 = vld [vmem:[%s2135] sm:$0xf]
    %v2137 = vld [vmem:[%s2135 + $0x4] sm:$0xf]
    %v2138 = vld [vmem:[%s2135 + $0x8] sm:$0xf]
    %v2139 = vld [vmem:[%s2135 + $0xc] sm:$0xf]
    %v2140 = vrot.slane %v954, 3
    %v2145 = vunpack.c.l.b16 %v2136
    %v2146 = vunpack.c.l.b16 %v2137
    %v2147 = vunpack.c.l.b16 %v2138
    %v2148 = vunpack.c.l.b16 %v2139
    %v2149 = vpack.c.b16 %v2146, %v2145
    %v2150 = vpack.c.b16 %v2148, %v2147
    %v2154 = vsel %vm982, %v2140, 0
    %2156 = vmatprep.subr.bf16.mxu0 0
    %2157 = vmatpush1.bf16.msra.mxu0 %v2149
    %2158 = vmatprep.subr.bf16.mxu0 0
    %2159 = vmatpush1.bf16.msra.mxu0 %v2150
    %2160 = vmatprep.subr.bf16.mxu0 0
    %2161 = vmatpush1.bf16.msra.mxu0 0
    %2162 = vmatprep.subr.bf16.mxu0 0
    %2163 = vmatpush1.bf16.msra.mxu0 0
    %2164 = vmatprep.subr.bf16.mxu0 0
    %2165 = vmatpush1.bf16.msra.mxu0 0
    %2166 = vmatprep.subr.bf16.mxu0 0
    %2167 = vmatpush1.bf16.msra.mxu0 0
    %2168 = vmatprep.subr.bf16.mxu0 0
    %2169 = vmatpush1.bf16.msra.mxu0 0
    %2170 = vmatprep.subr.bf16.mxu0 0
    %2171 = vmatpush1.bf16.msra.mxu0 0
    %2172 = vmatprep.subr.bf16.mxu0 0
    %2173 = vmatpush1.bf16.msra.mxu0 0
    %2174 = vmatprep.subr.bf16.mxu0 0
    %2175 = vmatpush1.bf16.msra.mxu0 0
    %2176 = vmatprep.subr.bf16.mxu0 0
    %2177 = vmatpush1.bf16.msra.mxu0 0
    %2178 = vmatprep.subr.bf16.mxu0 0
    %2179 = vmatpush1.bf16.msra.mxu0 0
    %2180 = vmatprep.subr.bf16.mxu0 0
    %2181 = vmatpush1.bf16.msra.mxu0 0
    %2182 = vmatprep.subr.bf16.mxu0 0
    %2183 = vmatpush1.bf16.msra.mxu0 0
    %2184 = vmatprep.subr.bf16.mxu0 0
    %2185 = vmatpush1.bf16.msra.mxu0 0
    %2186 = vmatprep.subr.bf16.mxu0 0
    %2187 = vmatpush1.bf16.msra.mxu0 0
    %2188 = vmatprep.mubr.bf16.mxu0 0
    %2189 = vmatmul.mubr.bf16.gmra.mrb[0].mxu0 %v2154
    %v2190 = vpop.f32.mrb[0].mxu0
    %v2191 = vadd.f32 0.0, %v2190
    %v2192 = vpop.f32.mrb[0].mxu0
    %v2193 = vpop.f32.mrb[0].mxu0
    %v2194 = vpop.f32.mrb[0].mxu0
    %2195 = vdwg.mxu0
    %v2196 = vadd.f32 %v2134, %v2191
    %s2197 = scalar_lea.vmem %s3, 320
    %v2198 = vld [vmem:[%s2197] sm:$0xf]
    %v2199 = vld [vmem:[%s2197 + $0x4] sm:$0xf]
    %v2200 = vld [vmem:[%s2197 + $0x8] sm:$0xf]
    %v2201 = vld [vmem:[%s2197 + $0xc] sm:$0xf]
    %v2202 = vrot.slane %v954, 4
    %v2207 = vunpack.c.l.b16 %v2198
    %v2208 = vunpack.c.l.b16 %v2199
    %v2209 = vunpack.c.l.b16 %v2200
    %v2210 = vunpack.c.l.b16 %v2201
    %v2211 = vpack.c.b16 %v2208, %v2207
    %v2212 = vpack.c.b16 %v2210, %v2209
    %v2216 = vsel %vm982, %v2202, 0
    %2218 = vmatprep.subr.bf16.mxu0 0
    %2219 = vmatpush1.bf16.msra.mxu0 %v2211
    %2220 = vmatprep.subr.bf16.mxu0 0
    %2221 = vmatpush1.bf16.msra.mxu0 %v2212
    %2222 = vmatprep.subr.bf16.mxu0 0
    %2223 = vmatpush1.bf16.msra.mxu0 0
    %2224 = vmatprep.subr.bf16.mxu0 0
    %2225 = vmatpush1.bf16.msra.mxu0 0
    %2226 = vmatprep.subr.bf16.mxu0 0
    %2227 = vmatpush1.bf16.msra.mxu0 0
    %2228 = vmatprep.subr.bf16.mxu0 0
    %2229 = vmatpush1.bf16.msra.mxu0 0
    %2230 = vmatprep.subr.bf16.mxu0 0
    %2231 = vmatpush1.bf16.msra.mxu0 0
    %2232 = vmatprep.subr.bf16.mxu0 0
    %2233 = vmatpush1.bf16.msra.mxu0 0
    %2234 = vmatprep.subr.bf16.mxu0 0
    %2235 = vmatpush1.bf16.msra.mxu0 0
    %2236 = vmatprep.subr.bf16.mxu0 0
    %2237 = vmatpush1.bf16.msra.mxu0 0
    %2238 = vmatprep.subr.bf16.mxu0 0
    %2239 = vmatpush1.bf16.msra.mxu0 0
    %2240 = vmatprep.subr.bf16.mxu0 0
    %2241 = vmatpush1.bf16.msra.mxu0 0
    %2242 = vmatprep.subr.bf16.mxu0 0
    %2243 = vmatpush1.bf16.msra.mxu0 0
    %2244 = vmatprep.subr.bf16.mxu0 0
    %2245 = vmatpush1.bf16.msra.mxu0 0
    %2246 = vmatprep.subr.bf16.mxu0 0
    %2247 = vmatpush1.bf16.msra.mxu0 0
    %2248 = vmatprep.subr.bf16.mxu0 0
    %2249 = vmatpush1.bf16.msra.mxu0 0
    %2250 = vmatprep.mubr.bf16.mxu0 0
    %2251 = vmatmul.mubr.bf16.gmra.mrb[0].mxu0 %v2216
    %v2252 = vpop.f32.mrb[0].mxu0
    %v2253 = vadd.f32 0.0, %v2252
    %v2254 = vpop.f32.mrb[0].mxu0
    %v2255 = vpop.f32.mrb[0].mxu0
    %v2256 = vpop.f32.mrb[0].mxu0
    %2257 = vdwg.mxu0
    %v2258 = vadd.f32 %v2196, %v2253
    %s2259 = scalar_lea.vmem %s3, 336
    %v2260 = vld [vmem:[%s2259] sm:$0xf]
    %v2261 = vld [vmem:[%s2259 + $0x4] sm:$0xf]
    %v2262 = vld [vmem:[%s2259 + $0x8] sm:$0xf]
    %v2263 = vld [vmem:[%s2259 + $0xc] sm:$0xf]
    %v2264 = vrot.slane %v954, 5
    %v2269 = vunpack.c.l.b16 %v2260
    %v2270 = vunpack.c.l.b16 %v2261
    %v2271 = vunpack.c.l.b16 %v2262
    %v2272 = vunpack.c.l.b16 %v2263
    %v2273 = vpack.c.b16 %v2270, %v2269
    %v2274 = vpack.c.b16 %v2272, %v2271
    %v2278 = vsel %vm982, %v2264, 0
    %2280 = vmatprep.subr.bf16.mxu0 0
    %2281 = vmatpush1.bf16.msra.mxu0 %v2273
    %2282 = vmatprep.subr.bf16.mxu0 0
    %2283 = vmatpush1.bf16.msra.mxu0 %v2274
    %2284 = vmatprep.subr.bf16.mxu0 0
    %2285 = vmatpush1.bf16.msra.mxu0 0
    %2286 = vmatprep.subr.bf16.mxu0 0
    %2287 = vmatpush1.bf16.msra.mxu0 0
    %2288 = vmatprep.subr.bf16.mxu0 0
    %2289 = vmatpush1.bf16.msra.mxu0 0
    %2290 = vmatprep.subr.bf16.mxu0 0
    %2291 = vmatpush1.bf16.msra.mxu0 0
    %2292 = vmatprep.subr.bf16.mxu0 0
    %2293 = vmatpush1.bf16.msra.mxu0 0
    %2294 = vmatprep.subr.bf16.mxu0 0
    %2295 = vmatpush1.bf16.msra.mxu0 0
    %2296 = vmatprep.subr.bf16.mxu0 0
    %2297 = vmatpush1.bf16.msra.mxu0 0
    %2298 = vmatprep.subr.bf16.mxu0 0
    %2299 = vmatpush1.bf16.msra.mxu0 0
    %2300 = vmatprep.subr.bf16.mxu0 0
    %2301 = vmatpush1.bf16.msra.mxu0 0
    %2302 = vmatprep.subr.bf16.mxu0 0
    %2303 = vmatpush1.bf16.msra.mxu0 0
    %2304 = vmatprep.subr.bf16.mxu0 0
    %2305 = vmatpush1.bf16.msra.mxu0 0
    %2306 = vmatprep.subr.bf16.mxu0 0
    %2307 = vmatpush1.bf16.msra.mxu0 0
    %2308 = vmatprep.subr.bf16.mxu0 0
    %2309 = vmatpush1.bf16.msra.mxu0 0
    %2310 = vmatprep.subr.bf16.mxu0 0
    %2311 = vmatpush1.bf16.msra.mxu0 0
    %2312 = vmatprep.mubr.bf16.mxu0 0
    %2313 = vmatmul.mubr.bf16.gmra.mrb[0].mxu0 %v2278
    %v2314 = vpop.f32.mrb[0].mxu0
    %v2315 = vadd.f32 0.0, %v2314
    %v2316 = vpop.f32.mrb[0].mxu0
    %v2317 = vpop.f32.mrb[0].mxu0
    %v2318 = vpop.f32.mrb[0].mxu0
    %2319 = vdwg.mxu0
    %v2320 = vadd.f32 %v2258, %v2315
    %s2321 = scalar_lea.vmem %s3, 352
    %v2322 = vld [vmem:[%s2321] sm:$0xf]
    %v2323 = vld [vmem:[%s2321 + $0x4] sm:$0xf]
    %v2324 = vld [vmem:[%s2321 + $0x8] sm:$0xf]
    %v2325 = vld [vmem:[%s2321 + $0xc] sm:$0xf]
    %v2326 = vrot.slane %v954, 6
    %v2331 = vunpack.c.l.b16 %v2322
    %v2332 = vunpack.c.l.b16 %v2323
    %v2333 = vunpack.c.l.b16 %v2324
    %v2334 = vunpack.c.l.b16 %v2325
    %v2335 = vpack.c.b16 %v2332, %v2331
    %v2336 = vpack.c.b16 %v2334, %v2333
    %v2340 = vsel %vm982, %v2326, 0
    %2342 = vmatprep.subr.bf16.mxu0 0
    %2343 = vmatpush1.bf16.msra.mxu0 %v2335
    %2344 = vmatprep.subr.bf16.mxu0 0
    %2345 = vmatpush1.bf16.msra.mxu0 %v2336
    %2346 = vmatprep.subr.bf16.mxu0 0
    %2347 = vmatpush1.bf16.msra.mxu0 0
    %2348 = vmatprep.subr.bf16.mxu0 0
    %2349 = vmatpush1.bf16.msra.mxu0 0
    %2350 = vmatprep.subr.bf16.mxu0 0
    %2351 = vmatpush1.bf16.msra.mxu0 0
    %2352 = vmatprep.subr.bf16.mxu0 0
    %2353 = vmatpush1.bf16.msra.mxu0 0
    %2354 = vmatprep.subr.bf16.mxu0 0
    %2355 = vmatpush1.bf16.msra.mxu0 0
    %2356 = vmatprep.subr.bf16.mxu0 0
    %2357 = vmatpush1.bf16.msra.mxu0 0
    %2358 = vmatprep.subr.bf16.mxu0 0
    %2359 = vmatpush1.bf16.msra.mxu0 0
    %2360 = vmatprep.subr.bf16.mxu0 0
    %2361 = vmatpush1.bf16.msra.mxu0 0
    %2362 = vmatprep.subr.bf16.mxu0 0
    %2363 = vmatpush1.bf16.msra.mxu0 0
    %2364 = vmatprep.subr.bf16.mxu0 0
    %2365 = vmatpush1.bf16.msra.mxu0 0
    %2366 = vmatprep.subr.bf16.mxu0 0
    %2367 = vmatpush1.bf16.msra.mxu0 0
    %2368 = vmatprep.subr.bf16.mxu0 0
    %2369 = vmatpush1.bf16.msra.mxu0 0
    %2370 = vmatprep.subr.bf16.mxu0 0
    %2371 = vmatpush1.bf16.msra.mxu0 0
    %2372 = vmatprep.subr.bf16.mxu0 0
    %2373 = vmatpush1.bf16.msra.mxu0 0
    %2374 = vmatprep.mubr.bf16.mxu0 0
    %2375 = vmatmul.mubr.bf16.gmra.mrb[0].mxu0 %v2340
    %v2376 = vpop.f32.mrb[0].mxu0
    %v2377 = vadd.f32 0.0, %v2376
    %v2378 = vpop.f32.mrb[0].mxu0
    %v2379 = vpop.f32.mrb[0].mxu0
    %v2380 = vpop.f32.mrb[0].mxu0
    %2381 = vdwg.mxu0
    %v2382 = vadd.f32 %v2320, %v2377
    %s2383 = scalar_lea.vmem %s3, 368
    %v2384 = vld [vmem:[%s2383] sm:$0xf]
    %v2385 = vld [vmem:[%s2383 + $0x4] sm:$0xf]
    %v2386 = vld [vmem:[%s2383 + $0x8] sm:$0xf]
    %v2387 = vld [vmem:[%s2383 + $0xc] sm:$0xf]
    %v2388 = vrot.slane %v954, 7
    %v2393 = vunpack.c.l.b16 %v2384
    %v2394 = vunpack.c.l.b16 %v2385
    %v2395 = vunpack.c.l.b16 %v2386
    %v2396 = vunpack.c.l.b16 %v2387
    %v2397 = vpack.c.b16 %v2394, %v2393
    %v2398 = vpack.c.b16 %v2396, %v2395
    %v2402 = vsel %vm982, %v2388, 0
    %2404 = vmatprep.subr.bf16.mxu0 0
    %2405 = vmatpush1.bf16.msra.mxu0 %v2397
    %2406 = vmatprep.subr.bf16.mxu0 0
    %2407 = vmatpush1.bf16.msra.mxu0 %v2398
    %2408 = vmatprep.subr.bf16.mxu0 0
    %2409 = vmatpush1.bf16.msra.mxu0 0
    %2410 = vmatprep.subr.bf16.mxu0 0
    %2411 = vmatpush1.bf16.msra.mxu0 0
    %2412 = vmatprep.subr.bf16.mxu0 0
    %2413 = vmatpush1.bf16.msra.mxu0 0
    %2414 = vmatprep.subr.bf16.mxu0 0
    %2415 = vmatpush1.bf16.msra.mxu0 0
    %2416 = vmatprep.subr.bf16.mxu0 0
    %2417 = vmatpush1.bf16.msra.mxu0 0
    %2418 = vmatprep.subr.bf16.mxu0 0
    %2419 = vmatpush1.bf16.msra.mxu0 0
    %2420 = vmatprep.subr.bf16.mxu0 0
    %2421 = vmatpush1.bf16.msra.mxu0 0
    %2422 = vmatprep.subr.bf16.mxu0 0
    %2423 = vmatpush1.bf16.msra.mxu0 0
    %2424 = vmatprep.subr.bf16.mxu0 0
    %2425 = vmatpush1.bf16.msra.mxu0 0
    %2426 = vmatprep.subr.bf16.mxu0 0
    %2427 = vmatpush1.bf16.msra.mxu0 0
    %2428 = vmatprep.subr.bf16.mxu0 0
    %2429 = vmatpush1.bf16.msra.mxu0 0
    %2430 = vmatprep.subr.bf16.mxu0 0
    %2431 = vmatpush1.bf16.msra.mxu0 0
    %2432 = vmatprep.subr.bf16.mxu0 0
    %2433 = vmatpush1.bf16.msra.mxu0 0
    %2434 = vmatprep.subr.bf16.mxu0 0
    %2435 = vmatpush1.bf16.msra.mxu0 0
    %2436 = vmatprep.mubr.bf16.mxu0 0
    %2437 = vmatmul.mubr.bf16.gmra.mrb[0].mxu0 %v2402
    %v2438 = vpop.f32.mrb[0].mxu0
    %v2439 = vadd.f32 0.0, %v2438
    %v2440 = vpop.f32.mrb[0].mxu0
    %v2441 = vpop.f32.mrb[0].mxu0
    %v2442 = vpop.f32.mrb[0].mxu0
    %2443 = vdwg.mxu0
    %v2444 = vadd.f32 %v2382, %v2439
    %s2445 = scalar_lea.vmem %s3, 384
    %v2446 = vld [vmem:[%s2445] sm:$0xf]
    %v2447 = vld [vmem:[%s2445 + $0x4] sm:$0xf]
    %v2448 = vld [vmem:[%s2445 + $0x8] sm:$0xf]
    %v2449 = vld [vmem:[%s2445 + $0xc] sm:$0xf]
    %v2454 = vunpack.c.l.b16 %v2446
    %v2455 = vunpack.c.l.b16 %v2447
    %v2456 = vunpack.c.l.b16 %v2448
    %v2457 = vunpack.c.l.b16 %v2449
    %v2458 = vpack.c.b16 %v2455, %v2454
    %v2459 = vpack.c.b16 %v2457, %v2456
    %v2463 = vsel %vm982, %v955, 0
    %2465 = vmatprep.subr.bf16.mxu0 0
    %2466 = vmatpush1.bf16.msra.mxu0 %v2458
    %2467 = vmatprep.subr.bf16.mxu0 0
    %2468 = vmatpush1.bf16.msra.mxu0 %v2459
    %2469 = vmatprep.subr.bf16.mxu0 0
    %2470 = vmatpush1.bf16.msra.mxu0 0
    %2471 = vmatprep.subr.bf16.mxu0 0
    %2472 = vmatpush1.bf16.msra.mxu0 0
    %2473 = vmatprep.subr.bf16.mxu0 0
    %2474 = vmatpush1.bf16.msra.mxu0 0
    %2475 = vmatprep.subr.bf16.mxu0 0
    %2476 = vmatpush1.bf16.msra.mxu0 0
    %2477 = vmatprep.subr.bf16.mxu0 0
    %2478 = vmatpush1.bf16.msra.mxu0 0
    %2479 = vmatprep.subr.bf16.mxu0 0
    %2480 = vmatpush1.bf16.msra.mxu0 0
    %2481 = vmatprep.subr.bf16.mxu0 0
    %2482 = vmatpush1.bf16.msra.mxu0 0
    %2483 = vmatprep.subr.bf16.mxu0 0
    %2484 = vmatpush1.bf16.msra.mxu0 0
    %2485 = vmatprep.subr.bf16.mxu0 0
    %2486 = vmatpush1.bf16.msra.mxu0 0
    %2487 = vmatprep.subr.bf16.mxu0 0
    %2488 = vmatpush1.bf16.msra.mxu0 0
    %2489 = vmatprep.subr.bf16.mxu0 0
    %2490 = vmatpush1.bf16.msra.mxu0 0
    %2491 = vmatprep.subr.bf16.mxu0 0
    %2492 = vmatpush1.bf16.msra.mxu0 0
    %2493 = vmatprep.subr.bf16.mxu0 0
    %2494 = vmatpush1.bf16.msra.mxu0 0
    %2495 = vmatprep.subr.bf16.mxu0 0
    %2496 = vmatpush1.bf16.msra.mxu0 0
    %2497 = vmatprep.mubr.bf16.mxu0 0
    %2498 = vmatmul.mubr.bf16.gmra.mrb[0].mxu0 %v2463
    %v2499 = vpop.f32.mrb[0].mxu0
    %v2500 = vadd.f32 0.0, %v2499
    %v2501 = vpop.f32.mrb[0].mxu0
    %v2502 = vpop.f32.mrb[0].mxu0
    %v2503 = vpop.f32.mrb[0].mxu0
    %2504 = vdwg.mxu0
    %v2505 = vadd.f32 %v2444, %v2500
    %s2506 = scalar_lea.vmem %s3, 400
    %v2507 = vld [vmem:[%s2506] sm:$0xf]
    %v2508 = vld [vmem:[%s2506 + $0x4] sm:$0xf]
    %v2509 = vld [vmem:[%s2506 + $0x8] sm:$0xf]
    %v2510 = vld [vmem:[%s2506 + $0xc] sm:$0xf]
    %v2512 = vrot.slane %v955, 1
    %v2517 = vunpack.c.l.b16 %v2507
    %v2518 = vunpack.c.l.b16 %v2508
    %v2519 = vunpack.c.l.b16 %v2509
    %v2520 = vunpack.c.l.b16 %v2510
    %v2521 = vpack.c.b16 %v2518, %v2517
    %v2522 = vpack.c.b16 %v2520, %v2519
    %v2526 = vsel %vm982, %v2512, 0
    %2528 = vmatprep.subr.bf16.mxu0 0
    %2529 = vmatpush1.bf16.msra.mxu0 %v2521
    %2530 = vmatprep.subr.bf16.mxu0 0
    %2531 = vmatpush1.bf16.msra.mxu0 %v2522
    %2532 = vmatprep.subr.bf16.mxu0 0
    %2533 = vmatpush1.bf16.msra.mxu0 0
    %2534 = vmatprep.subr.bf16.mxu0 0
    %2535 = vmatpush1.bf16.msra.mxu0 0
    %2536 = vmatprep.subr.bf16.mxu0 0
    %2537 = vmatpush1.bf16.msra.mxu0 0
    %2538 = vmatprep.subr.bf16.mxu0 0
    %2539 = vmatpush1.bf16.msra.mxu0 0
    %2540 = vmatprep.subr.bf16.mxu0 0
    %2541 = vmatpush1.bf16.msra.mxu0 0
    %2542 = vmatprep.subr.bf16.mxu0 0
    %2543 = vmatpush1.bf16.msra.mxu0 0
    %2544 = vmatprep.subr.bf16.mxu0 0
    %2545 = vmatpush1.bf16.msra.mxu0 0
    %2546 = vmatprep.subr.bf16.mxu0 0
    %2547 = vmatpush1.bf16.msra.mxu0 0
    %2548 = vmatprep.subr.bf16.mxu0 0
    %2549 = vmatpush1.bf16.msra.mxu0 0
    %2550 = vmatprep.subr.bf16.mxu0 0
    %2551 = vmatpush1.bf16.msra.mxu0 0
    %2552 = vmatprep.subr.bf16.mxu0 0
    %2553 = vmatpush1.bf16.msra.mxu0 0
    %2554 = vmatprep.subr.bf16.mxu0 0
    %2555 = vmatpush1.bf16.msra.mxu0 0
    %2556 = vmatprep.subr.bf16.mxu0 0
    %2557 = vmatpush1.bf16.msra.mxu0 0
    %2558 = vmatprep.subr.bf16.mxu0 0
    %2559 = vmatpush1.bf16.msra.mxu0 0
    %2560 = vmatprep.mubr.bf16.mxu0 0
    %2561 = vmatmul.mubr.bf16.gmra.mrb[0].mxu0 %v2526
    %v2562 = vpop.f32.mrb[0].mxu0
    %v2563 = vadd.f32 0.0, %v2562
    %v2564 = vpop.f32.mrb[0].mxu0
    %v2565 = vpop.f32.mrb[0].mxu0
    %v2566 = vpop.f32.mrb[0].mxu0
    %2567 = vdwg.mxu0
    %v2568 = vadd.f32 %v2505, %v2563
    %s2569 = scalar_lea.vmem %s3, 416
    %v2570 = vld [vmem:[%s2569] sm:$0xf]
    %v2571 = vld [vmem:[%s2569 + $0x4] sm:$0xf]
    %v2572 = vld [vmem:[%s2569 + $0x8] sm:$0xf]
    %v2573 = vld [vmem:[%s2569 + $0xc] sm:$0xf]
    %v2574 = vrot.slane %v955, 2
    %v2579 = vunpack.c.l.b16 %v2570
    %v2580 = vunpack.c.l.b16 %v2571
    %v2581 = vunpack.c.l.b16 %v2572
    %v2582 = vunpack.c.l.b16 %v2573
    %v2583 = vpack.c.b16 %v2580, %v2579
    %v2584 = vpack.c.b16 %v2582, %v2581
    %v2588 = vsel %vm982, %v2574, 0
    %2590 = vmatprep.subr.bf16.mxu0 0
    %2591 = vmatpush1.bf16.msra.mxu0 %v2583
    %2592 = vmatprep.subr.bf16.mxu0 0
    %2593 = vmatpush1.bf16.msra.mxu0 %v2584
    %2594 = vmatprep.subr.bf16.mxu0 0
    %2595 = vmatpush1.bf16.msra.mxu0 0
    %2596 = vmatprep.subr.bf16.mxu0 0
    %2597 = vmatpush1.bf16.msra.mxu0 0
    %2598 = vmatprep.subr.bf16.mxu0 0
    %2599 = vmatpush1.bf16.msra.mxu0 0
    %2600 = vmatprep.subr.bf16.mxu0 0
    %2601 = vmatpush1.bf16.msra.mxu0 0
    %2602 = vmatprep.subr.bf16.mxu0 0
    %2603 = vmatpush1.bf16.msra.mxu0 0
    %2604 = vmatprep.subr.bf16.mxu0 0
    %2605 = vmatpush1.bf16.msra.mxu0 0
    %2606 = vmatprep.subr.bf16.mxu0 0
    %2607 = vmatpush1.bf16.msra.mxu0 0
    %2608 = vmatprep.subr.bf16.mxu0 0
    %2609 = vmatpush1.bf16.msra.mxu0 0
    %2610 = vmatprep.subr.bf16.mxu0 0
    %2611 = vmatpush1.bf16.msra.mxu0 0
    %2612 = vmatprep.subr.bf16.mxu0 0
    %2613 = vmatpush1.bf16.msra.mxu0 0
    %2614 = vmatprep.subr.bf16.mxu0 0
    %2615 = vmatpush1.bf16.msra.mxu0 0
    %2616 = vmatprep.subr.bf16.mxu0 0
    %2617 = vmatpush1.bf16.msra.mxu0 0
    %2618 = vmatprep.subr.bf16.mxu0 0
    %2619 = vmatpush1.bf16.msra.mxu0 0
    %2620 = vmatprep.subr.bf16.mxu0 0
    %2621 = vmatpush1.bf16.msra.mxu0 0
    %2622 = vmatprep.mubr.bf16.mxu0 0
    %2623 = vmatmul.mubr.bf16.gmra.mrb[0].mxu0 %v2588
    %v2624 = vpop.f32.mrb[0].mxu0
    %v2625 = vadd.f32 0.0, %v2624
    %v2626 = vpop.f32.mrb[0].mxu0
    %v2627 = vpop.f32.mrb[0].mxu0
    %v2628 = vpop.f32.mrb[0].mxu0
    %2629 = vdwg.mxu0
    %v2630 = vadd.f32 %v2568, %v2625
    %s2631 = scalar_lea.vmem %s3, 432
    %v2632 = vld [vmem:[%s2631] sm:$0xf]
    %v2633 = vld [vmem:[%s2631 + $0x4] sm:$0xf]
    %v2634 = vld [vmem:[%s2631 + $0x8] sm:$0xf]
    %v2635 = vld [vmem:[%s2631 + $0xc] sm:$0xf]
    %v2636 = vrot.slane %v955, 3
    %v2641 = vunpack.c.l.b16 %v2632
    %v2642 = vunpack.c.l.b16 %v2633
    %v2643 = vunpack.c.l.b16 %v2634
    %v2644 = vunpack.c.l.b16 %v2635
    %v2645 = vpack.c.b16 %v2642, %v2641
    %v2646 = vpack.c.b16 %v2644, %v2643
    %v2650 = vsel %vm982, %v2636, 0
    %2652 = vmatprep.subr.bf16.mxu0 0
    %2653 = vmatpush1.bf16.msra.mxu0 %v2645
    %2654 = vmatprep.subr.bf16.mxu0 0
    %2655 = vmatpush1.bf16.msra.mxu0 %v2646
    %2656 = vmatprep.subr.bf16.mxu0 0
    %2657 = vmatpush1.bf16.msra.mxu0 0
    %2658 = vmatprep.subr.bf16.mxu0 0
    %2659 = vmatpush1.bf16.msra.mxu0 0
    %2660 = vmatprep.subr.bf16.mxu0 0
    %2661 = vmatpush1.bf16.msra.mxu0 0
    %2662 = vmatprep.subr.bf16.mxu0 0
    %2663 = vmatpush1.bf16.msra.mxu0 0
    %2664 = vmatprep.subr.bf16.mxu0 0
    %2665 = vmatpush1.bf16.msra.mxu0 0
    %2666 = vmatprep.subr.bf16.mxu0 0
    %2667 = vmatpush1.bf16.msra.mxu0 0
    %2668 = vmatprep.subr.bf16.mxu0 0
    %2669 = vmatpush1.bf16.msra.mxu0 0
    %2670 = vmatprep.subr.bf16.mxu0 0
    %2671 = vmatpush1.bf16.msra.mxu0 0
    %2672 = vmatprep.subr.bf16.mxu0 0
    %2673 = vmatpush1.bf16.msra.mxu0 0
    %2674 = vmatprep.subr.bf16.mxu0 0
    %2675 = vmatpush1.bf16.msra.mxu0 0
    %2676 = vmatprep.subr.bf16.mxu0 0
    %2677 = vmatpush1.bf16.msra.mxu0 0
    %2678 = vmatprep.subr.bf16.mxu0 0
    %2679 = vmatpush1.bf16.msra.mxu0 0
    %2680 = vmatprep.subr.bf16.mxu0 0
    %2681 = vmatpush1.bf16.msra.mxu0 0
    %2682 = vmatprep.subr.bf16.mxu0 0
    %2683 = vmatpush1.bf16.msra.mxu0 0
    %2684 = vmatprep.mubr.bf16.mxu0 0
    %2685 = vmatmul.mubr.bf16.gmra.mrb[0].mxu0 %v2650
    %v2686 = vpop.f32.mrb[0].mxu0
    %v2687 = vadd.f32 0.0, %v2686
    %v2688 = vpop.f32.mrb[0].mxu0
    %v2689 = vpop.f32.mrb[0].mxu0
    %v2690 = vpop.f32.mrb[0].mxu0
    %2691 = vdwg.mxu0
    %v2692 = vadd.f32 %v2630, %v2687
    %s2693 = scalar_lea.vmem %s3, 448
    %v2694 = vld [vmem:[%s2693] sm:$0xf]
    %v2695 = vld [vmem:[%s2693 + $0x4] sm:$0xf]
    %v2696 = vld [vmem:[%s2693 + $0x8] sm:$0xf]
    %v2697 = vld [vmem:[%s2693 + $0xc] sm:$0xf]
    %v2698 = vrot.slane %v955, 4
    %v2703 = vunpack.c.l.b16 %v2694
    %v2704 = vunpack.c.l.b16 %v2695
    %v2705 = vunpack.c.l.b16 %v2696
    %v2706 = vunpack.c.l.b16 %v2697
    %v2707 = vpack.c.b16 %v2704, %v2703
    %v2708 = vpack.c.b16 %v2706, %v2705
    %v2712 = vsel %vm982, %v2698, 0
    %2714 = vmatprep.subr.bf16.mxu0 0
    %2715 = vmatpush1.bf16.msra.mxu0 %v2707
    %2716 = vmatprep.subr.bf16.mxu0 0
    %2717 = vmatpush1.bf16.msra.mxu0 %v2708
    %2718 = vmatprep.subr.bf16.mxu0 0
    %2719 = vmatpush1.bf16.msra.mxu0 0
    %2720 = vmatprep.subr.bf16.mxu0 0
    %2721 = vmatpush1.bf16.msra.mxu0 0
    %2722 = vmatprep.subr.bf16.mxu0 0
    %2723 = vmatpush1.bf16.msra.mxu0 0
    %2724 = vmatprep.subr.bf16.mxu0 0
    %2725 = vmatpush1.bf16.msra.mxu0 0
    %2726 = vmatprep.subr.bf16.mxu0 0
    %2727 = vmatpush1.bf16.msra.mxu0 0
    %2728 = vmatprep.subr.bf16.mxu0 0
    %2729 = vmatpush1.bf16.msra.mxu0 0
    %2730 = vmatprep.subr.bf16.mxu0 0
    %2731 = vmatpush1.bf16.msra.mxu0 0
    %2732 = vmatprep.subr.bf16.mxu0 0
    %2733 = vmatpush1.bf16.msra.mxu0 0
    %2734 = vmatprep.subr.bf16.mxu0 0
    %2735 = vmatpush1.bf16.msra.mxu0 0
    %2736 = vmatprep.subr.bf16.mxu0 0
    %2737 = vmatpush1.bf16.msra.mxu0 0
    %2738 = vmatprep.subr.bf16.mxu0 0
    %2739 = vmatpush1.bf16.msra.mxu0 0
    %2740 = vmatprep.subr.bf16.mxu0 0
    %2741 = vmatpush1.bf16.msra.mxu0 0
    %2742 = vmatprep.subr.bf16.mxu0 0
    %2743 = vmatpush1.bf16.msra.mxu0 0
    %2744 = vmatprep.subr.bf16.mxu0 0
    %2745 = vmatpush1.bf16.msra.mxu0 0
    %2746 = vmatprep.mubr.bf16.mxu0 0
    %2747 = vmatmul.mubr.bf16.gmra.mrb[0].mxu0 %v2712
    %v2748 = vpop.f32.mrb[0].mxu0
    %v2749 = vadd.f32 0.0, %v2748
    %v2750 = vpop.f32.mrb[0].mxu0
    %v2751 = vpop.f32.mrb[0].mxu0
    %v2752 = vpop.f32.mrb[0].mxu0
    %2753 = vdwg.mxu0
    %v2754 = vadd.f32 %v2692, %v2749
    %s2755 = scalar_lea.vmem %s3, 464
    %v2756 = vld [vmem:[%s2755] sm:$0xf]
    %v2757 = vld [vmem:[%s2755 + $0x4] sm:$0xf]
    %v2758 = vld [vmem:[%s2755 + $0x8] sm:$0xf]
    %v2759 = vld [vmem:[%s2755 + $0xc] sm:$0xf]
    %v2760 = vrot.slane %v955, 5
    %v2765 = vunpack.c.l.b16 %v2756
    %v2766 = vunpack.c.l.b16 %v2757
    %v2767 = vunpack.c.l.b16 %v2758
    %v2768 = vunpack.c.l.b16 %v2759
    %v2769 = vpack.c.b16 %v2766, %v2765
    %v2770 = vpack.c.b16 %v2768, %v2767
    %v2774 = vsel %vm982, %v2760, 0
    %2776 = vmatprep.subr.bf16.mxu0 0
    %2777 = vmatpush1.bf16.msra.mxu0 %v2769
    %2778 = vmatprep.subr.bf16.mxu0 0
    %2779 = vmatpush1.bf16.msra.mxu0 %v2770
    %2780 = vmatprep.subr.bf16.mxu0 0
    %2781 = vmatpush1.bf16.msra.mxu0 0
    %2782 = vmatprep.subr.bf16.mxu0 0
    %2783 = vmatpush1.bf16.msra.mxu0 0
    %2784 = vmatprep.subr.bf16.mxu0 0
    %2785 = vmatpush1.bf16.msra.mxu0 0
    %2786 = vmatprep.subr.bf16.mxu0 0
    %2787 = vmatpush1.bf16.msra.mxu0 0
    %2788 = vmatprep.subr.bf16.mxu0 0
    %2789 = vmatpush1.bf16.msra.mxu0 0
    %2790 = vmatprep.subr.bf16.mxu0 0
    %2791 = vmatpush1.bf16.msra.mxu0 0
    %2792 = vmatprep.subr.bf16.mxu0 0
    %2793 = vmatpush1.bf16.msra.mxu0 0
    %2794 = vmatprep.subr.bf16.mxu0 0
    %2795 = vmatpush1.bf16.msra.mxu0 0
    %2796 = vmatprep.subr.bf16.mxu0 0
    %2797 = vmatpush1.bf16.msra.mxu0 0
    %2798 = vmatprep.subr.bf16.mxu0 0
    %2799 = vmatpush1.bf16.msra.mxu0 0
    %2800 = vmatprep.subr.bf16.mxu0 0
    %2801 = vmatpush1.bf16.msra.mxu0 0
    %2802 = vmatprep.subr.bf16.mxu0 0
    %2803 = vmatpush1.bf16.msra.mxu0 0
    %2804 = vmatprep.subr.bf16.mxu0 0
    %2805 = vmatpush1.bf16.msra.mxu0 0
    %2806 = vmatprep.subr.bf16.mxu0 0
    %2807 = vmatpush1.bf16.msra.mxu0 0
    %2808 = vmatprep.mubr.bf16.mxu0 0
    %2809 = vmatmul.mubr.bf16.gmra.mrb[0].mxu0 %v2774
    %v2810 = vpop.f32.mrb[0].mxu0
    %v2811 = vadd.f32 0.0, %v2810
    %v2812 = vpop.f32.mrb[0].mxu0
    %v2813 = vpop.f32.mrb[0].mxu0
    %v2814 = vpop.f32.mrb[0].mxu0
    %2815 = vdwg.mxu0
    %v2816 = vadd.f32 %v2754, %v2811
    %s2817 = scalar_lea.vmem %s3, 480
    %v2818 = vld [vmem:[%s2817] sm:$0xf]
    %v2819 = vld [vmem:[%s2817 + $0x4] sm:$0xf]
    %v2820 = vld [vmem:[%s2817 + $0x8] sm:$0xf]
    %v2821 = vld [vmem:[%s2817 + $0xc] sm:$0xf]
    %v2822 = vrot.slane %v955, 6
    %v2827 = vunpack.c.l.b16 %v2818
    %v2828 = vunpack.c.l.b16 %v2819
    %v2829 = vunpack.c.l.b16 %v2820
    %v2830 = vunpack.c.l.b16 %v2821
    %v2831 = vpack.c.b16 %v2828, %v2827
    %v2832 = vpack.c.b16 %v2830, %v2829
    %v2836 = vsel %vm982, %v2822, 0
    %2838 = vmatprep.subr.bf16.mxu0 0
    %2839 = vmatpush1.bf16.msra.mxu0 %v2831
    %2840 = vmatprep.subr.bf16.mxu0 0
    %2841 = vmatpush1.bf16.msra.mxu0 %v2832
    %2842 = vmatprep.subr.bf16.mxu0 0
    %2843 = vmatpush1.bf16.msra.mxu0 0
    %2844 = vmatprep.subr.bf16.mxu0 0
    %2845 = vmatpush1.bf16.msra.mxu0 0
    %2846 = vmatprep.subr.bf16.mxu0 0
    %2847 = vmatpush1.bf16.msra.mxu0 0
    %2848 = vmatprep.subr.bf16.mxu0 0
    %2849 = vmatpush1.bf16.msra.mxu0 0
    %2850 = vmatprep.subr.bf16.mxu0 0
    %2851 = vmatpush1.bf16.msra.mxu0 0
    %2852 = vmatprep.subr.bf16.mxu0 0
    %2853 = vmatpush1.bf16.msra.mxu0 0
    %2854 = vmatprep.subr.bf16.mxu0 0
    %2855 = vmatpush1.bf16.msra.mxu0 0
    %2856 = vmatprep.subr.bf16.mxu0 0
    %2857 = vmatpush1.bf16.msra.mxu0 0
    %2858 = vmatprep.subr.bf16.mxu0 0
    %2859 = vmatpush1.bf16.msra.mxu0 0
    %2860 = vmatprep.subr.bf16.mxu0 0
    %2861 = vmatpush1.bf16.msra.mxu0 0
    %2862 = vmatprep.subr.bf16.mxu0 0
    %2863 = vmatpush1.bf16.msra.mxu0 0
    %2864 = vmatprep.subr.bf16.mxu0 0
    %2865 = vmatpush1.bf16.msra.mxu0 0
    %2866 = vmatprep.subr.bf16.mxu0 0
    %2867 = vmatpush1.bf16.msra.mxu0 0
    %2868 = vmatprep.subr.bf16.mxu0 0
    %2869 = vmatpush1.bf16.msra.mxu0 0
    %2870 = vmatprep.mubr.bf16.mxu0 0
    %2871 = vmatmul.mubr.bf16.gmra.mrb[0].mxu0 %v2836
    %v2872 = vpop.f32.mrb[0].mxu0
    %v2873 = vadd.f32 0.0, %v2872
    %v2874 = vpop.f32.mrb[0].mxu0
    %v2875 = vpop.f32.mrb[0].mxu0
    %v2876 = vpop.f32.mrb[0].mxu0
    %2877 = vdwg.mxu0
    %v2878 = vadd.f32 %v2816, %v2873
    %s2879 = scalar_lea.vmem %s3, 496
    %v2880 = vld [vmem:[%s2879] sm:$0xf]
    %v2881 = vld [vmem:[%s2879 + $0x4] sm:$0xf]
    %v2882 = vld [vmem:[%s2879 + $0x8] sm:$0xf]
    %v2883 = vld [vmem:[%s2879 + $0xc] sm:$0xf]
    %v2884 = vrot.slane %v955, 7
    %v2889 = vunpack.c.l.b16 %v2880
    %v2890 = vunpack.c.l.b16 %v2881
    %v2891 = vunpack.c.l.b16 %v2882
    %v2892 = vunpack.c.l.b16 %v2883
    %v2893 = vpack.c.b16 %v2890, %v2889
    %v2894 = vpack.c.b16 %v2892, %v2891
    %v2898 = vsel %vm982, %v2884, 0
    %2900 = vmatprep.subr.bf16.mxu0 0
    %2901 = vmatpush1.bf16.msra.mxu0 %v2893
    %2902 = vmatprep.subr.bf16.mxu0 0
    %2903 = vmatpush1.bf16.msra.mxu0 %v2894
    %2904 = vmatprep.subr.bf16.mxu0 0
    %2905 = vmatpush1.bf16.msra.mxu0 0
    %2906 = vmatprep.subr.bf16.mxu0 0
    %2907 = vmatpush1.bf16.msra.mxu0 0
    %2908 = vmatprep.subr.bf16.mxu0 0
    %2909 = vmatpush1.bf16.msra.mxu0 0
    %2910 = vmatprep.subr.bf16.mxu0 0
    %2911 = vmatpush1.bf16.msra.mxu0 0
    %2912 = vmatprep.subr.bf16.mxu0 0
    %2913 = vmatpush1.bf16.msra.mxu0 0
    %2914 = vmatprep.subr.bf16.mxu0 0
    %2915 = vmatpush1.bf16.msra.mxu0 0
    %2916 = vmatprep.subr.bf16.mxu0 0
    %2917 = vmatpush1.bf16.msra.mxu0 0
    %2918 = vmatprep.subr.bf16.mxu0 0
    %2919 = vmatpush1.bf16.msra.mxu0 0
    %2920 = vmatprep.subr.bf16.mxu0 0
    %2921 = vmatpush1.bf16.msra.mxu0 0
    %2922 = vmatprep.subr.bf16.mxu0 0
    %2923 = vmatpush1.bf16.msra.mxu0 0
    %2924 = vmatprep.subr.bf16.mxu0 0
    %2925 = vmatpush1.bf16.msra.mxu0 0
    %2926 = vmatprep.subr.bf16.mxu0 0
    %2927 = vmatpush1.bf16.msra.mxu0 0
    %2928 = vmatprep.subr.bf16.mxu0 0
    %2929 = vmatpush1.bf16.msra.mxu0 0
    %2930 = vmatprep.subr.bf16.mxu0 0
    %2931 = vmatpush1.bf16.msra.mxu0 0
    %2932 = vmatprep.mubr.bf16.mxu0 0
    %2933 = vmatmul.mubr.bf16.gmra.mrb[0].mxu0 %v2898
    %v2934 = vpop.f32.mrb[0].mxu0
    %v2935 = vadd.f32 0.0, %v2934
    %v2936 = vpop.f32.mrb[0].mxu0
    %v2937 = vpop.f32.mrb[0].mxu0
    %v2938 = vpop.f32.mrb[0].mxu0
    %2939 = vdwg.mxu0
    %v2940 = vadd.f32 %v2878, %v2935
    %s2941 = scalar_lea.vmem %s3, 512
    %v2942 = vld [vmem:[%s2941] sm:$0xf]
    %v2943 = vld [vmem:[%s2941 + $0x4] sm:$0xf]
    %v2944 = vld [vmem:[%s2941 + $0x8] sm:$0xf]
    %v2945 = vld [vmem:[%s2941 + $0xc] sm:$0xf]
    %v2950 = vunpack.c.l.b16 %v2942
    %v2951 = vunpack.c.l.b16 %v2943
    %v2952 = vunpack.c.l.b16 %v2944
    %v2953 = vunpack.c.l.b16 %v2945
    %v2954 = vpack.c.b16 %v2951, %v2950
    %v2955 = vpack.c.b16 %v2953, %v2952
    %v2959 = vsel %vm982, %v956, 0
    %2961 = vmatprep.subr.bf16.mxu0 0
    %2962 = vmatpush1.bf16.msra.mxu0 %v2954
    %2963 = vmatprep.subr.bf16.mxu0 0
    %2964 = vmatpush1.bf16.msra.mxu0 %v2955
    %2965 = vmatprep.subr.bf16.mxu0 0
    %2966 = vmatpush1.bf16.msra.mxu0 0
    %2967 = vmatprep.subr.bf16.mxu0 0
    %2968 = vmatpush1.bf16.msra.mxu0 0
    %2969 = vmatprep.subr.bf16.mxu0 0
    %2970 = vmatpush1.bf16.msra.mxu0 0
    %2971 = vmatprep.subr.bf16.mxu0 0
    %2972 = vmatpush1.bf16.msra.mxu0 0
    %2973 = vmatprep.subr.bf16.mxu0 0
    %2974 = vmatpush1.bf16.msra.mxu0 0
    %2975 = vmatprep.subr.bf16.mxu0 0
    %2976 = vmatpush1.bf16.msra.mxu0 0
    %2977 = vmatprep.subr.bf16.mxu0 0
    %2978 = vmatpush1.bf16.msra.mxu0 0
    %2979 = vmatprep.subr.bf16.mxu0 0
    %2980 = vmatpush1.bf16.msra.mxu0 0
    %2981 = vmatprep.subr.bf16.mxu0 0
    %2982 = vmatpush1.bf16.msra.mxu0 0
    %2983 = vmatprep.subr.bf16.mxu0 0
    %2984 = vmatpush1.bf16.msra.mxu0 0
    %2985 = vmatprep.subr.bf16.mxu0 0
    %2986 = vmatpush1.bf16.msra.mxu0 0
    %2987 = vmatprep.subr.bf16.mxu0 0
    %2988 = vmatpush1.bf16.msra.mxu0 0
    %2989 = vmatprep.subr.bf16.mxu0 0
    %2990 = vmatpush1.bf16.msra.mxu0 0
    %2991 = vmatprep.subr.bf16.mxu0 0
    %2992 = vmatpush1.bf16.msra.mxu0 0
    %2993 = vmatprep.mubr.bf16.mxu0 0
    %2994 = vmatmul.mubr.bf16.gmra.mrb[0].mxu0 %v2959
    %v2995 = vpop.f32.mrb[0].mxu0
    %v2996 = vadd.f32 0.0, %v2995
    %v2997 = vpop.f32.mrb[0].mxu0
    %v2998 = vpop.f32.mrb[0].mxu0
    %v2999 = vpop.f32.mrb[0].mxu0
    %3000 = vdwg.mxu0
    %v3001 = vadd.f32 %v2940, %v2996
    %s3002 = scalar_lea.vmem %s3, 528
    %v3003 = vld [vmem:[%s3002] sm:$0xf]
    %v3004 = vld [vmem:[%s3002 + $0x4] sm:$0xf]
    %v3005 = vld [vmem:[%s3002 + $0x8] sm:$0xf]
    %v3006 = vld [vmem:[%s3002 + $0xc] sm:$0xf]
    %v3008 = vrot.slane %v956, 1
    %v3013 = vunpack.c.l.b16 %v3003
    %v3014 = vunpack.c.l.b16 %v3004
    %v3015 = vunpack.c.l.b16 %v3005
    %v3016 = vunpack.c.l.b16 %v3006
    %v3017 = vpack.c.b16 %v3014, %v3013
    %v3018 = vpack.c.b16 %v3016, %v3015
    %v3022 = vsel %vm982, %v3008, 0
    %3024 = vmatprep.subr.bf16.mxu0 0
    %3025 = vmatpush1.bf16.msra.mxu0 %v3017
    %3026 = vmatprep.subr.bf16.mxu0 0
    %3027 = vmatpush1.bf16.msra.mxu0 %v3018
    %3028 = vmatprep.subr.bf16.mxu0 0
    %3029 = vmatpush1.bf16.msra.mxu0 0
    %3030 = vmatprep.subr.bf16.mxu0 0
    %3031 = vmatpush1.bf16.msra.mxu0 0
    %3032 = vmatprep.subr.bf16.mxu0 0
    %3033 = vmatpush1.bf16.msra.mxu0 0
    %3034 = vmatprep.subr.bf16.mxu0 0
    %3035 = vmatpush1.bf16.msra.mxu0 0
    %3036 = vmatprep.subr.bf16.mxu0 0
    %3037 = vmatpush1.bf16.msra.mxu0 0
    %3038 = vmatprep.subr.bf16.mxu0 0
    %3039 = vmatpush1.bf16.msra.mxu0 0
    %3040 = vmatprep.subr.bf16.mxu0 0
    %3041 = vmatpush1.bf16.msra.mxu0 0
    %3042 = vmatprep.subr.bf16.mxu0 0
    %3043 = vmatpush1.bf16.msra.mxu0 0
    %3044 = vmatprep.subr.bf16.mxu0 0
    %3045 = vmatpush1.bf16.msra.mxu0 0
    %3046 = vmatprep.subr.bf16.mxu0 0
    %3047 = vmatpush1.bf16.msra.mxu0 0
    %3048 = vmatprep.subr.bf16.mxu0 0
    %3049 = vmatpush1.bf16.msra.mxu0 0
    %3050 = vmatprep.subr.bf16.mxu0 0
    %3051 = vmatpush1.bf16.msra.mxu0 0
    %3052 = vmatprep.subr.bf16.mxu0 0
    %3053 = vmatpush1.bf16.msra.mxu0 0
    %3054 = vmatprep.subr.bf16.mxu0 0
    %3055 = vmatpush1.bf16.msra.mxu0 0
    %3056 = vmatprep.mubr.bf16.mxu0 0
    %3057 = vmatmul.mubr.bf16.gmra.mrb[0].mxu0 %v3022
    %v3058 = vpop.f32.mrb[0].mxu0
    %v3059 = vadd.f32 0.0, %v3058
    %v3060 = vpop.f32.mrb[0].mxu0
    %v3061 = vpop.f32.mrb[0].mxu0
    %v3062 = vpop.f32.mrb[0].mxu0
    %3063 = vdwg.mxu0
    %v3064 = vadd.f32 %v3001, %v3059
    %s3065 = scalar_lea.vmem %s3, 544
    %v3066 = vld [vmem:[%s3065] sm:$0xf]
    %v3067 = vld [vmem:[%s3065 + $0x4] sm:$0xf]
    %v3068 = vld [vmem:[%s3065 + $0x8] sm:$0xf]
    %v3069 = vld [vmem:[%s3065 + $0xc] sm:$0xf]
    %v3070 = vrot.slane %v956, 2
    %v3075 = vunpack.c.l.b16 %v3066
    %v3076 = vunpack.c.l.b16 %v3067
    %v3077 = vunpack.c.l.b16 %v3068
    %v3078 = vunpack.c.l.b16 %v3069
    %v3079 = vpack.c.b16 %v3076, %v3075
    %v3080 = vpack.c.b16 %v3078, %v3077
    %v3084 = vsel %vm982, %v3070, 0
    %3086 = vmatprep.subr.bf16.mxu0 0
    %3087 = vmatpush1.bf16.msra.mxu0 %v3079
    %3088 = vmatprep.subr.bf16.mxu0 0
    %3089 = vmatpush1.bf16.msra.mxu0 %v3080
    %3090 = vmatprep.subr.bf16.mxu0 0
    %3091 = vmatpush1.bf16.msra.mxu0 0
    %3092 = vmatprep.subr.bf16.mxu0 0
    %3093 = vmatpush1.bf16.msra.mxu0 0
    %3094 = vmatprep.subr.bf16.mxu0 0
    %3095 = vmatpush1.bf16.msra.mxu0 0
    %3096 = vmatprep.subr.bf16.mxu0 0
    %3097 = vmatpush1.bf16.msra.mxu0 0
    %3098 = vmatprep.subr.bf16.mxu0 0
    %3099 = vmatpush1.bf16.msra.mxu0 0
    %3100 = vmatprep.subr.bf16.mxu0 0
    %3101 = vmatpush1.bf16.msra.mxu0 0
    %3102 = vmatprep.subr.bf16.mxu0 0
    %3103 = vmatpush1.bf16.msra.mxu0 0
    %3104 = vmatprep.subr.bf16.mxu0 0
    %3105 = vmatpush1.bf16.msra.mxu0 0
    %3106 = vmatprep.subr.bf16.mxu0 0
    %3107 = vmatpush1.bf16.msra.mxu0 0
    %3108 = vmatprep.subr.bf16.mxu0 0
    %3109 = vmatpush1.bf16.msra.mxu0 0
    %3110 = vmatprep.subr.bf16.mxu0 0
    %3111 = vmatpush1.bf16.msra.mxu0 0
    %3112 = vmatprep.subr.bf16.mxu0 0
    %3113 = vmatpush1.bf16.msra.mxu0 0
    %3114 = vmatprep.subr.bf16.mxu0 0
    %3115 = vmatpush1.bf16.msra.mxu0 0
    %3116 = vmatprep.subr.bf16.mxu0 0
    %3117 = vmatpush1.bf16.msra.mxu0 0
    %3118 = vmatprep.mubr.bf16.mxu0 0
    %3119 = vmatmul.mubr.bf16.gmra.mrb[0].mxu0 %v3084
    %v3120 = vpop.f32.mrb[0].mxu0
    %v3121 = vadd.f32 0.0, %v3120
    %v3122 = vpop.f32.mrb[0].mxu0
    %v3123 = vpop.f32.mrb[0].mxu0
    %v3124 = vpop.f32.mrb[0].mxu0
    %3125 = vdwg.mxu0
    %v3126 = vadd.f32 %v3064, %v3121
    %s3127 = scalar_lea.vmem %s3, 560
    %v3128 = vld [vmem:[%s3127] sm:$0xf]
    %v3129 = vld [vmem:[%s3127 + $0x4] sm:$0xf]
    %v3130 = vld [vmem:[%s3127 + $0x8] sm:$0xf]
    %v3131 = vld [vmem:[%s3127 + $0xc] sm:$0xf]
    %v3132 = vrot.slane %v956, 3
    %v3137 = vunpack.c.l.b16 %v3128
    %v3138 = vunpack.c.l.b16 %v3129
    %v3139 = vunpack.c.l.b16 %v3130
    %v3140 = vunpack.c.l.b16 %v3131
    %v3141 = vpack.c.b16 %v3138, %v3137
    %v3142 = vpack.c.b16 %v3140, %v3139
    %v3146 = vsel %vm982, %v3132, 0
    %3148 = vmatprep.subr.bf16.mxu0 0
    %3149 = vmatpush1.bf16.msra.mxu0 %v3141
    %3150 = vmatprep.subr.bf16.mxu0 0
    %3151 = vmatpush1.bf16.msra.mxu0 %v3142
    %3152 = vmatprep.subr.bf16.mxu0 0
    %3153 = vmatpush1.bf16.msra.mxu0 0
    %3154 = vmatprep.subr.bf16.mxu0 0
    %3155 = vmatpush1.bf16.msra.mxu0 0
    %3156 = vmatprep.subr.bf16.mxu0 0
    %3157 = vmatpush1.bf16.msra.mxu0 0
    %3158 = vmatprep.subr.bf16.mxu0 0
    %3159 = vmatpush1.bf16.msra.mxu0 0
    %3160 = vmatprep.subr.bf16.mxu0 0
    %3161 = vmatpush1.bf16.msra.mxu0 0
    %3162 = vmatprep.subr.bf16.mxu0 0
    %3163 = vmatpush1.bf16.msra.mxu0 0
    %3164 = vmatprep.subr.bf16.mxu0 0
    %3165 = vmatpush1.bf16.msra.mxu0 0
    %3166 = vmatprep.subr.bf16.mxu0 0
    %3167 = vmatpush1.bf16.msra.mxu0 0
    %3168 = vmatprep.subr.bf16.mxu0 0
    %3169 = vmatpush1.bf16.msra.mxu0 0
    %3170 = vmatprep.subr.bf16.mxu0 0
    %3171 = vmatpush1.bf16.msra.mxu0 0
    %3172 = vmatprep.subr.bf16.mxu0 0
    %3173 = vmatpush1.bf16.msra.mxu0 0
    %3174 = vmatprep.subr.bf16.mxu0 0
    %3175 = vmatpush1.bf16.msra.mxu0 0
    %3176 = vmatprep.subr.bf16.mxu0 0
    %3177 = vmatpush1.bf16.msra.mxu0 0
    %3178 = vmatprep.subr.bf16.mxu0 0
    %3179 = vmatpush1.bf16.msra.mxu0 0
    %3180 = vmatprep.mubr.bf16.mxu0 0
    %3181 = vmatmul.mubr.bf16.gmra.mrb[0].mxu0 %v3146
    %v3182 = vpop.f32.mrb[0].mxu0
    %v3183 = vadd.f32 0.0, %v3182
    %v3184 = vpop.f32.mrb[0].mxu0
    %v3185 = vpop.f32.mrb[0].mxu0
    %v3186 = vpop.f32.mrb[0].mxu0
    %3187 = vdwg.mxu0
    %v3188 = vadd.f32 %v3126, %v3183
    %s3189 = scalar_lea.vmem %s3, 576
    %v3190 = vld [vmem:[%s3189] sm:$0xf]
    %v3191 = vld [vmem:[%s3189 + $0x4] sm:$0xf]
    %v3192 = vld [vmem:[%s3189 + $0x8] sm:$0xf]
    %v3193 = vld [vmem:[%s3189 + $0xc] sm:$0xf]
    %v3194 = vrot.slane %v956, 4
    %v3199 = vunpack.c.l.b16 %v3190
    %v3200 = vunpack.c.l.b16 %v3191
    %v3201 = vunpack.c.l.b16 %v3192
    %v3202 = vunpack.c.l.b16 %v3193
    %v3203 = vpack.c.b16 %v3200, %v3199
    %v3204 = vpack.c.b16 %v3202, %v3201
    %v3208 = vsel %vm982, %v3194, 0
    %3210 = vmatprep.subr.bf16.mxu0 0
    %3211 = vmatpush1.bf16.msra.mxu0 %v3203
    %3212 = vmatprep.subr.bf16.mxu0 0
    %3213 = vmatpush1.bf16.msra.mxu0 %v3204
    %3214 = vmatprep.subr.bf16.mxu0 0
    %3215 = vmatpush1.bf16.msra.mxu0 0
    %3216 = vmatprep.subr.bf16.mxu0 0
    %3217 = vmatpush1.bf16.msra.mxu0 0
    %3218 = vmatprep.subr.bf16.mxu0 0
    %3219 = vmatpush1.bf16.msra.mxu0 0
    %3220 = vmatprep.subr.bf16.mxu0 0
    %3221 = vmatpush1.bf16.msra.mxu0 0
    %3222 = vmatprep.subr.bf16.mxu0 0
    %3223 = vmatpush1.bf16.msra.mxu0 0
    %3224 = vmatprep.subr.bf16.mxu0 0
    %3225 = vmatpush1.bf16.msra.mxu0 0
    %3226 = vmatprep.subr.bf16.mxu0 0
    %3227 = vmatpush1.bf16.msra.mxu0 0
    %3228 = vmatprep.subr.bf16.mxu0 0
    %3229 = vmatpush1.bf16.msra.mxu0 0
    %3230 = vmatprep.subr.bf16.mxu0 0
    %3231 = vmatpush1.bf16.msra.mxu0 0
    %3232 = vmatprep.subr.bf16.mxu0 0
    %3233 = vmatpush1.bf16.msra.mxu0 0
    %3234 = vmatprep.subr.bf16.mxu0 0
    %3235 = vmatpush1.bf16.msra.mxu0 0
    %3236 = vmatprep.subr.bf16.mxu0 0
    %3237 = vmatpush1.bf16.msra.mxu0 0
    %3238 = vmatprep.subr.bf16.mxu0 0
    %3239 = vmatpush1.bf16.msra.mxu0 0
    %3240 = vmatprep.subr.bf16.mxu0 0
    %3241 = vmatpush1.bf16.msra.mxu0 0
    %3242 = vmatprep.mubr.bf16.mxu0 0
    %3243 = vmatmul.mubr.bf16.gmra.mrb[0].mxu0 %v3208
    %v3244 = vpop.f32.mrb[0].mxu0
    %v3245 = vadd.f32 0.0, %v3244
    %v3246 = vpop.f32.mrb[0].mxu0
    %v3247 = vpop.f32.mrb[0].mxu0
    %v3248 = vpop.f32.mrb[0].mxu0
    %3249 = vdwg.mxu0
    %v3250 = vadd.f32 %v3188, %v3245
    %s3251 = scalar_lea.vmem %s3, 592
    %v3252 = vld [vmem:[%s3251] sm:$0xf]
    %v3253 = vld [vmem:[%s3251 + $0x4] sm:$0xf]
    %v3254 = vld [vmem:[%s3251 + $0x8] sm:$0xf]
    %v3255 = vld [vmem:[%s3251 + $0xc] sm:$0xf]
    %v3256 = vrot.slane %v956, 5
    %v3261 = vunpack.c.l.b16 %v3252
    %v3262 = vunpack.c.l.b16 %v3253
    %v3263 = vunpack.c.l.b16 %v3254
    %v3264 = vunpack.c.l.b16 %v3255
    %v3265 = vpack.c.b16 %v3262, %v3261
    %v3266 = vpack.c.b16 %v3264, %v3263
    %v3270 = vsel %vm982, %v3256, 0
    %3272 = vmatprep.subr.bf16.mxu0 0
    %3273 = vmatpush1.bf16.msra.mxu0 %v3265
    %3274 = vmatprep.subr.bf16.mxu0 0
    %3275 = vmatpush1.bf16.msra.mxu0 %v3266
    %3276 = vmatprep.subr.bf16.mxu0 0
    %3277 = vmatpush1.bf16.msra.mxu0 0
    %3278 = vmatprep.subr.bf16.mxu0 0
    %3279 = vmatpush1.bf16.msra.mxu0 0
    %3280 = vmatprep.subr.bf16.mxu0 0
    %3281 = vmatpush1.bf16.msra.mxu0 0
    %3282 = vmatprep.subr.bf16.mxu0 0
    %3283 = vmatpush1.bf16.msra.mxu0 0
    %3284 = vmatprep.subr.bf16.mxu0 0
    %3285 = vmatpush1.bf16.msra.mxu0 0
    %3286 = vmatprep.subr.bf16.mxu0 0
    %3287 = vmatpush1.bf16.msra.mxu0 0
    %3288 = vmatprep.subr.bf16.mxu0 0
    %3289 = vmatpush1.bf16.msra.mxu0 0
    %3290 = vmatprep.subr.bf16.mxu0 0
    %3291 = vmatpush1.bf16.msra.mxu0 0
    %3292 = vmatprep.subr.bf16.mxu0 0
    %3293 = vmatpush1.bf16.msra.mxu0 0
    %3294 = vmatprep.subr.bf16.mxu0 0
    %3295 = vmatpush1.bf16.msra.mxu0 0
    %3296 = vmatprep.subr.bf16.mxu0 0
    %3297 = vmatpush1.bf16.msra.mxu0 0
    %3298 = vmatprep.subr.bf16.mxu0 0
    %3299 = vmatpush1.bf16.msra.mxu0 0
    %3300 = vmatprep.subr.bf16.mxu0 0
    %3301 = vmatpush1.bf16.msra.mxu0 0
    %3302 = vmatprep.subr.bf16.mxu0 0
    %3303 = vmatpush1.bf16.msra.mxu0 0
    %3304 = vmatprep.mubr.bf16.mxu0 0
    %3305 = vmatmul.mubr.bf16.gmra.mrb[0].mxu0 %v3270
    %v3306 = vpop.f32.mrb[0].mxu0
    %v3307 = vadd.f32 0.0, %v3306
    %v3308 = vpop.f32.mrb[0].mxu0
    %v3309 = vpop.f32.mrb[0].mxu0
    %v3310 = vpop.f32.mrb[0].mxu0
    %3311 = vdwg.mxu0
    %v3312 = vadd.f32 %v3250, %v3307
    %s3313 = scalar_lea.vmem %s3, 608
    %v3314 = vld [vmem:[%s3313] sm:$0xf]
    %v3315 = vld [vmem:[%s3313 + $0x4] sm:$0xf]
    %v3316 = vld [vmem:[%s3313 + $0x8] sm:$0xf]
    %v3317 = vld [vmem:[%s3313 + $0xc] sm:$0xf]
    %v3318 = vrot.slane %v956, 6
    %v3323 = vunpack.c.l.b16 %v3314
    %v3324 = vunpack.c.l.b16 %v3315
    %v3325 = vunpack.c.l.b16 %v3316
    %v3326 = vunpack.c.l.b16 %v3317
    %v3327 = vpack.c.b16 %v3324, %v3323
    %v3328 = vpack.c.b16 %v3326, %v3325
    %v3332 = vsel %vm982, %v3318, 0
    %3334 = vmatprep.subr.bf16.mxu0 0
    %3335 = vmatpush1.bf16.msra.mxu0 %v3327
    %3336 = vmatprep.subr.bf16.mxu0 0
    %3337 = vmatpush1.bf16.msra.mxu0 %v3328
    %3338 = vmatprep.subr.bf16.mxu0 0
    %3339 = vmatpush1.bf16.msra.mxu0 0
    %3340 = vmatprep.subr.bf16.mxu0 0
    %3341 = vmatpush1.bf16.msra.mxu0 0
    %3342 = vmatprep.subr.bf16.mxu0 0
    %3343 = vmatpush1.bf16.msra.mxu0 0
    %3344 = vmatprep.subr.bf16.mxu0 0
    %3345 = vmatpush1.bf16.msra.mxu0 0
    %3346 = vmatprep.subr.bf16.mxu0 0
    %3347 = vmatpush1.bf16.msra.mxu0 0
    %3348 = vmatprep.subr.bf16.mxu0 0
    %3349 = vmatpush1.bf16.msra.mxu0 0
    %3350 = vmatprep.subr.bf16.mxu0 0
    %3351 = vmatpush1.bf16.msra.mxu0 0
    %3352 = vmatprep.subr.bf16.mxu0 0
    %3353 = vmatpush1.bf16.msra.mxu0 0
    %3354 = vmatprep.subr.bf16.mxu0 0
    %3355 = vmatpush1.bf16.msra.mxu0 0
    %3356 = vmatprep.subr.bf16.mxu0 0
    %3357 = vmatpush1.bf16.msra.mxu0 0
    %3358 = vmatprep.subr.bf16.mxu0 0
    %3359 = vmatpush1.bf16.msra.mxu0 0
    %3360 = vmatprep.subr.bf16.mxu0 0
    %3361 = vmatpush1.bf16.msra.mxu0 0
    %3362 = vmatprep.subr.bf16.mxu0 0
    %3363 = vmatpush1.bf16.msra.mxu0 0
    %3364 = vmatprep.subr.bf16.mxu0 0
    %3365 = vmatpush1.bf16.msra.mxu0 0
    %3366 = vmatprep.mubr.bf16.mxu0 0
    %3367 = vmatmul.mubr.bf16.gmra.mrb[0].mxu0 %v3332
    %v3368 = vpop.f32.mrb[0].mxu0
    %v3369 = vadd.f32 0.0, %v3368
    %v3370 = vpop.f32.mrb[0].mxu0
    %v3371 = vpop.f32.mrb[0].mxu0
    %v3372 = vpop.f32.mrb[0].mxu0
    %3373 = vdwg.mxu0
    %v3374 = vadd.f32 %v3312, %v3369
    %s3375 = scalar_lea.vmem %s3, 624
    %v3376 = vld [vmem:[%s3375] sm:$0xf]
    %v3377 = vld [vmem:[%s3375 + $0x4] sm:$0xf]
    %v3378 = vld [vmem:[%s3375 + $0x8] sm:$0xf]
    %v3379 = vld [vmem:[%s3375 + $0xc] sm:$0xf]
    %v3380 = vrot.slane %v956, 7
    %v3385 = vunpack.c.l.b16 %v3376
    %v3386 = vunpack.c.l.b16 %v3377
    %v3387 = vunpack.c.l.b16 %v3378
    %v3388 = vunpack.c.l.b16 %v3379
    %v3389 = vpack.c.b16 %v3386, %v3385
    %v3390 = vpack.c.b16 %v3388, %v3387
    %v3394 = vsel %vm982, %v3380, 0
    %3396 = vmatprep.subr.bf16.mxu0 0
    %3397 = vmatpush1.bf16.msra.mxu0 %v3389
    %3398 = vmatprep.subr.bf16.mxu0 0
    %3399 = vmatpush1.bf16.msra.mxu0 %v3390
    %3400 = vmatprep.subr.bf16.mxu0 0
    %3401 = vmatpush1.bf16.msra.mxu0 0
    %3402 = vmatprep.subr.bf16.mxu0 0
    %3403 = vmatpush1.bf16.msra.mxu0 0
    %3404 = vmatprep.subr.bf16.mxu0 0
    %3405 = vmatpush1.bf16.msra.mxu0 0
    %3406 = vmatprep.subr.bf16.mxu0 0
    %3407 = vmatpush1.bf16.msra.mxu0 0
    %3408 = vmatprep.subr.bf16.mxu0 0
    %3409 = vmatpush1.bf16.msra.mxu0 0
    %3410 = vmatprep.subr.bf16.mxu0 0
    %3411 = vmatpush1.bf16.msra.mxu0 0
    %3412 = vmatprep.subr.bf16.mxu0 0
    %3413 = vmatpush1.bf16.msra.mxu0 0
    %3414 = vmatprep.subr.bf16.mxu0 0
    %3415 = vmatpush1.bf16.msra.mxu0 0
    %3416 = vmatprep.subr.bf16.mxu0 0
    %3417 = vmatpush1.bf16.msra.mxu0 0
    %3418 = vmatprep.subr.bf16.mxu0 0
    %3419 = vmatpush1.bf16.msra.mxu0 0
    %3420 = vmatprep.subr.bf16.mxu0 0
    %3421 = vmatpush1.bf16.msra.mxu0 0
    %3422 = vmatprep.subr.bf16.mxu0 0
    %3423 = vmatpush1.bf16.msra.mxu0 0
    %3424 = vmatprep.subr.bf16.mxu0 0
    %3425 = vmatpush1.bf16.msra.mxu0 0
    %3426 = vmatprep.subr.bf16.mxu0 0
    %3427 = vmatpush1.bf16.msra.mxu0 0
    %3428 = vmatprep.mubr.bf16.mxu0 0
    %3429 = vmatmul.mubr.bf16.gmra.mrb[0].mxu0 %v3394
    %v3430 = vpop.f32.mrb[0].mxu0
    %v3431 = vadd.f32 0.0, %v3430
    %v3432 = vpop.f32.mrb[0].mxu0
    %v3433 = vpop.f32.mrb[0].mxu0
    %v3434 = vpop.f32.mrb[0].mxu0
    %3435 = vdwg.mxu0
    %v3436 = vadd.f32 %v3374, %v3431
    %s3437 = scalar_lea.vmem %s3, 640
    %v3438 = vld [vmem:[%s3437] sm:$0xf]
    %v3439 = vld [vmem:[%s3437 + $0x4] sm:$0xf]
    %v3440 = vld [vmem:[%s3437 + $0x8] sm:$0xf]
    %v3441 = vld [vmem:[%s3437 + $0xc] sm:$0xf]
    %v3446 = vunpack.c.l.b16 %v3438
    %v3447 = vunpack.c.l.b16 %v3439
    %v3448 = vunpack.c.l.b16 %v3440
    %v3449 = vunpack.c.l.b16 %v3441
    %v3450 = vpack.c.b16 %v3447, %v3446
    %v3451 = vpack.c.b16 %v3449, %v3448
    %v3455 = vsel %vm982, %v957, 0
    %3457 = vmatprep.subr.bf16.mxu0 0
    %3458 = vmatpush1.bf16.msra.mxu0 %v3450
    %3459 = vmatprep.subr.bf16.mxu0 0
    %3460 = vmatpush1.bf16.msra.mxu0 %v3451
    %3461 = vmatprep.subr.bf16.mxu0 0
    %3462 = vmatpush1.bf16.msra.mxu0 0
    %3463 = vmatprep.subr.bf16.mxu0 0
    %3464 = vmatpush1.bf16.msra.mxu0 0
    %3465 = vmatprep.subr.bf16.mxu0 0
    %3466 = vmatpush1.bf16.msra.mxu0 0
    %3467 = vmatprep.subr.bf16.mxu0 0
    %3468 = vmatpush1.bf16.msra.mxu0 0
    %3469 = vmatprep.subr.bf16.mxu0 0
    %3470 = vmatpush1.bf16.msra.mxu0 0
    %3471 = vmatprep.subr.bf16.mxu0 0
    %3472 = vmatpush1.bf16.msra.mxu0 0
    %3473 = vmatprep.subr.bf16.mxu0 0
    %3474 = vmatpush1.bf16.msra.mxu0 0
    %3475 = vmatprep.subr.bf16.mxu0 0
    %3476 = vmatpush1.bf16.msra.mxu0 0
    %3477 = vmatprep.subr.bf16.mxu0 0
    %3478 = vmatpush1.bf16.msra.mxu0 0
    %3479 = vmatprep.subr.bf16.mxu0 0
    %3480 = vmatpush1.bf16.msra.mxu0 0
    %3481 = vmatprep.subr.bf16.mxu0 0
    %3482 = vmatpush1.bf16.msra.mxu0 0
    %3483 = vmatprep.subr.bf16.mxu0 0
    %3484 = vmatpush1.bf16.msra.mxu0 0
    %3485 = vmatprep.subr.bf16.mxu0 0
    %3486 = vmatpush1.bf16.msra.mxu0 0
    %3487 = vmatprep.subr.bf16.mxu0 0
    %3488 = vmatpush1.bf16.msra.mxu0 0
    %3489 = vmatprep.mubr.bf16.mxu0 0
    %3490 = vmatmul.mubr.bf16.gmra.mrb[0].mxu0 %v3455
    %v3491 = vpop.f32.mrb[0].mxu0
    %v3492 = vadd.f32 0.0, %v3491
    %v3493 = vpop.f32.mrb[0].mxu0
    %v3494 = vpop.f32.mrb[0].mxu0
    %v3495 = vpop.f32.mrb[0].mxu0
    %3496 = vdwg.mxu0
    %v3497 = vadd.f32 %v3436, %v3492
    %s3498 = scalar_lea.vmem %s3, 656
    %v3499 = vld [vmem:[%s3498] sm:$0xf]
    %v3500 = vld [vmem:[%s3498 + $0x4] sm:$0xf]
    %v3501 = vld [vmem:[%s3498 + $0x8] sm:$0xf]
    %v3502 = vld [vmem:[%s3498 + $0xc] sm:$0xf]
    %v3504 = vrot.slane %v957, 1
    %v3509 = vunpack.c.l.b16 %v3499
    %v3510 = vunpack.c.l.b16 %v3500
    %v3511 = vunpack.c.l.b16 %v3501
    %v3512 = vunpack.c.l.b16 %v3502
    %v3513 = vpack.c.b16 %v3510, %v3509
    %v3514 = vpack.c.b16 %v3512, %v3511
    %v3518 = vsel %vm982, %v3504, 0
    %3520 = vmatprep.subr.bf16.mxu0 0
    %3521 = vmatpush1.bf16.msra.mxu0 %v3513
    %3522 = vmatprep.subr.bf16.mxu0 0
    %3523 = vmatpush1.bf16.msra.mxu0 %v3514
    %3524 = vmatprep.subr.bf16.mxu0 0
    %3525 = vmatpush1.bf16.msra.mxu0 0
    %3526 = vmatprep.subr.bf16.mxu0 0
    %3527 = vmatpush1.bf16.msra.mxu0 0
    %3528 = vmatprep.subr.bf16.mxu0 0
    %3529 = vmatpush1.bf16.msra.mxu0 0
    %3530 = vmatprep.subr.bf16.mxu0 0
    %3531 = vmatpush1.bf16.msra.mxu0 0
    %3532 = vmatprep.subr.bf16.mxu0 0
    %3533 = vmatpush1.bf16.msra.mxu0 0
    %3534 = vmatprep.subr.bf16.mxu0 0
    %3535 = vmatpush1.bf16.msra.mxu0 0
    %3536 = vmatprep.subr.bf16.mxu0 0
    %3537 = vmatpush1.bf16.msra.mxu0 0
    %3538 = vmatprep.subr.bf16.mxu0 0
    %3539 = vmatpush1.bf16.msra.mxu0 0
    %3540 = vmatprep.subr.bf16.mxu0 0
    %3541 = vmatpush1.bf16.msra.mxu0 0
    %3542 = vmatprep.subr.bf16.mxu0 0
    %3543 = vmatpush1.bf16.msra.mxu0 0
    %3544 = vmatprep.subr.bf16.mxu0 0
    %3545 = vmatpush1.bf16.msra.mxu0 0
    %3546 = vmatprep.subr.bf16.mxu0 0
    %3547 = vmatpush1.bf16.msra.mxu0 0
    %3548 = vmatprep.subr.bf16.mxu0 0
    %3549 = vmatpush1.bf16.msra.mxu0 0
    %3550 = vmatprep.subr.bf16.mxu0 0
    %3551 = vmatpush1.bf16.msra.mxu0 0
    %3552 = vmatprep.mubr.bf16.mxu0 0
    %3553 = vmatmul.mubr.bf16.gmra.mrb[0].mxu0 %v3518
    %v3554 = vpop.f32.mrb[0].mxu0
    %v3555 = vadd.f32 0.0, %v3554
    %v3556 = vpop.f32.mrb[0].mxu0
    %v3557 = vpop.f32.mrb[0].mxu0
    %v3558 = vpop.f32.mrb[0].mxu0
    %3559 = vdwg.mxu0
    %v3560 = vadd.f32 %v3497, %v3555
    %s3561 = scalar_lea.vmem %s3, 672
    %v3562 = vld [vmem:[%s3561] sm:$0xf]
    %v3563 = vld [vmem:[%s3561 + $0x4] sm:$0xf]
    %v3564 = vld [vmem:[%s3561 + $0x8] sm:$0xf]
    %v3565 = vld [vmem:[%s3561 + $0xc] sm:$0xf]
    %v3566 = vrot.slane %v957, 2
    %v3571 = vunpack.c.l.b16 %v3562
    %v3572 = vunpack.c.l.b16 %v3563
    %v3573 = vunpack.c.l.b16 %v3564
    %v3574 = vunpack.c.l.b16 %v3565
    %v3575 = vpack.c.b16 %v3572, %v3571
    %v3576 = vpack.c.b16 %v3574, %v3573
    %v3580 = vsel %vm982, %v3566, 0
    %3582 = vmatprep.subr.bf16.mxu0 0
    %3583 = vmatpush1.bf16.msra.mxu0 %v3575
    %3584 = vmatprep.subr.bf16.mxu0 0
    %3585 = vmatpush1.bf16.msra.mxu0 %v3576
    %3586 = vmatprep.subr.bf16.mxu0 0
    %3587 = vmatpush1.bf16.msra.mxu0 0
    %3588 = vmatprep.subr.bf16.mxu0 0
    %3589 = vmatpush1.bf16.msra.mxu0 0
    %3590 = vmatprep.subr.bf16.mxu0 0
    %3591 = vmatpush1.bf16.msra.mxu0 0
    %3592 = vmatprep.subr.bf16.mxu0 0
    %3593 = vmatpush1.bf16.msra.mxu0 0
    %3594 = vmatprep.subr.bf16.mxu0 0
    %3595 = vmatpush1.bf16.msra.mxu0 0
    %3596 = vmatprep.subr.bf16.mxu0 0
    %3597 = vmatpush1.bf16.msra.mxu0 0
    %3598 = vmatprep.subr.bf16.mxu0 0
    %3599 = vmatpush1.bf16.msra.mxu0 0
    %3600 = vmatprep.subr.bf16.mxu0 0
    %3601 = vmatpush1.bf16.msra.mxu0 0
    %3602 = vmatprep.subr.bf16.mxu0 0
    %3603 = vmatpush1.bf16.msra.mxu0 0
    %3604 = vmatprep.subr.bf16.mxu0 0
    %3605 = vmatpush1.bf16.msra.mxu0 0
    %3606 = vmatprep.subr.bf16.mxu0 0
    %3607 = vmatpush1.bf16.msra.mxu0 0
    %3608 = vmatprep.subr.bf16.mxu0 0
    %3609 = vmatpush1.bf16.msra.mxu0 0
    %3610 = vmatprep.subr.bf16.mxu0 0
    %3611 = vmatpush1.bf16.msra.mxu0 0
    %3612 = vmatprep.subr.bf16.mxu0 0
    %3613 = vmatpush1.bf16.msra.mxu0 0
    %3614 = vmatprep.mubr.bf16.mxu0 0
    %3615 = vmatmul.mubr.bf16.gmra.mrb[0].mxu0 %v3580
    %v3616 = vpop.f32.mrb[0].mxu0
    %v3617 = vadd.f32 0.0, %v3616
    %v3618 = vpop.f32.mrb[0].mxu0
    %v3619 = vpop.f32.mrb[0].mxu0
    %v3620 = vpop.f32.mrb[0].mxu0
    %3621 = vdwg.mxu0
    %v3622 = vadd.f32 %v3560, %v3617
    %s3623 = scalar_lea.vmem %s3, 688
    %v3624 = vld [vmem:[%s3623] sm:$0xf]
    %v3625 = vld [vmem:[%s3623 + $0x4] sm:$0xf]
    %v3626 = vld [vmem:[%s3623 + $0x8] sm:$0xf]
    %v3627 = vld [vmem:[%s3623 + $0xc] sm:$0xf]
    %v3628 = vrot.slane %v957, 3
    %v3633 = vunpack.c.l.b16 %v3624
    %v3634 = vunpack.c.l.b16 %v3625
    %v3635 = vunpack.c.l.b16 %v3626
    %v3636 = vunpack.c.l.b16 %v3627
    %v3637 = vpack.c.b16 %v3634, %v3633
    %v3638 = vpack.c.b16 %v3636, %v3635
    %v3642 = vsel %vm982, %v3628, 0
    %3644 = vmatprep.subr.bf16.mxu0 0
    %3645 = vmatpush1.bf16.msra.mxu0 %v3637
    %3646 = vmatprep.subr.bf16.mxu0 0
    %3647 = vmatpush1.bf16.msra.mxu0 %v3638
    %3648 = vmatprep.subr.bf16.mxu0 0
    %3649 = vmatpush1.bf16.msra.mxu0 0
    %3650 = vmatprep.subr.bf16.mxu0 0
    %3651 = vmatpush1.bf16.msra.mxu0 0
    %3652 = vmatprep.subr.bf16.mxu0 0
    %3653 = vmatpush1.bf16.msra.mxu0 0
    %3654 = vmatprep.subr.bf16.mxu0 0
    %3655 = vmatpush1.bf16.msra.mxu0 0
    %3656 = vmatprep.subr.bf16.mxu0 0
    %3657 = vmatpush1.bf16.msra.mxu0 0
    %3658 = vmatprep.subr.bf16.mxu0 0
    %3659 = vmatpush1.bf16.msra.mxu0 0
    %3660 = vmatprep.subr.bf16.mxu0 0
    %3661 = vmatpush1.bf16.msra.mxu0 0
    %3662 = vmatprep.subr.bf16.mxu0 0
    %3663 = vmatpush1.bf16.msra.mxu0 0
    %3664 = vmatprep.subr.bf16.mxu0 0
    %3665 = vmatpush1.bf16.msra.mxu0 0
    %3666 = vmatprep.subr.bf16.mxu0 0
    %3667 = vmatpush1.bf16.msra.mxu0 0
    %3668 = vmatprep.subr.bf16.mxu0 0
    %3669 = vmatpush1.bf16.msra.mxu0 0
    %3670 = vmatprep.subr.bf16.mxu0 0
    %3671 = vmatpush1.bf16.msra.mxu0 0
    %3672 = vmatprep.subr.bf16.mxu0 0
    %3673 = vmatpush1.bf16.msra.mxu0 0
    %3674 = vmatprep.subr.bf16.mxu0 0
    %3675 = vmatpush1.bf16.msra.mxu0 0
    %3676 = vmatprep.mubr.bf16.mxu0 0
    %3677 = vmatmul.mubr.bf16.gmra.mrb[0].mxu0 %v3642
    %v3678 = vpop.f32.mrb[0].mxu0
    %v3679 = vadd.f32 0.0, %v3678
    %v3680 = vpop.f32.mrb[0].mxu0
    %v3681 = vpop.f32.mrb[0].mxu0
    %v3682 = vpop.f32.mrb[0].mxu0
    %3683 = vdwg.mxu0
    %v3684 = vadd.f32 %v3622, %v3679
    %s3685 = scalar_lea.vmem %s3, 704
    %v3686 = vld [vmem:[%s3685] sm:$0xf]
    %v3687 = vld [vmem:[%s3685 + $0x4] sm:$0xf]
    %v3688 = vld [vmem:[%s3685 + $0x8] sm:$0xf]
    %v3689 = vld [vmem:[%s3685 + $0xc] sm:$0xf]
    %v3690 = vrot.slane %v957, 4
    %v3695 = vunpack.c.l.b16 %v3686
    %v3696 = vunpack.c.l.b16 %v3687
    %v3697 = vunpack.c.l.b16 %v3688
    %v3698 = vunpack.c.l.b16 %v3689
    %v3699 = vpack.c.b16 %v3696, %v3695
    %v3700 = vpack.c.b16 %v3698, %v3697
    %v3704 = vsel %vm982, %v3690, 0
    %3706 = vmatprep.subr.bf16.mxu0 0
    %3707 = vmatpush1.bf16.msra.mxu0 %v3699
    %3708 = vmatprep.subr.bf16.mxu0 0
    %3709 = vmatpush1.bf16.msra.mxu0 %v3700
    %3710 = vmatprep.subr.bf16.mxu0 0
    %3711 = vmatpush1.bf16.msra.mxu0 0
    %3712 = vmatprep.subr.bf16.mxu0 0
    %3713 = vmatpush1.bf16.msra.mxu0 0
    %3714 = vmatprep.subr.bf16.mxu0 0
    %3715 = vmatpush1.bf16.msra.mxu0 0
    %3716 = vmatprep.subr.bf16.mxu0 0
    %3717 = vmatpush1.bf16.msra.mxu0 0
    %3718 = vmatprep.subr.bf16.mxu0 0
    %3719 = vmatpush1.bf16.msra.mxu0 0
    %3720 = vmatprep.subr.bf16.mxu0 0
    %3721 = vmatpush1.bf16.msra.mxu0 0
    %3722 = vmatprep.subr.bf16.mxu0 0
    %3723 = vmatpush1.bf16.msra.mxu0 0
    %3724 = vmatprep.subr.bf16.mxu0 0
    %3725 = vmatpush1.bf16.msra.mxu0 0
    %3726 = vmatprep.subr.bf16.mxu0 0
    %3727 = vmatpush1.bf16.msra.mxu0 0
    %3728 = vmatprep.subr.bf16.mxu0 0
    %3729 = vmatpush1.bf16.msra.mxu0 0
    %3730 = vmatprep.subr.bf16.mxu0 0
    %3731 = vmatpush1.bf16.msra.mxu0 0
    %3732 = vmatprep.subr.bf16.mxu0 0
    %3733 = vmatpush1.bf16.msra.mxu0 0
    %3734 = vmatprep.subr.bf16.mxu0 0
    %3735 = vmatpush1.bf16.msra.mxu0 0
    %3736 = vmatprep.subr.bf16.mxu0 0
    %3737 = vmatpush1.bf16.msra.mxu0 0
    %3738 = vmatprep.mubr.bf16.mxu0 0
    %3739 = vmatmul.mubr.bf16.gmra.mrb[0].mxu0 %v3704
    %v3740 = vpop.f32.mrb[0].mxu0
    %v3741 = vadd.f32 0.0, %v3740
    %v3742 = vpop.f32.mrb[0].mxu0
    %v3743 = vpop.f32.mrb[0].mxu0
    %v3744 = vpop.f32.mrb[0].mxu0
    %3745 = vdwg.mxu0
    %v3746 = vadd.f32 %v3684, %v3741
    %s3747 = scalar_lea.vmem %s3, 720
    %v3748 = vld [vmem:[%s3747] sm:$0xf]
    %v3749 = vld [vmem:[%s3747 + $0x4] sm:$0xf]
    %v3750 = vld [vmem:[%s3747 + $0x8] sm:$0xf]
    %v3751 = vld [vmem:[%s3747 + $0xc] sm:$0xf]
    %v3752 = vrot.slane %v957, 5
    %v3757 = vunpack.c.l.b16 %v3748
    %v3758 = vunpack.c.l.b16 %v3749
    %v3759 = vunpack.c.l.b16 %v3750
    %v3760 = vunpack.c.l.b16 %v3751
    %v3761 = vpack.c.b16 %v3758, %v3757
    %v3762 = vpack.c.b16 %v3760, %v3759
    %v3766 = vsel %vm982, %v3752, 0
    %3768 = vmatprep.subr.bf16.mxu0 0
    %3769 = vmatpush1.bf16.msra.mxu0 %v3761
    %3770 = vmatprep.subr.bf16.mxu0 0
    %3771 = vmatpush1.bf16.msra.mxu0 %v3762
    %3772 = vmatprep.subr.bf16.mxu0 0
    %3773 = vmatpush1.bf16.msra.mxu0 0
    %3774 = vmatprep.subr.bf16.mxu0 0
    %3775 = vmatpush1.bf16.msra.mxu0 0
    %3776 = vmatprep.subr.bf16.mxu0 0
    %3777 = vmatpush1.bf16.msra.mxu0 0
    %3778 = vmatprep.subr.bf16.mxu0 0
    %3779 = vmatpush1.bf16.msra.mxu0 0
    %3780 = vmatprep.subr.bf16.mxu0 0
    %3781 = vmatpush1.bf16.msra.mxu0 0
    %3782 = vmatprep.subr.bf16.mxu0 0
    %3783 = vmatpush1.bf16.msra.mxu0 0
    %3784 = vmatprep.subr.bf16.mxu0 0
    %3785 = vmatpush1.bf16.msra.mxu0 0
    %3786 = vmatprep.subr.bf16.mxu0 0
    %3787 = vmatpush1.bf16.msra.mxu0 0
    %3788 = vmatprep.subr.bf16.mxu0 0
    %3789 = vmatpush1.bf16.msra.mxu0 0
    %3790 = vmatprep.subr.bf16.mxu0 0
    %3791 = vmatpush1.bf16.msra.mxu0 0
    %3792 = vmatprep.subr.bf16.mxu0 0
    %3793 = vmatpush1.bf16.msra.mxu0 0
    %3794 = vmatprep.subr.bf16.mxu0 0
    %3795 = vmatpush1.bf16.msra.mxu0 0
    %3796 = vmatprep.subr.bf16.mxu0 0
    %3797 = vmatpush1.bf16.msra.mxu0 0
    %3798 = vmatprep.subr.bf16.mxu0 0
    %3799 = vmatpush1.bf16.msra.mxu0 0
    %3800 = vmatprep.mubr.bf16.mxu0 0
    %3801 = vmatmul.mubr.bf16.gmra.mrb[0].mxu0 %v3766
    %v3802 = vpop.f32.mrb[0].mxu0
    %v3803 = vadd.f32 0.0, %v3802
    %v3804 = vpop.f32.mrb[0].mxu0
    %v3805 = vpop.f32.mrb[0].mxu0
    %v3806 = vpop.f32.mrb[0].mxu0
    %3807 = vdwg.mxu0
    %v3808 = vadd.f32 %v3746, %v3803
    %s3809 = scalar_lea.vmem %s3, 736
    %v3810 = vld [vmem:[%s3809] sm:$0xf]
    %v3811 = vld [vmem:[%s3809 + $0x4] sm:$0xf]
    %v3812 = vld [vmem:[%s3809 + $0x8] sm:$0xf]
    %v3813 = vld [vmem:[%s3809 + $0xc] sm:$0xf]
    %v3814 = vrot.slane %v957, 6
    %v3819 = vunpack.c.l.b16 %v3810
    %v3820 = vunpack.c.l.b16 %v3811
    %v3821 = vunpack.c.l.b16 %v3812
    %v3822 = vunpack.c.l.b16 %v3813
    %v3823 = vpack.c.b16 %v3820, %v3819
    %v3824 = vpack.c.b16 %v3822, %v3821
    %v3828 = vsel %vm982, %v3814, 0
    %3830 = vmatprep.subr.bf16.mxu0 0
    %3831 = vmatpush1.bf16.msra.mxu0 %v3823
    %3832 = vmatprep.subr.bf16.mxu0 0
    %3833 = vmatpush1.bf16.msra.mxu0 %v3824
    %3834 = vmatprep.subr.bf16.mxu0 0
    %3835 = vmatpush1.bf16.msra.mxu0 0
    %3836 = vmatprep.subr.bf16.mxu0 0
    %3837 = vmatpush1.bf16.msra.mxu0 0
    %3838 = vmatprep.subr.bf16.mxu0 0
    %3839 = vmatpush1.bf16.msra.mxu0 0
    %3840 = vmatprep.subr.bf16.mxu0 0
    %3841 = vmatpush1.bf16.msra.mxu0 0
    %3842 = vmatprep.subr.bf16.mxu0 0
    %3843 = vmatpush1.bf16.msra.mxu0 0
    %3844 = vmatprep.subr.bf16.mxu0 0
    %3845 = vmatpush1.bf16.msra.mxu0 0
    %3846 = vmatprep.subr.bf16.mxu0 0
    %3847 = vmatpush1.bf16.msra.mxu0 0
    %3848 = vmatprep.subr.bf16.mxu0 0
    %3849 = vmatpush1.bf16.msra.mxu0 0
    %3850 = vmatprep.subr.bf16.mxu0 0
    %3851 = vmatpush1.bf16.msra.mxu0 0
    %3852 = vmatprep.subr.bf16.mxu0 0
    %3853 = vmatpush1.bf16.msra.mxu0 0
    %3854 = vmatprep.subr.bf16.mxu0 0
    %3855 = vmatpush1.bf16.msra.mxu0 0
    %3856 = vmatprep.subr.bf16.mxu0 0
    %3857 = vmatpush1.bf16.msra.mxu0 0
    %3858 = vmatprep.subr.bf16.mxu0 0
    %3859 = vmatpush1.bf16.msra.mxu0 0
    %3860 = vmatprep.subr.bf16.mxu0 0
    %3861 = vmatpush1.bf16.msra.mxu0 0
    %3862 = vmatprep.mubr.bf16.mxu0 0
    %3863 = vmatmul.mubr.bf16.gmra.mrb[0].mxu0 %v3828
    %v3864 = vpop.f32.mrb[0].mxu0
    %v3865 = vadd.f32 0.0, %v3864
    %v3866 = vpop.f32.mrb[0].mxu0
    %v3867 = vpop.f32.mrb[0].mxu0
    %v3868 = vpop.f32.mrb[0].mxu0
    %3869 = vdwg.mxu0
    %v3870 = vadd.f32 %v3808, %v3865
    %s3871 = scalar_lea.vmem %s3, 752
    %v3872 = vld [vmem:[%s3871] sm:$0xf]
    %v3873 = vld [vmem:[%s3871 + $0x4] sm:$0xf]
    %v3874 = vld [vmem:[%s3871 + $0x8] sm:$0xf]
    %v3875 = vld [vmem:[%s3871 + $0xc] sm:$0xf]
    %v3876 = vrot.slane %v957, 7
    %v3881 = vunpack.c.l.b16 %v3872
    %v3882 = vunpack.c.l.b16 %v3873
    %v3883 = vunpack.c.l.b16 %v3874
    %v3884 = vunpack.c.l.b16 %v3875
    %v3885 = vpack.c.b16 %v3882, %v3881
    %v3886 = vpack.c.b16 %v3884, %v3883
    %v3890 = vsel %vm982, %v3876, 0
    %3892 = vmatprep.subr.bf16.mxu0 0
    %3893 = vmatpush1.bf16.msra.mxu0 %v3885
    %3894 = vmatprep.subr.bf16.mxu0 0
    %3895 = vmatpush1.bf16.msra.mxu0 %v3886
    %3896 = vmatprep.subr.bf16.mxu0 0
    %3897 = vmatpush1.bf16.msra.mxu0 0
    %3898 = vmatprep.subr.bf16.mxu0 0
    %3899 = vmatpush1.bf16.msra.mxu0 0
    %3900 = vmatprep.subr.bf16.mxu0 0
    %3901 = vmatpush1.bf16.msra.mxu0 0
    %3902 = vmatprep.subr.bf16.mxu0 0
    %3903 = vmatpush1.bf16.msra.mxu0 0
    %3904 = vmatprep.subr.bf16.mxu0 0
    %3905 = vmatpush1.bf16.msra.mxu0 0
    %3906 = vmatprep.subr.bf16.mxu0 0
    %3907 = vmatpush1.bf16.msra.mxu0 0
    %3908 = vmatprep.subr.bf16.mxu0 0
    %3909 = vmatpush1.bf16.msra.mxu0 0
    %3910 = vmatprep.subr.bf16.mxu0 0
    %3911 = vmatpush1.bf16.msra.mxu0 0
    %3912 = vmatprep.subr.bf16.mxu0 0
    %3913 = vmatpush1.bf16.msra.mxu0 0
    %3914 = vmatprep.subr.bf16.mxu0 0
    %3915 = vmatpush1.bf16.msra.mxu0 0
    %3916 = vmatprep.subr.bf16.mxu0 0
    %3917 = vmatpush1.bf16.msra.mxu0 0
    %3918 = vmatprep.subr.bf16.mxu0 0
    %3919 = vmatpush1.bf16.msra.mxu0 0
    %3920 = vmatprep.subr.bf16.mxu0 0
    %3921 = vmatpush1.bf16.msra.mxu0 0
    %3922 = vmatprep.subr.bf16.mxu0 0
    %3923 = vmatpush1.bf16.msra.mxu0 0
    %3924 = vmatprep.mubr.bf16.mxu0 0
    %3925 = vmatmul.mubr.bf16.gmra.mrb[0].mxu0 %v3890
    %v3926 = vpop.f32.mrb[0].mxu0
    %v3927 = vadd.f32 0.0, %v3926
    %v3928 = vpop.f32.mrb[0].mxu0
    %v3929 = vpop.f32.mrb[0].mxu0
    %v3930 = vpop.f32.mrb[0].mxu0
    %3931 = vdwg.mxu0
    %v3932 = vadd.f32 %v3870, %v3927
    %s3933 = scalar_lea.vmem %s3, 768
    %v3934 = vld [vmem:[%s3933] sm:$0xf]
    %v3935 = vld [vmem:[%s3933 + $0x4] sm:$0xf]
    %v3936 = vld [vmem:[%s3933 + $0x8] sm:$0xf]
    %v3937 = vld [vmem:[%s3933 + $0xc] sm:$0xf]
    %v3942 = vunpack.c.l.b16 %v3934
    %v3943 = vunpack.c.l.b16 %v3935
    %v3944 = vunpack.c.l.b16 %v3936
    %v3945 = vunpack.c.l.b16 %v3937
    %v3946 = vpack.c.b16 %v3943, %v3942
    %v3947 = vpack.c.b16 %v3945, %v3944
    %v3951 = vsel %vm982, %v958, 0
    %3953 = vmatprep.subr.bf16.mxu0 0
    %3954 = vmatpush1.bf16.msra.mxu0 %v3946
    %3955 = vmatprep.subr.bf16.mxu0 0
    %3956 = vmatpush1.bf16.msra.mxu0 %v3947
    %3957 = vmatprep.subr.bf16.mxu0 0
    %3958 = vmatpush1.bf16.msra.mxu0 0
    %3959 = vmatprep.subr.bf16.mxu0 0
    %3960 = vmatpush1.bf16.msra.mxu0 0
    %3961 = vmatprep.subr.bf16.mxu0 0
    %3962 = vmatpush1.bf16.msra.mxu0 0
    %3963 = vmatprep.subr.bf16.mxu0 0
    %3964 = vmatpush1.bf16.msra.mxu0 0
    %3965 = vmatprep.subr.bf16.mxu0 0
    %3966 = vmatpush1.bf16.msra.mxu0 0
    %3967 = vmatprep.subr.bf16.mxu0 0
    %3968 = vmatpush1.bf16.msra.mxu0 0
    %3969 = vmatprep.subr.bf16.mxu0 0
    %3970 = vmatpush1.bf16.msra.mxu0 0
    %3971 = vmatprep.subr.bf16.mxu0 0
    %3972 = vmatpush1.bf16.msra.mxu0 0
    %3973 = vmatprep.subr.bf16.mxu0 0
    %3974 = vmatpush1.bf16.msra.mxu0 0
    %3975 = vmatprep.subr.bf16.mxu0 0
    %3976 = vmatpush1.bf16.msra.mxu0 0
    %3977 = vmatprep.subr.bf16.mxu0 0
    %3978 = vmatpush1.bf16.msra.mxu0 0
    %3979 = vmatprep.subr.bf16.mxu0 0
    %3980 = vmatpush1.bf16.msra.mxu0 0
    %3981 = vmatprep.subr.bf16.mxu0 0
    %3982 = vmatpush1.bf16.msra.mxu0 0
    %3983 = vmatprep.subr.bf16.mxu0 0
    %3984 = vmatpush1.bf16.msra.mxu0 0
    %3985 = vmatprep.mubr.bf16.mxu0 0
    %3986 = vmatmul.mubr.bf16.gmra.mrb[0].mxu0 %v3951
    %v3987 = vpop.f32.mrb[0].mxu0
    %v3988 = vadd.f32 0.0, %v3987
    %v3989 = vpop.f32.mrb[0].mxu0
    %v3990 = vpop.f32.mrb[0].mxu0
    %v3991 = vpop.f32.mrb[0].mxu0
    %3992 = vdwg.mxu0
    %v3993 = vadd.f32 %v3932, %v3988
    %v3994 = vld [vmem:[%s4] sm:$0x1]
    %v3996 = vlaneseq
    %v3997 = vshrl.u32 %v3996, 7
    %v3998 = vsub.s32 0, %v3997
    %v3999 = vrot.slane %v3994, %v3998
    %v4001 = vadd.f32 %v3993, %v3999
    %vm4002 = vcmp.ge.f32.partialorder %v4001, 0.0
    %v4003 = vmul.f32 %v4001, %v924
    %v4004 = vsel %vm4002, %v4001, %v4003
    %v4005 = vpack.c.bf16 %v4004, %v4004
    %v4006 = vld [vmem:[%s5] sm:$0xf]
    %v4007 = vld [vmem:[%s5 + $0x4] sm:$0xf]
    %v4008 = vld [vmem:[%s5 + $0x8] sm:$0xf]
    %v4009 = vld [vmem:[%s5 + $0xc] sm:$0xf]
    %v4010 = vld [vmem:[%s6] sm:$0x1]
    %v4012 = vlaneseq
    %v4013 = vshrl.u32 %v4012, 7
    %v4014 = vsub.s32 0, %v4013
    %v4015 = vrot.slane %v4010, %v4014
    %v4021 = vunpack.c.l.b16 %v4006
    %v4022 = vunpack.c.l.b16 %v4007
    %v4023 = vunpack.c.l.b16 %v4008
    %v4024 = vunpack.c.l.b16 %v4009
    %v4025 = vpack.c.b16 %v4022, %v4021
    %v4026 = vpack.c.b16 %v4024, %v4023
    %v4030 = vsel %vm982, %v4005, 0
    %4032 = vmatprep.subr.bf16.mxu0 0
    %4033 = vmatpush1.bf16.msra.mxu0 %v4025
    %4034 = vmatprep.subr.bf16.mxu0 0
    %4035 = vmatpush1.bf16.msra.mxu0 %v4026
    %4036 = vmatprep.subr.bf16.mxu0 0
    %4037 = vmatpush1.bf16.msra.mxu0 0
    %4038 = vmatprep.subr.bf16.mxu0 0
    %4039 = vmatpush1.bf16.msra.mxu0 0
    %4040 = vmatprep.subr.bf16.mxu0 0
    %4041 = vmatpush1.bf16.msra.mxu0 0
    %4042 = vmatprep.subr.bf16.mxu0 0
    %4043 = vmatpush1.bf16.msra.mxu0 0
    %4044 = vmatprep.subr.bf16.mxu0 0
    %4045 = vmatpush1.bf16.msra.mxu0 0
    %4046 = vmatprep.subr.bf16.mxu0 0
    %4047 = vmatpush1.bf16.msra.mxu0 0
    %4048 = vmatprep.subr.bf16.mxu0 0
    %4049 = vmatpush1.bf16.msra.mxu0 0
    %4050 = vmatprep.subr.bf16.mxu0 0
    %4051 = vmatpush1.bf16.msra.mxu0 0
    %4052 = vmatprep.subr.bf16.mxu0 0
    %4053 = vmatpush1.bf16.msra.mxu0 0
    %4054 = vmatprep.subr.bf16.mxu0 0
    %4055 = vmatpush1.bf16.msra.mxu0 0
    %4056 = vmatprep.subr.bf16.mxu0 0
    %4057 = vmatpush1.bf16.msra.mxu0 0
    %4058 = vmatprep.subr.bf16.mxu0 0
    %4059 = vmatpush1.bf16.msra.mxu0 0
    %4060 = vmatprep.subr.bf16.mxu0 0
    %4061 = vmatpush1.bf16.msra.mxu0 0
    %4062 = vmatprep.subr.bf16.mxu0 0
    %4063 = vmatpush1.bf16.msra.mxu0 0
    %4064 = vmatprep.mubr.bf16.mxu0 0
    %4065 = vmatmul.mubr.bf16.gmra.mrb[0].mxu0 %v4030
    %v4066 = vpop.f32.mrb[0].mxu0
    %v4067 = vadd.f32 %v4015, %v4066
    %v4068 = vpop.f32.mrb[0].mxu0
    %v4069 = vpop.f32.mrb[0].mxu0
    %v4070 = vpop.f32.mrb[0].mxu0
    %4071 = vdwg.mxu0
    %vm4072 = vcmp.ge.f32.partialorder %v4067, 0.0
    %v4073 = vmul.f32 %v4067, %v924
    %v4074 = vsel %vm4072, %v4067, %v4073
    %4075 = vst [vmem:[#allocation3] sm:$0x3] %v4074
    // Predicated region
    $region34: #{gimple_forward.1} parent=1 // pred_check
      _
    $region35: #{gimple_forward.1} parent=1 // pred_check_branch
      %4077 = sbr.rel (0) target = $region37
    $region36: #{gimple_forward.1} parent=1 // pred_region
      %s4079 = ssub.s32 32, 32
      %4080 = vsyncadd [#allocation4], %s4079
      %s4082 = sshll.u32 [#allocation3], 4
      %s4083 = int_to_ptr.vmem [resolvable:$true] %s4082
      %4085 = dma.vmem_to_hbm [thread:$0]  %s4083, 32, %s8, [#allocation4]
    $region37: #{gimple_forward.1} parent=1 // pred_fallthru
      _
    // Predicated region
    $region38: #{gimple_forward.1} parent=1 // pred_check
      _
    $region39: #{gimple_forward.1} parent=1 // pred_check_branch
      %4087 = sbr.rel (0) target = $region41
    $region40: #{gimple_forward.1} parent=1 // pred_region
      %4088 = dma.done [#allocation4], 32
    $region41: #{gimple_forward.1} parent=1 // pred_fallthru
      _
    %4089 = vsyncpa [#allocation4], 1

</llo_original>
